<compile_context>
chip_gen: v7x
topology: tpu7x:2x2x1
jax: 0.10.0
libtpu: 0.0.40
codegen_flags: <defaults>
</compile_context>

<pallas_src>
import math
from functools import partial

import jax
import jax.numpy as jnp
from jax.experimental import pallas as pl
from jax.experimental.pallas import tpu as pltpu


VMEM_LIMIT = 32 * 1024 * 1024  # explicit scoped-VMEM cap; safe on v5e/v6e/v7x


# ----------------------------- small helpers -----------------------------

def _round_up(x, m):
    return ((x + m - 1) // m) * m


def _pad2(a, rows, cols):
    pr, pc = rows - a.shape[0], cols - a.shape[1]
    if pr == 0 and pc == 0:
        return a
    return jnp.pad(a, ((0, pr), (0, pc)))


# ----------------------------- matmul kernels -----------------------------

def _matmul_kernel(x_ref, w_ref, bias_ref, o_ref, acc_ref):
    # o = x @ w + bias, with K accumulation over grid axis 2.
    @pl.when(pl.program_id(2) == 0)
    def _init():
        acc_ref[...] = jnp.zeros(acc_ref.shape, acc_ref.dtype)

    acc_ref[...] += jnp.dot(
        x_ref[...].astype(w_ref.dtype), w_ref[...],
        preferred_element_type=jnp.float32)

    @pl.when(pl.program_id(2) == pl.num_programs(2) - 1)
    def _fin():
        o_ref[...] = acc_ref[...] + bias_ref[...]


def _matmul_res_kernel(x_ref, w_ref, bias_ref, res_ref, o_ref, acc_ref):
    # o = x @ w + bias + residual  (residual add fused into the epilogue).
    @pl.when(pl.program_id(2) == 0)
    def _init():
        acc_ref[...] = jnp.zeros(acc_ref.shape, acc_ref.dtype)

    acc_ref[...] += jnp.dot(
        x_ref[...].astype(w_ref.dtype), w_ref[...],
        preferred_element_type=jnp.float32)

    @pl.when(pl.program_id(2) == pl.num_programs(2) - 1)
    def _fin():
        o_ref[...] = acc_ref[...] + bias_ref[...] + res_ref[...]


def linear(x, w, bias, residual=None, *, tm=256, tn=512, tk=512):
    """Tiled (M,N,K) matmul with f32 VMEM accumulator; optional fused residual."""
    M, K = x.shape
    N = w.shape[1]
    bm = M if M <= tm else tm
    bn = N if N <= tn else tn
    bk = K if K <= tk else tk
    Mp, Np, Kp = _round_up(M, bm), _round_up(N, bn), _round_up(K, bk)
    xp = _pad2(x, Mp, Kp)
    wp = _pad2(w, Kp, Np)
    bp = _pad2(bias.reshape(1, N).astype(jnp.float32), 1, Np)

    in_specs = [
        pl.BlockSpec((bm, bk), lambda i, j, k: (i, k)),
        pl.BlockSpec((bk, bn), lambda i, j, k: (k, j)),
        pl.BlockSpec((1, bn), lambda i, j, k: (0, j)),
    ]
    operands = [xp, wp, bp]
    kernel = _matmul_kernel
    if residual is not None:
        in_specs.append(pl.BlockSpec((bm, bn), lambda i, j, k: (i, j)))
        operands.append(_pad2(residual.astype(jnp.float32), Mp, Np))
        kernel = _matmul_res_kernel

    out = pl.pallas_call(
        kernel,
        grid=(Mp // bm, Np // bn, Kp // bk),
        in_specs=in_specs,
        out_specs=pl.BlockSpec((bm, bn), lambda i, j, k: (i, j)),
        out_shape=jax.ShapeDtypeStruct((Mp, Np), jnp.float32),
        scratch_shapes=[pltpu.VMEM((bm, bn), jnp.float32)],
        compiler_params=pltpu.CompilerParams(
            dimension_semantics=("parallel", "parallel", "arbitrary"),
            vmem_limit_bytes=VMEM_LIMIT),
    )(*operands)
    if Mp != M or Np != N:
        out = out[:M, :N]
    return out


def _ln_matmul_kernel(x_ref, g_ref, bln_ref, w_ref, bias_ref, o_ref):
    # LayerNorm(x) fused with the following matmul: o = LN(x) @ w + bias.
    x = x_ref[...]                                     # (bm, K) f32
    mu = jnp.mean(x, axis=-1, keepdims=True)
    var = jnp.mean(jnp.square(x - mu), axis=-1, keepdims=True)
    inv = jax.lax.rsqrt(var + 1e-6)                    # nn.LayerNorm(eps=1e-6)
    xn = (x - mu) * inv * g_ref[...] + bln_ref[...]    # stats stay f32
    o_ref[...] = (
        jnp.dot(xn.astype(w_ref.dtype), w_ref[...],
                preferred_element_type=jnp.float32)
        + bias_ref[...]
    )


def ln_linear(x, gamma, beta, w, bias, *, tm=256, tn=512):
    """Fused LayerNorm + matmul (K kept whole per block so LN sees full features)."""
    M, K = x.shape
    N = w.shape[1]
    bm = M if M <= tm else tm
    bn = N if N <= tn else tn
    Mp, Np = _round_up(M, bm), _round_up(N, bn)
    xp = _pad2(x, Mp, K)
    wp = _pad2(w, K, Np)
    bp = _pad2(bias.reshape(1, N).astype(jnp.float32), 1, Np)

    out = pl.pallas_call(
        _ln_matmul_kernel,
        grid=(Mp // bm, Np // bn),
        in_specs=[
            pl.BlockSpec((bm, K), lambda i, j: (i, 0)),
            pl.BlockSpec((1, K), lambda i, j: (0, 0)),
            pl.BlockSpec((1, K), lambda i, j: (0, 0)),
            pl.BlockSpec((K, bn), lambda i, j: (0, j)),
            pl.BlockSpec((1, bn), lambda i, j: (0, j)),
        ],
        out_specs=pl.BlockSpec((bm, bn), lambda i, j: (i, j)),
        out_shape=jax.ShapeDtypeStruct((Mp, Np), jnp.float32),
        compiler_params=pltpu.CompilerParams(
            dimension_semantics=("parallel", "parallel"),
            vmem_limit_bytes=VMEM_LIMIT),
    )(xp, gamma.reshape(1, K), beta.reshape(1, K), wp, bp)
    if Mp != M or Np != N:
        out = out[:M, :N]
    return out


# ----------------------------- flash attention -----------------------------

def _flash_attention_kernel(q_ref, k_ref, v_ref, o_ref, m_sc, l_sc, acc_sc,
                            *, scale, kv_len, masked):
    kv_i = pl.program_id(1)

    @pl.when(kv_i == 0)
    def _init():
        m_sc[...] = jnp.full(m_sc.shape, -jnp.inf, m_sc.dtype)
        l_sc[...] = jnp.zeros(l_sc.shape, l_sc.dtype)
        acc_sc[...] = jnp.zeros(acc_sc.shape, acc_sc.dtype)

    q = q_ref[...]                     # (hb, Sq, Dh) bf16
    k = k_ref[...]                     # (hb, tkv, Dh) bf16
    v = v_ref[...]                     # (hb, tkv, Dh) bf16
    s = jnp.einsum("hqd,hkd->hqk", q, k,
                   preferred_element_type=jnp.float32) * scale

    if masked:
        tkv = k_ref.shape[1]
        kv_pos = kv_i * tkv + jax.lax.broadcasted_iota(jnp.int32, s.shape, 2)
        valid = kv_pos < kv_len
        s = jnp.where(valid, s, -1e30)

    m_prev = m_sc[...]
    m_new = jnp.maximum(m_prev, jnp.max(s, axis=-1, keepdims=True))
    alpha = jnp.exp(m_prev - m_new)
    p = jnp.exp(s - m_new)
    if masked:
        p = jnp.where(valid, p, 0.0)

    l_sc[...] = alpha * l_sc[...] + jnp.sum(p, axis=-1, keepdims=True)
    acc_sc[...] = alpha * acc_sc[...] + jnp.einsum(
        "hqk,hkd->hqd", p.astype(v.dtype), v,
        preferred_element_type=jnp.float32)
    m_sc[...] = m_new

    @pl.when(kv_i == pl.num_programs(1) - 1)
    def _fin():
        o_ref[...] = (acc_sc[...] *
                      pl.reciprocal(l_sc[...], approx=True)).astype(o_ref.dtype)


def _pick_heads_per_block(bh, s, kv_block):
    # keep the f32 score tile (hb, S, kv_block) around <= 8 MiB
    budget_elems = 2 * 1024 * 1024
    hb = min(bh, 8)
    while hb > 1 and hb * s * min(s, kv_block) > budget_elems:
        hb -= 1
    while bh % hb:
        hb -= 1
    return hb


def flash_attention(q, k, v, *, kv_block=512):
    """q, k, v: (B*H, S, Dh). Online-softmax over kv tiles, heads packed per step."""
    BH, S, Dh = q.shape
    hb = _pick_heads_per_block(BH, S, kv_block)

    # bf16 activations into the MXU; stats/accumulator stay f32 in the kernel.
    q = q.astype(jnp.bfloat16)
    k = k.astype(jnp.bfloat16)
    v = v.astype(jnp.bfloat16)

    if S > kv_block:
        tkv = kv_block
        Skv = _round_up(S, tkv)
        pad = Skv - S
        if pad:
            k = jnp.pad(k, ((0, 0), (0, pad), (0, 0)))
            v = jnp.pad(v, ((0, 0), (0, pad), (0, 0)))
    else:
        tkv = S
        Skv = S
    n_kv = Skv // tkv

    kernel = partial(_flash_attention_kernel,
                     scale=1.0 / math.sqrt(Dh), kv_len=S, masked=(Skv != S))
    q_spec = pl.BlockSpec((hb, S, Dh), lambda h, j: (h, 0, 0))
    kv_spec = pl.BlockSpec((hb, tkv, Dh), lambda h, j: (h, j, 0))
    o_spec = pl.BlockSpec((hb, S, Dh), lambda h, j: (h, 0, 0))

    return pl.pallas_call(
        kernel,
        grid=(BH // hb, n_kv),
        in_specs=[q_spec, kv_spec, kv_spec],
        out_specs=o_spec,
        out_shape=jax.ShapeDtypeStruct((BH, S, Dh), jnp.float32),
        scratch_shapes=[pltpu.VMEM((hb, S, 1), jnp.float32),
                        pltpu.VMEM((hb, S, 1), jnp.float32),
                        pltpu.VMEM((hb, S, Dh), jnp.float32)],
        compiler_params=pltpu.CompilerParams(
            dimension_semantics=("parallel", "arbitrary"),
            vmem_limit_bytes=VMEM_LIMIT),
    )(q, k, v)


# ----------------------------- depthwise 3x3 conv -----------------------------

def _dwconv3x3_kernel(x_ref, w_ref, b_ref, o_ref):
    # depthwise 3x3 on a zero-padded NHWC image block; channels on the lane axis
    _, H, W, C = o_ref.shape
    x = x_ref[0]            # (H+2, W+2, C)
    w = w_ref[...]          # (3, 3, C)
    acc = x[0:H, 0:W, :] * w[0, 0][None, None, :]
    for kh in range(3):
        for kw in range(3):
            if kh == 0 and kw == 0:
                continue
            acc = acc + x[kh:kh + H, kw:kw + W, :] * w[kh, kw][None, None, :]
    o_ref[0] = acc + b_ref[...]


def dwconv3x3(x_nhwc, w, b):
    B, H, W, C = x_nhwc.shape
    xpad = jnp.pad(x_nhwc, ((0, 0), (1, 1), (1, 1), (0, 0)))
    return pl.pallas_call(
        _dwconv3x3_kernel,
        grid=(B,),
        in_specs=[
            pl.BlockSpec((1, H + 2, W + 2, C), lambda i: (i, 0, 0, 0)),
            pl.BlockSpec((3, 3, C), lambda i: (0, 0, 0)),
            pl.BlockSpec((1, C), lambda i: (0, 0)),
        ],
        out_specs=pl.BlockSpec((1, H, W, C), lambda i: (i, 0, 0, 0)),
        out_shape=jax.ShapeDtypeStruct((B, H, W, C), jnp.float32),
        compiler_params=pltpu.CompilerParams(
            dimension_semantics=("parallel",),
            vmem_limit_bytes=VMEM_LIMIT),
    )(xpad, w, b.reshape(1, C))


# ----------------------------- model glue -----------------------------

def cpe(x, w, b):
    """ConditionalPositionalEncoding: depthwise 3x3 conv on spatial tokens,
    class token passed through; conv output replaces the spatial tokens."""
    B, S, D = x.shape
    cls_tok = x[:, :1, :]
    tok = x[:, 1:, :]
    H = W = int(round(math.sqrt(S - 1)))
    out = dwconv3x3(tok.reshape(B, H, W, D), w, b).reshape(B, H * W, D)
    return jnp.concatenate([cls_tok, out], axis=1)


def mha(x, p, num_heads):
    """nn.MultiheadAttention(batch_first) with ln_1 fused into the QKV matmul
    and the residual add fused into the output-projection epilogue."""
    B, S, D = x.shape
    Dh = D // num_heads
    x2 = x.reshape(B * S, D)

    # fused LN + packed QKV projection: one (D, 3D) matmul instead of three
    qkv = ln_linear(x2, p["ln1_g"], p["ln1_b"], p["wqkv"], p["bqkv"])   # (B*S, 3D)
    qkv = qkv.reshape(B, S, 3, num_heads, Dh).transpose(2, 0, 3, 1, 4)  # (3,B,H,S,Dh)
    q = qkv[0].reshape(B * num_heads, S, Dh)
    k = qkv[1].reshape(B * num_heads, S, Dh)
    v = qkv[2].reshape(B * num_heads, S, Dh)

    o = flash_attention(q, k, v)                                        # (B*H, S, Dh)
    o = (o.reshape(B, num_heads, S, Dh)
          .transpose(0, 2, 1, 3)
          .reshape(B * S, D))
    # out-projection + residual (input) fused: returns x1 = input + attn
    return linear(o, p["wo"], p["bo"], residual=x2)                     # (B*S, D)


def encoder_block(x, p, num_heads):
    B, S, D = x.shape

    x1 = mha(x, p, num_heads)                    # ln_1 + residual fused inside

    # ln_2 fused into the first MLP matmul
    h = ln_linear(x1, p["ln2_g"], p["ln2_b"], p["mlp_w1"], p["mlp_b1"])
    # exact GELU (matches nn.GELU); kept in XLA for erf-lowering portability
    # TODO(synk): fuse exact-erf GELU into the Pallas MLP kernels once Mosaic erf
    # lowering is verified on all target chips.
    h = jax.nn.gelu(h, approximate=False)
    y = linear(h, p["mlp_w2"], p["mlp_b2"])      # (B*S, D)

    x2 = (x1 + y).reshape(B, S, D)
    x3 = cpe(x2, p["peg_w"], p["peg_b"])
    return x3 + y.reshape(B, S, D)               # reference returns peg(x) + y


def cpvt_gap_forward(images, params, cfg):
    B, C, Himg, Wimg = images.shape
    p = cfg["patch_size"]
    D = cfg["hidden_dim"]
    n_h, n_w = Himg // p, Wimg // p

    # patch embedding: Conv2d(3, D, k=p, stride=p) == patchify + matmul
    patches = (images.reshape(B, C, n_h, p, n_w, p)
                     .transpose(0, 2, 4, 1, 3, 5)          # (B, nh, nw, C, p, p)
                     .reshape(B * n_h * n_w, C * p * p))
    x = linear(patches, params["conv_proj_w"], params["conv_proj_b"]).reshape(
        B, n_h * n_w, D)

    cls = jnp.broadcast_to(params["class_token"], (B, 1, D))
    x = jnp.concatenate([cls, x], axis=1)                   # (B, S, D), S = nh*nw+1

    # conditional positional encoding before the encoder
    x = cpe(x, params["pos_peg_w"], params["pos_peg_b"])

    # encoder (dropout = 0 => identity)
    for lp in params["layers"]:
        x = encoder_block(x, lp, cfg["num_heads"])

    # The head only reads the class token (x[:, 0]), so the final encoder
    # LayerNorm only has to be applied to that row — identical result to
    # normalizing the whole sequence and slicing.  (B, D) is tiny -> plain JAX.
    cls_out = x[:, 0, :]
    mu = jnp.mean(cls_out, axis=-1, keepdims=True)
    var = jnp.mean(jnp.square(cls_out - mu), axis=-1, keepdims=True)
    cls_out = ((cls_out - mu) * jax.lax.rsqrt(var + 1e-6)
               * params["ln_g"] + params["ln_b"])

    # classifier head on the class token — tiny, keep in plain JAX
    logits = cls_out @ params["head_w"] + params["head_b"]
    return logits


# ----------------------------- parameter init -----------------------------

def init_params(key, cfg):
    D = cfg["hidden_dim"]
    M = cfg["mlp_dim"]
    p = cfg["patch_size"]
    nc = cfg["num_classes"]
    keys = iter(jax.random.split(key, 256))

    def nrm(shape, std=0.02, dtype=jnp.bfloat16):
        return (jax.random.normal(next(keys), shape, jnp.float32) * std).astype(dtype)

    params = dict(
        conv_proj_w=nrm((3 * p * p, D), math.sqrt(1.0 / (3 * p * p))),   # bf16
        conv_proj_b=jnp.zeros((D,), jnp.float32),
        class_token=jnp.zeros((1, 1, D), jnp.float32),
        pos_peg_w=nrm((3, 3, D), 0.1, jnp.float32),
        pos_peg_b=jnp.zeros((D,), jnp.float32),
        ln_g=jnp.ones((D,), jnp.float32),
        ln_b=jnp.zeros((D,), jnp.float32),
        # NOTE: the reference __init__ zero-inits the head; use a small random
        # init here so the final linear produces non-trivial output.
        head_w=nrm((D, nc), 0.02, jnp.float32),
        head_b=jnp.zeros((nc,), jnp.float32),
        layers=[],
    )
    for _ in range(cfg["num_layers"]):
        params["layers"].append(dict(
            ln1_g=jnp.ones((D,), jnp.float32), ln1_b=jnp.zeros((D,), jnp.float32),
            wqkv=nrm((D, 3 * D)), bqkv=jnp.zeros((3 * D,), jnp.float32),
            wo=nrm((D, D)), bo=jnp.zeros((D,), jnp.float32),
            ln2_g=jnp.ones((D,), jnp.float32), ln2_b=jnp.zeros((D,), jnp.float32),
            mlp_w1=nrm((D, M)), mlp_b1=jnp.zeros((M,), jnp.float32),
            mlp_w2=nrm((M, D)), mlp_b2=jnp.zeros((D,), jnp.float32),
            peg_w=nrm((3, 3, D), 0.1, jnp.float32), peg_b=jnp.zeros((D,), jnp.float32),
        ))
    return params


# ----------------------------- main -----------------------------

if __name__ == "__main__":
    cfg = dict(
        image_size=16,
        patch_size=4,       # -> 4x4 = 16 patches, seq_len = 17
        num_layers=2,
        num_heads=4,
        hidden_dim=32,
        mlp_dim=64,
        num_classes=10,
    )
    key = jax.random.PRNGKey(0)
    pkey, xkey = jax.random.split(key)
    params = init_params(pkey, cfg)
    images = jax.random.normal(
        xkey, (2, 3, cfg["image_size"], cfg["image_size"]), jnp.float32)

    fwd = jax.jit(partial(cpvt_gap_forward, cfg=cfg))
    logits = fwd(images, params)
    jax.block_until_ready(logits)

    assert logits.shape == (2, cfg["num_classes"])
    assert bool(jnp.all(jnp.isfinite(logits)))
    print("KERNEL_OK")
</pallas_src>

<mosaic_0001>
module attributes {stable_mosaic.version = 11 : i64} {
  func.func @_matmul_kernel(%arg0: i32, %arg1: i32, %arg2: i32, %arg3: memref<32x48xf32, #tpu.memory_space<vmem>>, %arg4: memref<48x32xbf16, #tpu.memory_space<vmem>>, %arg5: memref<1x32xf32, #tpu.memory_space<vmem>>, %arg6: memref<32x32xf32, #tpu.memory_space<vmem>>, %arg7: memref<32x32xf32, #tpu.memory_space<vmem>>) attributes {dimension_semantics = [#tpu.dimension_semantics<parallel>, #tpu.dimension_semantics<parallel>, #tpu.dimension_semantics<arbitrary>], iteration_bounds = array<i64: 1, 1, 1>, scalar_prefetch = 0 : i64, scratch_operands = 1 : i64, tpu.core_type = #tpu.core_type<tc>, window_params = [{transform_indices = @transform_0, window_bounds = array<i64: 32, 48>}, {transform_indices = @transform_1, window_bounds = array<i64: 48, 32>}, {transform_indices = @transform_2, window_bounds = array<i64: 1, 32>}, {transform_indices = @transform_3, window_bounds = array<i64: 32, 32>}]} {
    %c0_i32 = arith.constant 0 : i32
    %0 = arith.cmpi eq, %arg2, %c0_i32 : i32
    %1 = arith.extui %0 : i1 to i32
    %c0_i32_0 = arith.constant 0 : i32
    %2 = arith.cmpi ne, %1, %c0_i32_0 : i32
    scf.if %2 {
      %cst_10 = arith.constant 0.000000e+00 : f32
      %13 = vector.broadcast %cst_10 : f32 to vector<32x32xf32>
      %c0_11 = arith.constant 0 : index
      %c0_12 = arith.constant 0 : index
      %14 = vector.load %arg7[%c0_11, %c0_12] : memref<32x32xf32, #tpu.memory_space<vmem>>, vector<32x32xf32>
      tpu.vector_store %arg7[%c0_11, %c0_12], %13 {strides = array<i32>} : memref<32x32xf32, #tpu.memory_space<vmem>>, vector<32x32xf32>,
    } else {
    }
    %c0 = arith.constant 0 : index
    %c0_1 = arith.constant 0 : index
    %3 = vector.load %arg7[%c0, %c0_1] : memref<32x32xf32, #tpu.memory_space<vmem>>, vector<32x32xf32>
    %c0_2 = arith.constant 0 : index
    %c0_3 = arith.constant 0 : index
    %4 = vector.load %arg3[%c0_2, %c0_3] : memref<32x48xf32, #tpu.memory_space<vmem>>, vector<32x48xf32>
    %5 = arith.truncf %4 : vector<32x48xf32> to vector<32x48xbf16>
    %c0_4 = arith.constant 0 : index
    %c0_5 = arith.constant 0 : index
    %6 = vector.load %arg4[%c0_4, %c0_5] : memref<48x32xbf16, #tpu.memory_space<vmem>>, vector<48x32xbf16>
    %cst = arith.constant dense<0.000000e+00> : vector<32x32xf32>
    %7 = tpu.matmul %5, %6, %cst {dimension_numbers = #tpu.dot_dimension_numbers<[1], [0], [0], [1], [0, 0, 1, 1], [], []>} : vector<32x48xbf16>, vector<48x32xbf16>, vector<32x32xf32> -> vector<32x32xf32>
    %8 = arith.addf %3, %7 : vector<32x32xf32>
    %c0_6 = arith.constant 0 : index
    %c0_7 = arith.constant 0 : index
    %9 = vector.load %arg7[%c0_6, %c0_7] : memref<32x32xf32, #tpu.memory_space<vmem>>, vector<32x32xf32>
    tpu.vector_store %arg7[%c0_6, %c0_7], %8 {strides = array<i32>} : memref<32x32xf32, #tpu.memory_space<vmem>>, vector<32x32xf32>,
    %c0_i32_8 = arith.constant 0 : i32
    %10 = arith.cmpi eq, %arg2, %c0_i32_8 : i32
    %11 = arith.extui %10 : i1 to i32
    %c0_i32_9 = arith.constant 0 : i32
    %12 = arith.cmpi ne, %11, %c0_i32_9 : i32
    scf.if %12 {
      %c0_10 = arith.constant 0 : index
      %c0_11 = arith.constant 0 : index
      %13 = vector.load %arg7[%c0_10, %c0_11] : memref<32x32xf32, #tpu.memory_space<vmem>>, vector<32x32xf32>
      %c0_12 = arith.constant 0 : index
      %c0_13 = arith.constant 0 : index
      %14 = vector.load %arg5[%c0_12, %c0_13] : memref<1x32xf32, #tpu.memory_space<vmem>>, vector<1x32xf32>
      %15 = vector.broadcast %14 : vector<1x32xf32> to vector<32x32xf32>
      %16 = arith.addf %13, %15 : vector<32x32xf32>
      %c0_14 = arith.constant 0 : index
      %c0_15 = arith.constant 0 : index
      %17 = vector.load %arg6[%c0_14, %c0_15] : memref<32x32xf32, #tpu.memory_space<vmem>>, vector<32x32xf32>
      tpu.vector_store %arg6[%c0_14, %c0_15], %16 {strides = array<i32>} : memref<32x32xf32, #tpu.memory_space<vmem>>, vector<32x32xf32>,
    } else {
    }
    return
  }
  func.func @transform_0(%arg0: i32, %arg1: i32, %arg2: i32) -> (i32, i32) {
    %c0_i32 = arith.constant 0 : i32
    return %arg0, %arg2 : i32, i32
  }
  func.func @transform_1(%arg0: i32, %arg1: i32, %arg2: i32) -> (i32, i32) {
    %c0_i32 = arith.constant 0 : i32
    return %arg2, %arg1 : i32, i32
  }
  func.func @transform_2(%arg0: i32, %arg1: i32, %arg2: i32) -> (i32, i32) {
    %c0_i32 = arith.constant 0 : i32
    %c0_i32_0 = arith.constant 0 : i32
    return %c0_i32, %arg1 : i32, i32
  }
  func.func @transform_3(%arg0: i32, %arg1: i32, %arg2: i32) -> (i32, i32) {
    %c0_i32 = arith.constant 0 : i32
    return %arg0, %arg1 : i32, i32
  }
}

module attributes {stable_mosaic.version = 11 : i64} {
  func.func @_dwconv3x3_kernel(%arg0: i32, %arg1: memref<1x6x6x32xf32, #tpu.memory_space<vmem>>, %arg2: memref<3x3x32xf32, #tpu.memory_space<vmem>>, %arg3: memref<1x32xf32, #tpu.memory_space<vmem>>, %arg4: memref<1x4x4x32xf32, #tpu.memory_space<vmem>>) attributes {dimension_semantics = [#tpu.dimension_semantics<parallel>], iteration_bounds = array<i64: 2>, scalar_prefetch = 0 : i64, scratch_operands = 0 : i64, tpu.core_type = #tpu.core_type<tc>, window_params = [{transform_indices = @transform_0, window_bounds = array<i64: 1, 6, 6, 32>}, {pipeline_mode = #tpu.pipeline_mode<synchronous>, transform_indices = @transform_1, window_bounds = array<i64: 3, 3, 32>}, {pipeline_mode = #tpu.pipeline_mode<synchronous>, transform_indices = @transform_2, window_bounds = array<i64: 1, 32>}, {transform_indices = @transform_3, window_bounds = array<i64: 1, 4, 4, 32>}]} {
    %c0 = arith.constant 0 : index
    %c0_0 = arith.constant 0 : index
    %c0_1 = arith.constant 0 : index
    %c0_2 = arith.constant 0 : index
    %0 = vector.load %arg1[%c0, %c0_0, %c0_1, %c0_2] : memref<1x6x6x32xf32, #tpu.memory_space<vmem>>, vector<1x6x6x32xf32>
    %1 = vector.shape_cast %0 : vector<1x6x6x32xf32> to vector<6x6x32xf32>
    %c0_3 = arith.constant 0 : index
    %c0_4 = arith.constant 0 : index
    %c0_5 = arith.constant 0 : index
    %2 = vector.load %arg2[%c0_3, %c0_4, %c0_5] : memref<3x3x32xf32, #tpu.memory_space<vmem>>, vector<3x3x32xf32>
    %3 = vector.extract_strided_slice %1 {offsets = [0, 0, 0], sizes = [4, 4, 32], strides = [1, 1, 1]} : vector<6x6x32xf32> to vector<4x4x32xf32>
    %4 = vector.extract_strided_slice %2 {offsets = [0, 0, 0], sizes = [1, 1, 32], strides = [1, 1, 1]} : vector<3x3x32xf32> to vector<1x1x32xf32>
    %5 = vector.shape_cast %4 : vector<1x1x32xf32> to vector<32xf32>
    %6 = vector.shape_cast %5 : vector<32xf32> to vector<1x1x32xf32>
    %7 = vector.broadcast %6 : vector<1x1x32xf32> to vector<4x4x32xf32>
    %8 = arith.mulf %3, %7 : vector<4x4x32xf32>
    %9 = vector.extract_strided_slice %1 {offsets = [0, 1, 0], sizes = [4, 4, 32], strides = [1, 1, 1]} : vector<6x6x32xf32> to vector<4x4x32xf32>
    %10 = vector.extract_strided_slice %2 {offsets = [0, 1, 0], sizes = [1, 1, 32], strides = [1, 1, 1]} : vector<3x3x32xf32> to vector<1x1x32xf32>
    %11 = vector.shape_cast %10 : vector<1x1x32xf32> to vector<32xf32>
    %12 = vector.shape_cast %11 : vector<32xf32> to vector<1x1x32xf32>
    %13 = vector.broadcast %12 : vector<1x1x32xf32> to vector<4x4x32xf32>
    %14 = arith.mulf %9, %13 : vector<4x4x32xf32>
    %15 = arith.addf %8, %14 : vector<4x4x32xf32>
    %16 = vector.extract_strided_slice %1 {offsets = [0, 2, 0], sizes = [4, 4, 32], strides = [1, 1, 1]} : vector<6x6x32xf32> to vector<4x4x32xf32>
    %17 = vector.extract_strided_slice %2 {offsets = [0, 2, 0], sizes = [1, 1, 32], strides = [1, 1, 1]} : vector<3x3x32xf32> to vector<1x1x32xf32>
    %18 = vector.shape_cast %17 : vector<1x1x32xf32> to vector<32xf32>
    %19 = vector.shape_cast %18 : vector<32xf32> to vector<1x1x32xf32>
    %20 = vector.broadcast %19 : vector<1x1x32xf32> to vector<4x4x32xf32>
    %21 = arith.mulf %16, %20 : vector<4x4x32xf32>
    %22 = arith.addf %15, %21 : vector<4x4x32xf32>
    %23 = vector.extract_strided_slice %1 {offsets = [1, 0, 0], sizes = [4, 4, 32], strides = [1, 1, 1]} : vector<6x6x32xf32> to vector<4x4x32xf32>
    %24 = vector.extract_strided_slice %2 {offsets = [1, 0, 0], sizes = [1, 1, 32], strides = [1, 1, 1]} : vector<3x3x32xf32> to vector<1x1x32xf32>
    %25 = vector.shape_cast %24 : vector<1x1x32xf32> to vector<32xf32>
    %26 = vector.shape_cast %25 : vector<32xf32> to vector<1x1x32xf32>
    %27 = vector.broadcast %26 : vector<1x1x32xf32> to vector<4x4x32xf32>
    %28 = arith.mulf %23, %27 : vector<4x4x32xf32>
    %29 = arith.addf %22, %28 : vector<4x4x32xf32>
    %30 = vector.extract_strided_slice %1 {offsets = [1, 1, 0], sizes = [4, 4, 32], strides = [1, 1, 1]} : vector<6x6x32xf32> to vector<4x4x32xf32>
    %31 = vector.extract_strided_slice %2 {offsets = [1, 1, 0], sizes = [1, 1, 32], strides = [1, 1, 1]} : vector<3x3x32xf32> to vector<1x1x32xf32>
    %32 = vector.shape_cast %31 : vector<1x1x32xf32> to vector<32xf32>
    %33 = vector.shape_cast %32 : vector<32xf32> to vector<1x1x32xf32>
    %34 = vector.broadcast %33 : vector<1x1x32xf32> to vector<4x4x32xf32>
    %35 = arith.mulf %30, %34 : vector<4x4x32xf32>
    %36 = arith.addf %29, %35 : vector<4x4x32xf32>
    %37 = vector.extract_strided_slice %1 {offsets = [1, 2, 0], sizes = [4, 4, 32], strides = [1, 1, 1]} : vector<6x6x32xf32> to vector<4x4x32xf32>
    %38 = vector.extract_strided_slice %2 {offsets = [1, 2, 0], sizes = [1, 1, 32], strides = [1, 1, 1]} : vector<3x3x32xf32> to vector<1x1x32xf32>
    %39 = vector.shape_cast %38 : vector<1x1x32xf32> to vector<32xf32>
    %40 = vector.shape_cast %39 : vector<32xf32> to vector<1x1x32xf32>
    %41 = vector.broadcast %40 : vector<1x1x32xf32> to vector<4x4x32xf32>
    %42 = arith.mulf %37, %41 : vector<4x4x32xf32>
    %43 = arith.addf %36, %42 : vector<4x4x32xf32>
    %44 = vector.extract_strided_slice %1 {offsets = [2, 0, 0], sizes = [4, 4, 32], strides = [1, 1, 1]} : vector<6x6x32xf32> to vector<4x4x32xf32>
    %45 = vector.extract_strided_slice %2 {offsets = [2, 0, 0], sizes = [1, 1, 32], strides = [1, 1, 1]} : vector<3x3x32xf32> to vector<1x1x32xf32>
    %46 = vector.shape_cast %45 : vector<1x1x32xf32> to vector<32xf32>
    %47 = vector.shape_cast %46 : vector<32xf32> to vector<1x1x32xf32>
    %48 = vector.broadcast %47 : vector<1x1x32xf32> to vector<4x4x32xf32>
    %49 = arith.mulf %44, %48 : vector<4x4x32xf32>
    %50 = arith.addf %43, %49 : vector<4x4x32xf32>
    %51 = vector.extract_strided_slice %1 {offsets = [2, 1, 0], sizes = [4, 4, 32], strides = [1, 1, 1]} : vector<6x6x32xf32> to vector<4x4x32xf32>
    %52 = vector.extract_strided_slice %2 {offsets = [2, 1, 0], sizes = [1, 1, 32], strides = [1, 1, 1]} : vector<3x3x32xf32> to vector<1x1x32xf32>
    %53 = vector.shape_cast %52 : vector<1x1x32xf32> to vector<32xf32>
    %54 = vector.shape_cast %53 : vector<32xf32> to vector<1x1x32xf32>
    %55 = vector.broadcast %54 : vector<1x1x32xf32> to vector<4x4x32xf32>
    %56 = arith.mulf %51, %55 : vector<4x4x32xf32>
    %57 = arith.addf %50, %56 : vector<4x4x32xf32>
    %58 = vector.extract_strided_slice %1 {offsets = [2, 2, 0], sizes = [4, 4, 32], strides = [1, 1, 1]} : vector<6x6x32xf32> to vector<4x4x32xf32>
    %59 = vector.extract_strided_slice %2 {offsets = [2, 2, 0], sizes = [1, 1, 32], strides = [1, 1, 1]} : vector<3x3x32xf32> to vector<1x1x32xf32>
    %60 = vector.shape_cast %59 : vector<1x1x32xf32> to vector<32xf32>
    %61 = vector.shape_cast %60 : vector<32xf32> to vector<1x1x32xf32>
    %62 = vector.broadcast %61 : vector<1x1x32xf32> to vector<4x4x32xf32>
    %63 = arith.mulf %58, %62 : vector<4x4x32xf32>
    %64 = arith.addf %57, %63 : vector<4x4x32xf32>
    %c0_6 = arith.constant 0 : index
    %c0_7 = arith.constant 0 : index
    %65 = vector.load %arg3[%c0_6, %c0_7] : memref<1x32xf32, #tpu.memory_space<vmem>>, vector<1x32xf32>
    %66 = vector.shape_cast %65 : vector<1x32xf32> to vector<1x1x32xf32>
    %67 = vector.broadcast %66 : vector<1x1x32xf32> to vector<4x4x32xf32>
    %68 = arith.addf %64, %67 : vector<4x4x32xf32>
    %c0_8 = arith.constant 0 : index
    %c0_9 = arith.constant 0 : index
    %c0_10 = arith.constant 0 : index
    %c0_11 = arith.constant 0 : index
    %69 = vector.load %arg4[%c0_8, %c0_9, %c0_10, %c0_11] : memref<1x4x4x32xf32, #tpu.memory_space<vmem>>, vector<1x4x4x32xf32>
    %70 = vector.shape_cast %69 : vector<1x4x4x32xf32> to vector<4x4x32xf32>
    %71 = vector.shape_cast %68 : vector<4x4x32xf32> to vector<1x4x4x32xf32>
    tpu.vector_store %arg4[%c0_8, %c0_9, %c0_10, %c0_11], %71 {strides = array<i32>} : memref<1x4x4x32xf32, #tpu.memory_space<vmem>>, vector<1x4x4x32xf32>,
    return
  }
  func.func @transform_0(%arg0: i32) -> (i32, i32, i32, i32) {
    %c0_i32 = arith.constant 0 : i32
    %c0_i32_0 = arith.constant 0 : i32
    %c0_i32_1 = arith.constant 0 : i32
    %c0_i32_2 = arith.constant 0 : i32
    return %arg0, %c0_i32, %c0_i32_0, %c0_i32_1 : i32, i32, i32, i32
  }
  func.func @transform_1(%arg0: i32) -> (i32, i32, i32) {
    %c0_i32 = arith.constant 0 : i32
    %c0_i32_0 = arith.constant 0 : i32
    %c0_i32_1 = arith.constant 0 : i32
    %c0_i32_2 = arith.constant 0 : i32
    return %c0_i32, %c0_i32_0, %c0_i32_1 : i32, i32, i32
  }
  func.func @transform_2(%arg0: i32) -> (i32, i32) {
    %c0_i32 = arith.constant 0 : i32
    %c0_i32_0 = arith.constant 0 : i32
    %c0_i32_1 = arith.constant 0 : i32
    return %c0_i32, %c0_i32_0 : i32, i32
  }
  func.func @transform_3(%arg0: i32) -> (i32, i32, i32, i32) {
    %c0_i32 = arith.constant 0 : i32
    %c0_i32_0 = arith.constant 0 : i32
    %c0_i32_1 = arith.constant 0 : i32
    %c0_i32_2 = arith.constant 0 : i32
    return %arg0, %c0_i32, %c0_i32_0, %c0_i32_1 : i32, i32, i32, i32
  }
}

module attributes {stable_mosaic.version = 11 : i64} {
  func.func @_ln_matmul_kernel(%arg0: i32, %arg1: i32, %arg2: memref<34x32xf32, #tpu.memory_space<vmem>>, %arg3: memref<1x32xf32, #tpu.memory_space<vmem>>, %arg4: memref<1x32xf32, #tpu.memory_space<vmem>>, %arg5: memref<32x96xbf16, #tpu.memory_space<vmem>>, %arg6: memref<1x96xf32, #tpu.memory_space<vmem>>, %arg7: memref<34x96xf32, #tpu.memory_space<vmem>>) attributes {dimension_semantics = [#tpu.dimension_semantics<parallel>, #tpu.dimension_semantics<parallel>], iteration_bounds = array<i64: 1, 1>, scalar_prefetch = 0 : i64, scratch_operands = 0 : i64, tpu.core_type = #tpu.core_type<tc>, window_params = [{transform_indices = @transform_0, window_bounds = array<i64: 34, 32>}, {pipeline_mode = #tpu.pipeline_mode<synchronous>, transform_indices = @transform_1, window_bounds = array<i64: 1, 32>}, {pipeline_mode = #tpu.pipeline_mode<synchronous>, transform_indices = @transform_2, window_bounds = array<i64: 1, 32>}, {transform_indices = @transform_3, window_bounds = array<i64: 32, 96>}, {transform_indices = @transform_4, window_bounds = array<i64: 1, 96>}, {transform_indices = @transform_5, window_bounds = array<i64: 34, 96>}]} {
    %c0 = arith.constant 0 : index
    %c0_0 = arith.constant 0 : index
    %0 = vector.load %arg2[%c0, %c0_0] : memref<34x32xf32, #tpu.memory_space<vmem>>, vector<34x32xf32>
    %cst = arith.constant dense<0.000000e+00> : vector<34xf32>
    %1 = vector.multi_reduction <add>, %0, %cst [1] : vector<34x32xf32> to vector<34xf32>
    %2 = vector.shape_cast %1 : vector<34xf32> to vector<34x1xf32>
    %cst_1 = arith.constant 3.200000e+01 : f32
    %3 = vector.broadcast %cst_1 : f32 to vector<34x1xf32>
    %4 = arith.divf %2, %3 : vector<34x1xf32>
    %5 = vector.broadcast %4 : vector<34x1xf32> to vector<34x32xf32>
    %6 = arith.subf %0, %5 : vector<34x32xf32>
    %7 = arith.mulf %6, %6 : vector<34x32xf32>
    %cst_2 = arith.constant dense<0.000000e+00> : vector<34xf32>
    %8 = vector.multi_reduction <add>, %7, %cst_2 [1] : vector<34x32xf32> to vector<34xf32>
    %9 = vector.shape_cast %8 : vector<34xf32> to vector<34x1xf32>
    %cst_3 = arith.constant 3.200000e+01 : f32
    %10 = vector.broadcast %cst_3 : f32 to vector<34x1xf32>
    %11 = arith.divf %9, %10 : vector<34x1xf32>
    %cst_4 = arith.constant 9.99999997E-7 : f32
    %12 = vector.broadcast %cst_4 : f32 to vector<34x1xf32>
    %13 = arith.addf %11, %12 : vector<34x1xf32>
    %14 = math.rsqrt %13 : vector<34x1xf32>
    %15 = vector.broadcast %4 : vector<34x1xf32> to vector<34x32xf32>
    %16 = arith.subf %0, %15 : vector<34x32xf32>
    %17 = vector.broadcast %14 : vector<34x1xf32> to vector<34x32xf32>
    %18 = arith.mulf %16, %17 : vector<34x32xf32>
    %c0_5 = arith.constant 0 : index
    %c0_6 = arith.constant 0 : index
    %19 = vector.load %arg3[%c0_5, %c0_6] : memref<1x32xf32, #tpu.memory_space<vmem>>, vector<1x32xf32>
    %20 = vector.broadcast %19 : vector<1x32xf32> to vector<34x32xf32>
    %21 = arith.mulf %18, %20 : vector<34x32xf32>
    %c0_7 = arith.constant 0 : index
    %c0_8 = arith.constant 0 : index
    %22 = vector.load %arg4[%c0_7, %c0_8] : memref<1x32xf32, #tpu.memory_space<vmem>>, vector<1x32xf32>
    %23 = vector.broadcast %22 : vector<1x32xf32> to vector<34x32xf32>
    %24 = arith.addf %21, %23 : vector<34x32xf32>
    %25 = arith.truncf %24 : vector<34x32xf32> to vector<34x32xbf16>
    %c0_9 = arith.constant 0 : index
    %c0_10 = arith.constant 0 : index
    %26 = vector.load %arg5[%c0_9, %c0_10] : memref<32x96xbf16, #tpu.memory_space<vmem>>, vector<32x96xbf16>
    %cst_11 = arith.constant dense<0.000000e+00> : vector<34x96xf32>
    %27 = tpu.matmul %25, %26, %cst_11 {dimension_numbers = #tpu.dot_dimension_numbers<[1], [0], [0], [1], [0, 0, 1, 1], [], []>} : vector<34x32xbf16>, vector<32x96xbf16>, vector<34x96xf32> -> vector<34x96xf32>
    %c0_12 = arith.constant 0 : index
    %c0_13 = arith.constant 0 : index
    %28 = vector.load %arg6[%c0_12, %c0_13] : memref<1x96xf32, #tpu.memory_space<vmem>>, vector<1x96xf32>
    %29 = vector.broadcast %28 : vector<1x96xf32> to vector<34x96xf32>
    %30 = arith.addf %27, %29 : vector<34x96xf32>
    %c0_14 = arith.constant 0 : index
    %c0_15 = arith.constant 0 : index
    %31 = vector.load %arg7[%c0_14, %c0_15] : memref<34x96xf32, #tpu.memory_space<vmem>>, vector<34x96xf32>
    tpu.vector_store %arg7[%c0_14, %c0_15], %30 {strides = array<i32>} : memref<34x96xf32, #tpu.memory_space<vmem>>, vector<34x96xf32>,
    return
  }
  func.func @transform_0(%arg0: i32, %arg1: i32) -> (i32, i32) {
    %c0_i32 = arith.constant 0 : i32
    %c0_i32_0 = arith.constant 0 : i32
    return %arg0, %c0_i32 : i32, i32
  }
  func.func @transform_1(%arg0: i32, %arg1: i32) -> (i32, i32) {
    %c0_i32 = arith.constant 0 : i32
    %c0_i32_0 = arith.constant 0 : i32
    %c0_i32_1 = arith.constant 0 : i32
    return %c0_i32, %c0_i32_0 : i32, i32
  }
  func.func @transform_2(%arg0: i32, %arg1: i32) -> (i32, i32) {
    %c0_i32 = arith.constant 0 : i32
    %c0_i32_0 = arith.constant 0 : i32
    %c0_i32_1 = arith.constant 0 : i32
    return %c0_i32, %c0_i32_0 : i32, i32
  }
  func.func @transform_3(%arg0: i32, %arg1: i32) -> (i32, i32) {
    %c0_i32 = arith.constant 0 : i32
    %c0_i32_0 = arith.constant 0 : i32
    return %c0_i32, %arg1 : i32, i32
  }
  func.func @transform_4(%arg0: i32, %arg1: i32) -> (i32, i32) {
    %c0_i32 = arith.constant 0 : i32
    %c0_i32_0 = arith.constant 0 : i32
    return %c0_i32, %arg1 : i32, i32
  }
  func.func @transform_5(%arg0: i32, %arg1: i32) -> (i32, i32) {
    %c0_i32 = arith.constant 0 : i32
    return %arg0, %arg1 : i32, i32
  }
}

module attributes {stable_mosaic.version = 11 : i64} {
  func.func @_flash_attention_kernel(%arg0: i32, %arg1: i32, %arg2: memref<8x17x8xbf16, #tpu.memory_space<vmem>>, %arg3: memref<8x17x8xbf16, #tpu.memory_space<vmem>>, %arg4: memref<8x17x8xbf16, #tpu.memory_space<vmem>>, %arg5: memref<8x17x8xf32, #tpu.memory_space<vmem>>, %arg6: memref<8x17x1xf32, #tpu.memory_space<vmem>>, %arg7: memref<8x17x1xf32, #tpu.memory_space<vmem>>, %arg8: memref<8x17x8xf32, #tpu.memory_space<vmem>>) attributes {dimension_semantics = [#tpu.dimension_semantics<parallel>, #tpu.dimension_semantics<arbitrary>], iteration_bounds = array<i64: 1, 1>, scalar_prefetch = 0 : i64, scratch_operands = 3 : i64, tpu.core_type = #tpu.core_type<tc>, window_params = [{transform_indices = @transform_0, window_bounds = array<i64: 8, 17, 8>}, {transform_indices = @transform_1, window_bounds = array<i64: 8, 17, 8>}, {transform_indices = @transform_2, window_bounds = array<i64: 8, 17, 8>}, {transform_indices = @transform_3, window_bounds = array<i64: 8, 17, 8>}]} {
    %c0_i32 = arith.constant 0 : i32
    %0 = arith.cmpi eq, %arg1, %c0_i32 : i32
    %1 = arith.extui %0 : i1 to i32
    %c0_i32_0 = arith.constant 0 : i32
    %2 = arith.cmpi ne, %1, %c0_i32_0 : i32
    scf.if %2 {
      %cst_33 = arith.constant 0xFF800000 : f32
      %35 = vector.broadcast %cst_33 : f32 to vector<8x17x1xf32>
      %c0_34 = arith.constant 0 : index
      %c0_35 = arith.constant 0 : index
      %c0_36 = arith.constant 0 : index
      %36 = vector.load %arg6[%c0_34, %c0_35, %c0_36] : memref<8x17x1xf32, #tpu.memory_space<vmem>>, vector<8x17x1xf32>
      tpu.vector_store %arg6[%c0_34, %c0_35, %c0_36], %35 {strides = array<i32>} : memref<8x17x1xf32, #tpu.memory_space<vmem>>, vector<8x17x1xf32>,
      %cst_37 = arith.constant 0.000000e+00 : f32
      %37 = vector.broadcast %cst_37 : f32 to vector<8x17x1xf32>
      %c0_38 = arith.constant 0 : index
      %c0_39 = arith.constant 0 : index
      %c0_40 = arith.constant 0 : index
      %38 = vector.load %arg7[%c0_38, %c0_39, %c0_40] : memref<8x17x1xf32, #tpu.memory_space<vmem>>, vector<8x17x1xf32>
      tpu.vector_store %arg7[%c0_38, %c0_39, %c0_40], %37 {strides = array<i32>} : memref<8x17x1xf32, #tpu.memory_space<vmem>>, vector<8x17x1xf32>,
      %cst_41 = arith.constant 0.000000e+00 : f32
      %39 = vector.broadcast %cst_41 : f32 to vector<8x17x8xf32>
      %c0_42 = arith.constant 0 : index
      %c0_43 = arith.constant 0 : index
      %c0_44 = arith.constant 0 : index
      %40 = vector.load %arg8[%c0_42, %c0_43, %c0_44] : memref<8x17x8xf32, #tpu.memory_space<vmem>>, vector<8x17x8xf32>
      tpu.vector_store %arg8[%c0_42, %c0_43, %c0_44], %39 {strides = array<i32>} : memref<8x17x8xf32, #tpu.memory_space<vmem>>, vector<8x17x8xf32>,
    } else {
    }
    %c0 = arith.constant 0 : index
    %c0_1 = arith.constant 0 : index
    %c0_2 = arith.constant 0 : index
    %3 = vector.load %arg2[%c0, %c0_1, %c0_2] : memref<8x17x8xbf16, #tpu.memory_space<vmem>>, vector<8x17x8xbf16>
    %c0_3 = arith.constant 0 : index
    %c0_4 = arith.constant 0 : index
    %c0_5 = arith.constant 0 : index
    %4 = vector.load %arg3[%c0_3, %c0_4, %c0_5] : memref<8x17x8xbf16, #tpu.memory_space<vmem>>, vector<8x17x8xbf16>
    %c0_6 = arith.constant 0 : index
    %c0_7 = arith.constant 0 : index
    %c0_8 = arith.constant 0 : index
    %5 = vector.load %arg4[%c0_6, %c0_7, %c0_8] : memref<8x17x8xbf16, #tpu.memory_space<vmem>>, vector<8x17x8xbf16>
    "tpu.trace_start"() <{level = 10 : i32, message = "hqd,hkd->hqk"}> : () -> ()
    %cst = arith.constant dense<0.000000e+00> : vector<8x17x17xf32>
    %6 = tpu.matmul %3, %4, %cst {dimension_numbers = #tpu.dot_dimension_numbers<[2], [2], [1], [1], [0, 0, 0, 1, 1, 1], [0], [0]>} : vector<8x17x8xbf16>, vector<8x17x8xbf16>, vector<8x17x17xf32> -> vector<8x17x17xf32>
    "tpu.trace_stop"() : () -> ()
    %cst_9 = arith.constant 0.353553385 : f32
    %7 = vector.broadcast %cst_9 : f32 to vector<8x17x17xf32>
    %8 = arith.mulf %6, %7 : vector<8x17x17xf32>
    %c0_10 = arith.constant 0 : index
    %c0_11 = arith.constant 0 : index
    %c0_12 = arith.constant 0 : index
    %9 = vector.load %arg6[%c0_10, %c0_11, %c0_12] : memref<8x17x1xf32, #tpu.memory_space<vmem>>, vector<8x17x1xf32>
    %cst_13 = arith.constant dense<0xFF800000> : vector<8x17xf32>
    %10 = vector.multi_reduction <maximumf>, %8, %cst_13 [2] : vector<8x17x17xf32> to vector<8x17xf32>
    %11 = vector.shape_cast %10 : vector<8x17xf32> to vector<8x17x1xf32>
    %12 = arith.maximumf %9, %11 : vector<8x17x1xf32>
    %13 = arith.subf %9, %12 : vector<8x17x1xf32>
    %14 = math.exp %13 : vector<8x17x1xf32>
    %15 = vector.broadcast %12 : vector<8x17x1xf32> to vector<8x17x17xf32>
    %16 = arith.subf %8, %15 : vector<8x17x17xf32>
    %17 = math.exp %16 : vector<8x17x17xf32>
    %c0_14 = arith.constant 0 : index
    %c0_15 = arith.constant 0 : index
    %c0_16 = arith.constant 0 : index
    %18 = vector.load %arg7[%c0_14, %c0_15, %c0_16] : memref<8x17x1xf32, #tpu.memory_space<vmem>>, vector<8x17x1xf32>
    %19 = arith.mulf %14, %18 : vector<8x17x1xf32>
    %cst_17 = arith.constant dense<0.000000e+00> : vector<8x17xf32>
    %20 = vector.multi_reduction <add>, %17, %cst_17 [2] : vector<8x17x17xf32> to vector<8x17xf32>
    %21 = vector.shape_cast %20 : vector<8x17xf32> to vector<8x17x1xf32>
    %22 = arith.addf %19, %21 : vector<8x17x1xf32>
    %c0_18 = arith.constant 0 : index
    %c0_19 = arith.constant 0 : index
    %c0_20 = arith.constant 0 : index
    %23 = vector.load %arg7[%c0_18, %c0_19, %c0_20] : memref<8x17x1xf32, #tpu.memory_space<vmem>>, vector<8x17x1xf32>
    tpu.vector_store %arg7[%c0_18, %c0_19, %c0_20], %22 {strides = array<i32>} : memref<8x17x1xf32, #tpu.memory_space<vmem>>, vector<8x17x1xf32>,
    %c0_21 = arith.constant 0 : index
    %c0_22 = arith.constant 0 : index
    %c0_23 = arith.constant 0 : index
    %24 = vector.load %arg8[%c0_21, %c0_22, %c0_23] : memref<8x17x8xf32, #tpu.memory_space<vmem>>, vector<8x17x8xf32>
    %25 = vector.broadcast %14 : vector<8x17x1xf32> to vector<8x17x8xf32>
    %26 = arith.mulf %25, %24 : vector<8x17x8xf32>
    %27 = arith.truncf %17 : vector<8x17x17xf32> to vector<8x17x17xbf16>
    "tpu.trace_start"() <{level = 10 : i32, message = "hqk,hkd->hqd"}> : () -> ()
    %cst_24 = arith.constant dense<0.000000e+00> : vector<8x17x8xf32>
    %28 = tpu.matmul %27, %5, %cst_24 {dimension_numbers = #tpu.dot_dimension_numbers<[2], [1], [1], [2], [0, 0, 0, 1, 1, 2], [0], [0]>} : vector<8x17x17xbf16>, vector<8x17x8xbf16>, vector<8x17x8xf32> -> vector<8x17x8xf32>
    "tpu.trace_stop"() : () -> ()
    %29 = arith.addf %26, %28 : vector<8x17x8xf32>
    %c0_25 = arith.constant 0 : index
    %c0_26 = arith.constant 0 : index
    %c0_27 = arith.constant 0 : index
    %30 = vector.load %arg8[%c0_25, %c0_26, %c0_27] : memref<8x17x8xf32, #tpu.memory_space<vmem>>, vector<8x17x8xf32>
    tpu.vector_store %arg8[%c0_25, %c0_26, %c0_27], %29 {strides = array<i32>} : memref<8x17x8xf32, #tpu.memory_space<vmem>>, vector<8x17x8xf32>,
    %c0_28 = arith.constant 0 : index
    %c0_29 = arith.constant 0 : index
    %c0_30 = arith.constant 0 : index
    %31 = vector.load %arg6[%c0_28, %c0_29, %c0_30] : memref<8x17x1xf32, #tpu.memory_space<vmem>>, vector<8x17x1xf32>
    tpu.vector_store %arg6[%c0_28, %c0_29, %c0_30], %12 {strides = array<i32>} : memref<8x17x1xf32, #tpu.memory_space<vmem>>, vector<8x17x1xf32>,
    %c0_i32_31 = arith.constant 0 : i32
    %32 = arith.cmpi eq, %arg1, %c0_i32_31 : i32
    %33 = arith.extui %32 : i1 to i32
    %c0_i32_32 = arith.constant 0 : i32
    %34 = arith.cmpi ne, %33, %c0_i32_32 : i32
    scf.if %34 {
      %c0_33 = arith.constant 0 : index
      %c0_34 = arith.constant 0 : index
      %c0_35 = arith.constant 0 : index
      %35 = vector.load %arg8[%c0_33, %c0_34, %c0_35] : memref<8x17x8xf32, #tpu.memory_space<vmem>>, vector<8x17x8xf32>
      %c0_36 = arith.constant 0 : index
      %c0_37 = arith.constant 0 : index
      %c0_38 = arith.constant 0 : index
      %36 = vector.load %arg7[%c0_36, %c0_37, %c0_38] : memref<8x17x1xf32, #tpu.memory_space<vmem>>, vector<8x17x1xf32>
      %37 = tpu.reciprocal %36 {approx = true} : vector<8x17x1xf32> -> vector<8x17x1xf32>
      %38 = vector.broadcast %37 : vector<8x17x1xf32> to vector<8x17x8xf32>
      %39 = arith.mulf %35, %38 : vector<8x17x8xf32>
      %c0_39 = arith.constant 0 : index
      %c0_40 = arith.constant 0 : index
      %c0_41 = arith.constant 0 : index
      %40 = vector.load %arg5[%c0_39, %c0_40, %c0_41] : memref<8x17x8xf32, #tpu.memory_space<vmem>>, vector<8x17x8xf32>
      tpu.vector_store %arg5[%c0_39, %c0_40, %c0_41], %39 {strides = array<i32>} : memref<8x17x8xf32, #tpu.memory_space<vmem>>, vector<8x17x8xf32>,
    } else {
    }
    return
  }
  func.func @transform_0(%arg0: i32, %arg1: i32) -> (i32, i32, i32) {
    %c0_i32 = arith.constant 0 : i32
    %c0_i32_0 = arith.constant 0 : i32
    %c0_i32_1 = arith.constant 0 : i32
    return %arg0, %c0_i32, %c0_i32_0 : i32, i32, i32
  }
  func.func @transform_1(%arg0: i32, %arg1: i32) -> (i32, i32, i32) {
    %c0_i32 = arith.constant 0 : i32
    %c0_i32_0 = arith.constant 0 : i32
    return %arg0, %arg1, %c0_i32 : i32, i32, i32
  }
  func.func @transform_2(%arg0: i32, %arg1: i32) -> (i32, i32, i32) {
    %c0_i32 = arith.constant 0 : i32
    %c0_i32_0 = arith.constant 0 : i32
    return %arg0, %arg1, %c0_i32 : i32, i32, i32
  }
  func.func @transform_3(%arg0: i32, %arg1: i32) -> (i32, i32, i32) {
    %c0_i32 = arith.constant 0 : i32
    %c0_i32_0 = arith.constant 0 : i32
    %c0_i32_1 = arith.constant 0 : i32
    return %arg0, %c0_i32, %c0_i32_0 : i32, i32, i32
  }
}

module attributes {stable_mosaic.version = 11 : i64} {
  func.func @_ln_matmul_kernel(%arg0: i32, %arg1: i32, %arg2: memref<34x32xf32, #tpu.memory_space<vmem>>, %arg3: memref<1x32xf32, #tpu.memory_space<vmem>>, %arg4: memref<1x32xf32, #tpu.memory_space<vmem>>, %arg5: memref<32x64xbf16, #tpu.memory_space<vmem>>, %arg6: memref<1x64xf32, #tpu.memory_space<vmem>>, %arg7: memref<34x64xf32, #tpu.memory_space<vmem>>) attributes {dimension_semantics = [#tpu.dimension_semantics<parallel>, #tpu.dimension_semantics<parallel>], iteration_bounds = array<i64: 1, 1>, scalar_prefetch = 0 : i64, scratch_operands = 0 : i64, tpu.core_type = #tpu.core_type<tc>, window_params = [{transform_indices = @transform_0, window_bounds = array<i64: 34, 32>}, {pipeline_mode = #tpu.pipeline_mode<synchronous>, transform_indices = @transform_1, window_bounds = array<i64: 1, 32>}, {pipeline_mode = #tpu.pipeline_mode<synchronous>, transform_indices = @transform_2, window_bounds = array<i64: 1, 32>}, {transform_indices = @transform_3, window_bounds = array<i64: 32, 64>}, {transform_indices = @transform_4, window_bounds = array<i64: 1, 64>}, {transform_indices = @transform_5, window_bounds = array<i64: 34, 64>}]} {
    %c0 = arith.constant 0 : index
    %c0_0 = arith.constant 0 : index
    %0 = vector.load %arg2[%c0, %c0_0] : memref<34x32xf32, #tpu.memory_space<vmem>>, vector<34x32xf32>
    %cst = arith.constant dense<0.000000e+00> : vector<34xf32>
    %1 = vector.multi_reduction <add>, %0, %cst [1] : vector<34x32xf32> to vector<34xf32>
    %2 = vector.shape_cast %1 : vector<34xf32> to vector<34x1xf32>
    %cst_1 = arith.constant 3.200000e+01 : f32
    %3 = vector.broadcast %cst_1 : f32 to vector<34x1xf32>
    %4 = arith.divf %2, %3 : vector<34x1xf32>
    %5 = vector.broadcast %4 : vector<34x1xf32> to vector<34x32xf32>
    %6 = arith.subf %0, %5 : vector<34x32xf32>
    %7 = arith.mulf %6, %6 : vector<34x32xf32>
    %cst_2 = arith.constant dense<0.000000e+00> : vector<34xf32>
    %8 = vector.multi_reduction <add>, %7, %cst_2 [1] : vector<34x32xf32> to vector<34xf32>
    %9 = vector.shape_cast %8 : vector<34xf32> to vector<34x1xf32>
    %cst_3 = arith.constant 3.200000e+01 : f32
    %10 = vector.broadcast %cst_3 : f32 to vector<34x1xf32>
    %11 = arith.divf %9, %10 : vector<34x1xf32>
    %cst_4 = arith.constant 9.99999997E-7 : f32
    %12 = vector.broadcast %cst_4 : f32 to vector<34x1xf32>
    %13 = arith.addf %11, %12 : vector<34x1xf32>
    %14 = math.rsqrt %13 : vector<34x1xf32>
    %15 = vector.broadcast %4 : vector<34x1xf32> to vector<34x32xf32>
    %16 = arith.subf %0, %15 : vector<34x32xf32>
    %17 = vector.broadcast %14 : vector<34x1xf32> to vector<34x32xf32>
    %18 = arith.mulf %16, %17 : vector<34x32xf32>
    %c0_5 = arith.constant 0 : index
    %c0_6 = arith.constant 0 : index
    %19 = vector.load %arg3[%c0_5, %c0_6] : memref<1x32xf32, #tpu.memory_space<vmem>>, vector<1x32xf32>
    %20 = vector.broadcast %19 : vector<1x32xf32> to vector<34x32xf32>
    %21 = arith.mulf %18, %20 : vector<34x32xf32>
    %c0_7 = arith.constant 0 : index
    %c0_8 = arith.constant 0 : index
    %22 = vector.load %arg4[%c0_7, %c0_8] : memref<1x32xf32, #tpu.memory_space<vmem>>, vector<1x32xf32>
    %23 = vector.broadcast %22 : vector<1x32xf32> to vector<34x32xf32>
    %24 = arith.addf %21, %23 : vector<34x32xf32>
    %25 = arith.truncf %24 : vector<34x32xf32> to vector<34x32xbf16>
    %c0_9 = arith.constant 0 : index
    %c0_10 = arith.constant 0 : index
    %26 = vector.load %arg5[%c0_9, %c0_10] : memref<32x64xbf16, #tpu.memory_space<vmem>>, vector<32x64xbf16>
    %cst_11 = arith.constant dense<0.000000e+00> : vector<34x64xf32>
    %27 = tpu.matmul %25, %26, %cst_11 {dimension_numbers = #tpu.dot_dimension_numbers<[1], [0], [0], [1], [0, 0, 1, 1], [], []>} : vector<34x32xbf16>, vector<32x64xbf16>, vector<34x64xf32> -> vector<34x64xf32>
    %c0_12 = arith.constant 0 : index
    %c0_13 = arith.constant 0 : index
    %28 = vector.load %arg6[%c0_12, %c0_13] : memref<1x64xf32, #tpu.memory_space<vmem>>, vector<1x64xf32>
    %29 = vector.broadcast %28 : vector<1x64xf32> to vector<34x64xf32>
    %30 = arith.addf %27, %29 : vector<34x64xf32>
    %c0_14 = arith.constant 0 : index
    %c0_15 = arith.constant 0 : index
    %31 = vector.load %arg7[%c0_14, %c0_15] : memref<34x64xf32, #tpu.memory_space<vmem>>, vector<34x64xf32>
    tpu.vector_store %arg7[%c0_14, %c0_15], %30 {strides = array<i32>} : memref<34x64xf32, #tpu.memory_space<vmem>>, vector<34x64xf32>,
    return
  }
  func.func @transform_0(%arg0: i32, %arg1: i32) -> (i32, i32) {
    %c0_i32 = arith.constant 0 : i32
    %c0_i32_0 = arith.constant 0 : i32
    return %arg0, %c0_i32 : i32, i32
  }
  func.func @transform_1(%arg0: i32, %arg1: i32) -> (i32, i32) {
    %c0_i32 = arith.constant 0 : i32
    %c0_i32_0 = arith.constant 0 : i32
    %c0_i32_1 = arith.constant 0 : i32
    return %c0_i32, %c0_i32_0 : i32, i32
  }
  func.func @transform_2(%arg0: i32, %arg1: i32) -> (i32, i32) {
    %c0_i32 = arith.constant 0 : i32
    %c0_i32_0 = arith.constant 0 : i32
    %c0_i32_1 = arith.constant 0 : i32
    return %c0_i32, %c0_i32_0 : i32, i32
  }
  func.func @transform_3(%arg0: i32, %arg1: i32) -> (i32, i32) {
    %c0_i32 = arith.constant 0 : i32
    %c0_i32_0 = arith.constant 0 : i32
    return %c0_i32, %arg1 : i32, i32
  }
  func.func @transform_4(%arg0: i32, %arg1: i32) -> (i32, i32) {
    %c0_i32 = arith.constant 0 : i32
    %c0_i32_0 = arith.constant 0 : i32
    return %c0_i32, %arg1 : i32, i32
  }
  func.func @transform_5(%arg0: i32, %arg1: i32) -> (i32, i32) {
    %c0_i32 = arith.constant 0 : i32
    return %arg0, %arg1 : i32, i32
  }
}

module attributes {stable_mosaic.version = 11 : i64} {
  func.func @_matmul_res_kernel(%arg0: i32, %arg1: i32, %arg2: i32, %arg3: memref<34x32xf32, #tpu.memory_space<vmem>>, %arg4: memref<32x32xbf16, #tpu.memory_space<vmem>>, %arg5: memref<1x32xf32, #tpu.memory_space<vmem>>, %arg6: memref<34x32xf32, #tpu.memory_space<vmem>>, %arg7: memref<34x32xf32, #tpu.memory_space<vmem>>, %arg8: memref<34x32xf32, #tpu.memory_space<vmem>>) attributes {dimension_semantics = [#tpu.dimension_semantics<parallel>, #tpu.dimension_semantics<parallel>, #tpu.dimension_semantics<arbitrary>], iteration_bounds = array<i64: 1, 1, 1>, scalar_prefetch = 0 : i64, scratch_operands = 1 : i64, tpu.core_type = #tpu.core_type<tc>, window_params = [{transform_indices = @transform_0, window_bounds = array<i64: 34, 32>}, {transform_indices = @transform_1, window_bounds = array<i64: 32, 32>}, {transform_indices = @transform_2, window_bounds = array<i64: 1, 32>}, {transform_indices = @transform_3, window_bounds = array<i64: 34, 32>}, {transform_indices = @transform_4, window_bounds = array<i64: 34, 32>}]} {
    %c0_i32 = arith.constant 0 : i32
    %0 = arith.cmpi eq, %arg2, %c0_i32 : i32
    %1 = arith.extui %0 : i1 to i32
    %c0_i32_0 = arith.constant 0 : i32
    %2 = arith.cmpi ne, %1, %c0_i32_0 : i32
    scf.if %2 {
      %cst_10 = arith.constant 0.000000e+00 : f32
      %13 = vector.broadcast %cst_10 : f32 to vector<34x32xf32>
      %c0_11 = arith.constant 0 : index
      %c0_12 = arith.constant 0 : index
      %14 = vector.load %arg8[%c0_11, %c0_12] : memref<34x32xf32, #tpu.memory_space<vmem>>, vector<34x32xf32>
      tpu.vector_store %arg8[%c0_11, %c0_12], %13 {strides = array<i32>} : memref<34x32xf32, #tpu.memory_space<vmem>>, vector<34x32xf32>,
    } else {
    }
    %c0 = arith.constant 0 : index
    %c0_1 = arith.constant 0 : index
    %3 = vector.load %arg8[%c0, %c0_1] : memref<34x32xf32, #tpu.memory_space<vmem>>, vector<34x32xf32>
    %c0_2 = arith.constant 0 : index
    %c0_3 = arith.constant 0 : index
    %4 = vector.load %arg3[%c0_2, %c0_3] : memref<34x32xf32, #tpu.memory_space<vmem>>, vector<34x32xf32>
    %5 = arith.truncf %4 : vector<34x32xf32> to vector<34x32xbf16>
    %c0_4 = arith.constant 0 : index
    %c0_5 = arith.constant 0 : index
    %6 = vector.load %arg4[%c0_4, %c0_5] : memref<32x32xbf16, #tpu.memory_space<vmem>>, vector<32x32xbf16>
    %cst = arith.constant dense<0.000000e+00> : vector<34x32xf32>
    %7 = tpu.matmul %5, %6, %cst {dimension_numbers = #tpu.dot_dimension_numbers<[1], [0], [0], [1], [0, 0, 1, 1], [], []>} : vector<34x32xbf16>, vector<32x32xbf16>, vector<34x32xf32> -> vector<34x32xf32>
    %8 = arith.addf %3, %7 : vector<34x32xf32>
    %c0_6 = arith.constant 0 : index
    %c0_7 = arith.constant 0 : index
    %9 = vector.load %arg8[%c0_6, %c0_7] : memref<34x32xf32, #tpu.memory_space<vmem>>, vector<34x32xf32>
    tpu.vector_store %arg8[%c0_6, %c0_7], %8 {strides = array<i32>} : memref<34x32xf32, #tpu.memory_space<vmem>>, vector<34x32xf32>,
    %c0_i32_8 = arith.constant 0 : i32
    %10 = arith.cmpi eq, %arg2, %c0_i32_8 : i32
    %11 = arith.extui %10 : i1 to i32
    %c0_i32_9 = arith.constant 0 : i32
    %12 = arith.cmpi ne, %11, %c0_i32_9 : i32
    scf.if %12 {
      %c0_10 = arith.constant 0 : index
      %c0_11 = arith.constant 0 : index
      %13 = vector.load %arg8[%c0_10, %c0_11] : memref<34x32xf32, #tpu.memory_space<vmem>>, vector<34x32xf32>
      %c0_12 = arith.constant 0 : index
      %c0_13 = arith.constant 0 : index
      %14 = vector.load %arg5[%c0_12, %c0_13] : memref<1x32xf32, #tpu.memory_space<vmem>>, vector<1x32xf32>
      %15 = vector.broadcast %14 : vector<1x32xf32> to vector<34x32xf32>
      %16 = arith.addf %13, %15 : vector<34x32xf32>
      %c0_14 = arith.constant 0 : index
      %c0_15 = arith.constant 0 : index
      %17 = vector.load %arg6[%c0_14, %c0_15] : memref<34x32xf32, #tpu.memory_space<vmem>>, vector<34x32xf32>
      %18 = arith.addf %16, %17 : vector<34x32xf32>
      %c0_16 = arith.constant 0 : index
      %c0_17 = arith.constant 0 : index
      %19 = vector.load %arg7[%c0_16, %c0_17] : memref<34x32xf32, #tpu.memory_space<vmem>>, vector<34x32xf32>
      tpu.vector_store %arg7[%c0_16, %c0_17], %18 {strides = array<i32>} : memref<34x32xf32, #tpu.memory_space<vmem>>, vector<34x32xf32>,
    } else {
    }
    return
  }
  func.func @transform_0(%arg0: i32, %arg1: i32, %arg2: i32) -> (i32, i32) {
    %c0_i32 = arith.constant 0 : i32
    return %arg0, %arg2 : i32, i32
  }
  func.func @transform_1(%arg0: i32, %arg1: i32, %arg2: i32) -> (i32, i32) {
    %c0_i32 = arith.constant 0 : i32
    return %arg2, %arg1 : i32, i32
  }
  func.func @transform_2(%arg0: i32, %arg1: i32, %arg2: i32) -> (i32, i32) {
    %c0_i32 = arith.constant 0 : i32
    %c0_i32_0 = arith.constant 0 : i32
    return %c0_i32, %arg1 : i32, i32
  }
  func.func @transform_3(%arg0: i32, %arg1: i32, %arg2: i32) -> (i32, i32) {
    %c0_i32 = arith.constant 0 : i32
    return %arg0, %arg1 : i32, i32
  }
  func.func @transform_4(%arg0: i32, %arg1: i32, %arg2: i32) -> (i32, i32) {
    %c0_i32 = arith.constant 0 : i32
    return %arg0, %arg1 : i32, i32
  }
}

module attributes {stable_mosaic.version = 11 : i64} {
  func.func @_matmul_kernel(%arg0: i32, %arg1: i32, %arg2: i32, %arg3: memref<34x64xf32, #tpu.memory_space<vmem>>, %arg4: memref<64x32xbf16, #tpu.memory_space<vmem>>, %arg5: memref<1x32xf32, #tpu.memory_space<vmem>>, %arg6: memref<34x32xf32, #tpu.memory_space<vmem>>, %arg7: memref<34x32xf32, #tpu.memory_space<vmem>>) attributes {dimension_semantics = [#tpu.dimension_semantics<parallel>, #tpu.dimension_semantics<parallel>, #tpu.dimension_semantics<arbitrary>], iteration_bounds = array<i64: 1, 1, 1>, scalar_prefetch = 0 : i64, scratch_operands = 1 : i64, tpu.core_type = #tpu.core_type<tc>, window_params = [{transform_indices = @transform_0, window_bounds = array<i64: 34, 64>}, {transform_indices = @transform_1, window_bounds = array<i64: 64, 32>}, {transform_indices = @transform_2, window_bounds = array<i64: 1, 32>}, {transform_indices = @transform_3, window_bounds = array<i64: 34, 32>}]} {
    %c0_i32 = arith.constant 0 : i32
    %0 = arith.cmpi eq, %arg2, %c0_i32 : i32
    %1 = arith.extui %0 : i1 to i32
    %c0_i32_0 = arith.constant 0 : i32
    %2 = arith.cmpi ne, %1, %c0_i32_0 : i32
    scf.if %2 {
      %cst_10 = arith.constant 0.000000e+00 : f32
      %13 = vector.broadcast %cst_10 : f32 to vector<34x32xf32>
      %c0_11 = arith.constant 0 : index
      %c0_12 = arith.constant 0 : index
      %14 = vector.load %arg7[%c0_11, %c0_12] : memref<34x32xf32, #tpu.memory_space<vmem>>, vector<34x32xf32>
      tpu.vector_store %arg7[%c0_11, %c0_12], %13 {strides = array<i32>} : memref<34x32xf32, #tpu.memory_space<vmem>>, vector<34x32xf32>,
    } else {
    }
    %c0 = arith.constant 0 : index
    %c0_1 = arith.constant 0 : index
    %3 = vector.load %arg7[%c0, %c0_1] : memref<34x32xf32, #tpu.memory_space<vmem>>, vector<34x32xf32>
    %c0_2 = arith.constant 0 : index
    %c0_3 = arith.constant 0 : index
    %4 = vector.load %arg3[%c0_2, %c0_3] : memref<34x64xf32, #tpu.memory_space<vmem>>, vector<34x64xf32>
    %5 = arith.truncf %4 : vector<34x64xf32> to vector<34x64xbf16>
    %c0_4 = arith.constant 0 : index
    %c0_5 = arith.constant 0 : index
    %6 = vector.load %arg4[%c0_4, %c0_5] : memref<64x32xbf16, #tpu.memory_space<vmem>>, vector<64x32xbf16>
    %cst = arith.constant dense<0.000000e+00> : vector<34x32xf32>
    %7 = tpu.matmul %5, %6, %cst {dimension_numbers = #tpu.dot_dimension_numbers<[1], [0], [0], [1], [0, 0, 1, 1], [], []>} : vector<34x64xbf16>, vector<64x32xbf16>, vector<34x32xf32> -> vector<34x32xf32>
    %8 = arith.addf %3, %7 : vector<34x32xf32>
    %c0_6 = arith.constant 0 : index
    %c0_7 = arith.constant 0 : index
    %9 = vector.load %arg7[%c0_6, %c0_7] : memref<34x32xf32, #tpu.memory_space<vmem>>, vector<34x32xf32>
    tpu.vector_store %arg7[%c0_6, %c0_7], %8 {strides = array<i32>} : memref<34x32xf32, #tpu.memory_space<vmem>>, vector<34x32xf32>,
    %c0_i32_8 = arith.constant 0 : i32
    %10 = arith.cmpi eq, %arg2, %c0_i32_8 : i32
    %11 = arith.extui %10 : i1 to i32
    %c0_i32_9 = arith.constant 0 : i32
    %12 = arith.cmpi ne, %11, %c0_i32_9 : i32
    scf.if %12 {
      %c0_10 = arith.constant 0 : index
      %c0_11 = arith.constant 0 : index
      %13 = vector.load %arg7[%c0_10, %c0_11] : memref<34x32xf32, #tpu.memory_space<vmem>>, vector<34x32xf32>
      %c0_12 = arith.constant 0 : index
      %c0_13 = arith.constant 0 : index
      %14 = vector.load %arg5[%c0_12, %c0_13] : memref<1x32xf32, #tpu.memory_space<vmem>>, vector<1x32xf32>
      %15 = vector.broadcast %14 : vector<1x32xf32> to vector<34x32xf32>
      %16 = arith.addf %13, %15 : vector<34x32xf32>
      %c0_14 = arith.constant 0 : index
      %c0_15 = arith.constant 0 : index
      %17 = vector.load %arg6[%c0_14, %c0_15] : memref<34x32xf32, #tpu.memory_space<vmem>>, vector<34x32xf32>
      tpu.vector_store %arg6[%c0_14, %c0_15], %16 {strides = array<i32>} : memref<34x32xf32, #tpu.memory_space<vmem>>, vector<34x32xf32>,
    } else {
    }
    return
  }
  func.func @transform_0(%arg0: i32, %arg1: i32, %arg2: i32) -> (i32, i32) {
    %c0_i32 = arith.constant 0 : i32
    return %arg0, %arg2 : i32, i32
  }
  func.func @transform_1(%arg0: i32, %arg1: i32, %arg2: i32) -> (i32, i32) {
    %c0_i32 = arith.constant 0 : i32
    return %arg2, %arg1 : i32, i32
  }
  func.func @transform_2(%arg0: i32, %arg1: i32, %arg2: i32) -> (i32, i32) {
    %c0_i32 = arith.constant 0 : i32
    %c0_i32_0 = arith.constant 0 : i32
    return %c0_i32, %arg1 : i32, i32
  }
  func.func @transform_3(%arg0: i32, %arg1: i32, %arg2: i32) -> (i32, i32) {
    %c0_i32 = arith.constant 0 : i32
    return %arg0, %arg1 : i32, i32
  }
}

</mosaic_0001>

<llo_original>
// kernel: cpvt_gap_forward.15
$region0: #{cpvt_gap_forward.15}
  #allocation0 [shape = 'u32[]', space=smem, size = 0x4, offset = 0x4, fixed_abs, tag = 'smem constant byte address 0x4 - core index']
  #allocation1 [shape = 'u32[144,128]{1,0:T(1,128)}', space=vmem, size = 0x12000, scoped, tag = 'internal scratch']
  %s0 = inlined_call_operand.vmem [shape: f32[2,6,6,32], index: 0, kind: input, shape index: {}]
  %s1 = inlined_call_operand.vmem [shape: f32[3,3,32], index: 1, kind: input, shape index: {}]
  %s2 = inlined_call_operand.vmem [shape: f32[1,32], index: 2, kind: input, shape index: {}]
  %s3 = inlined_call_operand.vmem [shape: f32[2,4,4,32], index: 3, kind: output, shape index: {}]
  %s4 = sld [smem:[#allocation0]]
  $region45: #{cpvt_gap_forward.15} parent=0
    _
  %s6 = ssub.s32 1, %s4
  %s7 = scalar_select 0, %s6, %s4
  loop: start=0, step=1, limit=4
  $region2: #{cpvt_gap_forward.15} parent=0 // loop_pre_header
    _
  $region3: #{cpvt_gap_forward.15} parent=0 // loop_header
    %s9 = sphi 0, %s13
    %p10 = scmp.ge.s32.totalorder %s9, 4
    %s19 = sphi 0, %s21
    %s22 = sphi 0, %s19
    %s23 = sphi 0, %s22
    %s39 = sphi 0, %s23
    %s43 = sphi 0, %s43
    %s45 = sphi 0, %s43
    %s46 = sphi 0, %s45
    %s60 = sphi 0, %s46
    %s64 = sphi 0, %s64
    %s66 = sphi 0, %s64
    %s67 = sphi 0, %s66
    %s81 = sphi 0, %s67
    %s87 = sphi 0, %s89
    %s90 = sphi 0, %s87
    %s91 = sphi 0, %s90
    %s107 = sphi 0, %s91
  $region4: #{cpvt_gap_forward.15} parent=0 // loop_header_branch
    %12 = sbr.rel (%p10) target = $region8
  $region5: #{cpvt_gap_forward.15} parent=0 // loop_body
    %s14 = ssub.s32 %s9, 1
    %s15 = ssub.s32 %s9, 2
    %s16 = sadd.s32 %s9, 1
    %s17 = ssub.s32 %s9, %s16
    %p18 = scmp.eq.s32.totalorder %s17, 0
    %s20 = sadd.s32 %s19, 1
    %s21 = scalar_select %p18, %s19, %s20
    %p24 = pneg %p18
    %p25 = scmp.eq.s32.totalorder %s9, 1
    %p26 = por %p24, %p25
    %p27 = scmp.ne.s32.totalorder %s19, %s22
    %p28 = scmp.eq.s32.totalorder %s9, 0
    %p29 = por %p27, %p28
    %p30 = scmp.ne.s32.totalorder %s19, %s22
    %p31 = scmp.eq.s32.totalorder %s14, 1
    %p32 = por %p30, %p31
    %p33 = scmp.ne.s32.totalorder %s22, %s23
    %p34 = scmp.eq.s32.totalorder %s14, 0
    %p35 = por %p33, %p34
    %p36 = scmp.ne.s32.totalorder %s22, %s23
    %p37 = scmp.eq.s32.totalorder %s15, 1
    %p38 = por %p36, %p37
    %p40 = scmp.ne.s32.totalorder %s23, %s39
    %p41 = scmp.eq.s32.totalorder %s15, 0
    %p42 = por %p40, %p41
    %s44 = sadd.s32 %s43, 1
    %p47 = scmp.eq.s32.totalorder %s9, 1
    %p48 = scmp.ne.s32.totalorder %s43, %s45
    %p49 = scmp.eq.s32.totalorder %s9, 0
    %p50 = por %p48, %p49
    %p51 = scmp.ne.s32.totalorder %s43, %s45
    %p52 = scmp.eq.s32.totalorder %s14, 1
    %p53 = por %p51, %p52
    %p54 = scmp.ne.s32.totalorder %s45, %s46
    %p55 = scmp.eq.s32.totalorder %s14, 0
    %p56 = por %p54, %p55
    %p57 = scmp.ne.s32.totalorder %s45, %s46
    %p58 = scmp.eq.s32.totalorder %s15, 1
    %p59 = por %p57, %p58
    %p61 = scmp.ne.s32.totalorder %s46, %s60
    %p62 = scmp.eq.s32.totalorder %s15, 0
    %p63 = por %p61, %p62
    %s65 = sadd.s32 %s64, 1
    %p68 = scmp.eq.s32.totalorder %s9, 1
    %p69 = scmp.ne.s32.totalorder %s64, %s66
    %p70 = scmp.eq.s32.totalorder %s9, 0
    %p71 = por %p69, %p70
    %p72 = scmp.ne.s32.totalorder %s64, %s66
    %p73 = scmp.eq.s32.totalorder %s14, 1
    %p74 = por %p72, %p73
    %p75 = scmp.ne.s32.totalorder %s66, %s67
    %p76 = scmp.eq.s32.totalorder %s14, 0
    %p77 = por %p75, %p76
    %p78 = scmp.ne.s32.totalorder %s66, %s67
    %p79 = scmp.eq.s32.totalorder %s15, 1
    %p80 = por %p78, %p79
    %p82 = scmp.ne.s32.totalorder %s67, %s81
    %p83 = scmp.eq.s32.totalorder %s15, 0
    %p84 = por %p82, %p83
    %s85 = ssub.s32 %s9, %s16
    %p86 = scmp.eq.s32.totalorder %s85, 0
    %s88 = sadd.s32 %s87, 1
    %s89 = scalar_select %p86, %s87, %s88
    %p92 = pneg %p86
    %p93 = scmp.eq.s32.totalorder %s9, 1
    %p94 = por %p92, %p93
    %p95 = scmp.ne.s32.totalorder %s87, %s90
    %p96 = scmp.eq.s32.totalorder %s9, 0
    %p97 = por %p95, %p96
    %p98 = scmp.ne.s32.totalorder %s87, %s90
    %p99 = scmp.eq.s32.totalorder %s14, 1
    %p100 = por %p98, %p99
    %p101 = scmp.ne.s32.totalorder %s90, %s91
    %p102 = scmp.eq.s32.totalorder %s14, 0
    %p103 = por %p101, %p102
    %p104 = scmp.ne.s32.totalorder %s90, %s91
    %p105 = scmp.eq.s32.totalorder %s15, 1
    %p106 = por %p104, %p105
    %p108 = scmp.ne.s32.totalorder %s91, %s107
    %p109 = scmp.eq.s32.totalorder %s15, 0
    %p110 = por %p108, %p109
    %p111 = scmp.le.s32.totalorder 1, %s9
    %p112 = scmp.lt.s32.totalorder %s9, 3
    %p113 = pnand %p111, %p112
    %p114 = pneg %p113
    // Predicated region
    $region9: #{cpvt_gap_forward.15} parent=5 // pred_check
      _
    $region10: #{cpvt_gap_forward.15} parent=5 // pred_check_branch
      %116 = sbr.rel (%p113) target = $region12
    $region11: #{cpvt_gap_forward.15} parent=5 // pred_region
      %s117 = ssub.s32 %s9, 1
      // Predicated region
      $region13: #{cpvt_gap_forward.15} parent=11 // pred_check
        %p118 = pneg %p56
      $region14: #{cpvt_gap_forward.15} parent=11 // pred_check_branch
        %120 = sbr.rel (%p118) target = $region16
      $region15: #{cpvt_gap_forward.15} parent=11 // pred_region
        _
      $region16: #{cpvt_gap_forward.15} parent=11 // pred_fallthru
        _
      // Predicated region
      $region17: #{cpvt_gap_forward.15} parent=11 // pred_check
        %p121 = pneg %p77
      $region18: #{cpvt_gap_forward.15} parent=11 // pred_check_branch
        %123 = sbr.rel (%p121) target = $region20
      $region19: #{cpvt_gap_forward.15} parent=11 // pred_region
        _
      $region20: #{cpvt_gap_forward.15} parent=11 // pred_fallthru
        _
    $region12: #{cpvt_gap_forward.15} parent=5 // pred_fallthru
      _
    %p124 = scmp.lt.s32.totalorder %s9, 2
    // Predicated region
    $region21: #{cpvt_gap_forward.15} parent=5 // pred_check
      %p125 = pneg %p124
    $region22: #{cpvt_gap_forward.15} parent=5 // pred_check_branch
      %127 = sbr.rel (%p125) target = $region24
    $region23: #{cpvt_gap_forward.15} parent=5 // pred_region
      // Predicated region
      $region25: #{cpvt_gap_forward.15} parent=23 // pred_check
        %p128 = pneg %p29
      $region26: #{cpvt_gap_forward.15} parent=23 // pred_check_branch
        %130 = sbr.rel (%p128) target = $region28
      $region27: #{cpvt_gap_forward.15} parent=23 // pred_region
        %p131 = scmp.lt.s32.totalorder %s9, 1
        %s132 = scalar_select %p131, %s9, 1
        %s133 = smul.addr %s132, 6
        %s134 = smul.addr %s133, 8
        %s135 = scalar_lea.vmem %s0, %s134
      $region28: #{cpvt_gap_forward.15} parent=23 // pred_fallthru
        _
    $region24: #{cpvt_gap_forward.15} parent=5 // pred_fallthru
      _
    %p136 = scmp.le.s32.totalorder 1, %s9
    %p137 = scmp.lt.s32.totalorder %s9, 3
    %p138 = pnand %p136, %p137
    %p139 = pneg %p138
    // Predicated region
    $region29: #{cpvt_gap_forward.15} parent=5 // pred_check
      _
    $region30: #{cpvt_gap_forward.15} parent=5 // pred_check_branch
      %141 = sbr.rel (%p138) target = $region32
    $region31: #{cpvt_gap_forward.15} parent=5 // pred_region
      %s142 = ssub.s32 %s9, 1
      %p143 = scmp.lt.s32.totalorder %s14, 1
      %s144 = scalar_select %p143, %s14, 1
      %s145 = smul.addr %s144, 6
      %s146 = smul.addr %s145, 8
      %s147 = scalar_lea.vmem %s0, %s146
      %p148 = pneg %p35
      %p149 = pneg %p32
      %p150 = pneg %p56
      %p151 = pneg %p53
      %p152 = pneg %p77
      %p153 = pneg %p74
      %p154 = pneg %p103
      %p155 = pneg %p100
      %p156 = scmp.lt.s32.totalorder %s14, 1
      %s157 = scalar_select %p156, %s14, 1
      %s158 = smul.addr %s157, 4
      %s159 = smul.addr %s158, 4
      %s160 = scalar_lea.vmem %s3, %s159
      %p161 = scmp.lt.s32.totalorder %s14, 1
      %s162 = scalar_select %p161, %s14, 1
      %s163 = smul.addr %s162, 6
      %s164 = smul.addr %s163, 8
      %s165 = scalar_lea.vmem %s0, %s164
      %p166 = scmp.lt.s32.totalorder %s14, 1
      %s167 = scalar_select %p166, %s14, 1
      %s168 = smul.addr %s167, 4
      %s169 = smul.addr %s168, 4
      %s170 = scalar_lea.vmem %s3, %s169
      %v171 = vld [vmem:[%s165] sm:$0x3f]
      %v172 = vld [vmem:[%s165 + $0x8] sm:$0x3f]
      %v173 = vld [vmem:[%s165 + $0x10] sm:$0x3f]
      %v174 = vld [vmem:[%s165 + $0x18] sm:$0x3f]
      %v175 = vld [vmem:[%s165 + $0x20] sm:$0x3f]
      %v176 = vld [vmem:[%s165 + $0x28] sm:$0x3f]
      %v177 = vld [vmem:[%s1] sm:$0x7]
      %v178 = vld [vmem:[%s1 + $0x4] sm:$0x7]
      %v179 = vld [vmem:[%s1 + $0x8] sm:$0x7]
      %v180 = vlaneseq
      %v181 = vshrl.u32 %v180, 7
      %v182 = vsub.s32 0, %v181
      %v183 = vrot.slane %v177, %v182
      %v184 = vmul.f32 %v171, %v183
      %v185 = vmul.f32 %v172, %v183
      %v186 = vmul.f32 %v173, %v183
      %v187 = vmul.f32 %v174, %v183
      %v188 = vlaneseq
      %v189 = vshrl.u32 %v188, 7
      %v190 = vsub.s32 1, %v189
      %v191 = vrot.slane %v177, %v190
      %v192 = vmul.f32 %v171, %v191
      %v193 = vmul.f32 %v172, %v191
      %v194 = vmul.f32 %v173, %v191
      %v195 = vmul.f32 %v174, %v191
      %v200 = vrot.slane %v192, 1
      %v201 = vrot.slane %v193, 1
      %v202 = vrot.slane %v194, 1
      %v203 = vrot.slane %v195, 1
      %v208 = vadd.f32 %v184, %v200
      %v209 = vadd.f32 %v185, %v201
      %v210 = vadd.f32 %v186, %v202
      %v211 = vadd.f32 %v187, %v203
      %v212 = vlaneseq
      %v213 = vshrl.u32 %v212, 7
      %v214 = vsub.s32 2, %v213
      %v215 = vrot.slane %v177, %v214
      %v216 = vmul.f32 %v171, %v215
      %v217 = vmul.f32 %v172, %v215
      %v218 = vmul.f32 %v173, %v215
      %v219 = vmul.f32 %v174, %v215
      %v224 = vrot.slane %v216, 2
      %v225 = vrot.slane %v217, 2
      %v226 = vrot.slane %v218, 2
      %v227 = vrot.slane %v219, 2
      %v232 = vadd.f32 %v208, %v224
      %v233 = vadd.f32 %v209, %v225
      %v234 = vadd.f32 %v210, %v226
      %v235 = vadd.f32 %v211, %v227
      %v236 = vlaneseq
      %v237 = vshrl.u32 %v236, 7
      %v238 = vsub.s32 0, %v237
      %v239 = vrot.slane %v178, %v238
      %v240 = vmul.f32 %v172, %v239
      %v241 = vmul.f32 %v173, %v239
      %v242 = vmul.f32 %v174, %v239
      %v243 = vmul.f32 %v175, %v239
      %v244 = vadd.f32 %v232, %v240
      %v245 = vadd.f32 %v233, %v241
      %v246 = vadd.f32 %v234, %v242
      %v247 = vadd.f32 %v235, %v243
      %v248 = vlaneseq
      %v249 = vshrl.u32 %v248, 7
      %v250 = vsub.s32 1, %v249
      %v251 = vrot.slane %v178, %v250
      %v252 = vmul.f32 %v172, %v251
      %v253 = vmul.f32 %v173, %v251
      %v254 = vmul.f32 %v174, %v251
      %v255 = vmul.f32 %v175, %v251
      %v260 = vrot.slane %v252, 1
      %v261 = vrot.slane %v253, 1
      %v262 = vrot.slane %v254, 1
      %v263 = vrot.slane %v255, 1
      %v268 = vadd.f32 %v244, %v260
      %v269 = vadd.f32 %v245, %v261
      %v270 = vadd.f32 %v246, %v262
      %v271 = vadd.f32 %v247, %v263
      %v272 = vlaneseq
      %v273 = vshrl.u32 %v272, 7
      %v274 = vsub.s32 2, %v273
      %v275 = vrot.slane %v178, %v274
      %v276 = vmul.f32 %v172, %v275
      %v277 = vmul.f32 %v173, %v275
      %v278 = vmul.f32 %v174, %v275
      %v279 = vmul.f32 %v175, %v275
      %v284 = vrot.slane %v276, 2
      %v285 = vrot.slane %v277, 2
      %v286 = vrot.slane %v278, 2
      %v287 = vrot.slane %v279, 2
      %v292 = vadd.f32 %v268, %v284
      %v293 = vadd.f32 %v269, %v285
      %v294 = vadd.f32 %v270, %v286
      %v295 = vadd.f32 %v271, %v287
      %v296 = vlaneseq
      %v297 = vshrl.u32 %v296, 7
      %v298 = vsub.s32 0, %v297
      %v299 = vrot.slane %v179, %v298
      %v300 = vmul.f32 %v173, %v299
      %v301 = vmul.f32 %v174, %v299
      %v302 = vmul.f32 %v175, %v299
      %v303 = vmul.f32 %v176, %v299
      %v304 = vadd.f32 %v292, %v300
      %v305 = vadd.f32 %v293, %v301
      %v306 = vadd.f32 %v294, %v302
      %v307 = vadd.f32 %v295, %v303
      %v308 = vlaneseq
      %v309 = vshrl.u32 %v308, 7
      %v310 = vsub.s32 1, %v309
      %v311 = vrot.slane %v179, %v310
      %v312 = vmul.f32 %v173, %v311
      %v313 = vmul.f32 %v174, %v311
      %v314 = vmul.f32 %v175, %v311
      %v315 = vmul.f32 %v176, %v311
      %v320 = vrot.slane %v312, 1
      %v321 = vrot.slane %v313, 1
      %v322 = vrot.slane %v314, 1
      %v323 = vrot.slane %v315, 1
      %v328 = vadd.f32 %v304, %v320
      %v329 = vadd.f32 %v305, %v321
      %v330 = vadd.f32 %v306, %v322
      %v331 = vadd.f32 %v307, %v323
      %v332 = vlaneseq
      %v333 = vshrl.u32 %v332, 7
      %v334 = vsub.s32 2, %v333
      %v335 = vrot.slane %v179, %v334
      %v336 = vmul.f32 %v173, %v335
      %v337 = vmul.f32 %v174, %v335
      %v338 = vmul.f32 %v175, %v335
      %v339 = vmul.f32 %v176, %v335
      %v344 = vrot.slane %v336, 2
      %v345 = vrot.slane %v337, 2
      %v346 = vrot.slane %v338, 2
      %v347 = vrot.slane %v339, 2
      %v352 = vadd.f32 %v328, %v344
      %v353 = vadd.f32 %v329, %v345
      %v354 = vadd.f32 %v330, %v346
      %v355 = vadd.f32 %v331, %v347
      %v356 = vld [vmem:[%s2] sm:$0x1]
      %v358 = vlaneseq
      %v359 = vshrl.u32 %v358, 7
      %v360 = vsub.s32 0, %v359
      %v361 = vrot.slane %v356, %v360
      %v363 = vadd.f32 %v352, %v361
      %v364 = vadd.f32 %v353, %v361
      %v365 = vadd.f32 %v354, %v361
      %v366 = vadd.f32 %v355, %v361
      %vm367 = vcmask 257024
      %368 = vst.msk [vmem:[%s170] sm:$0xf] %vm367, %v363
      %369 = vst.msk [vmem:[%s170 + $0x4] sm:$0xf] %vm367, %v364
      %370 = vst.msk [vmem:[%s170 + $0x8] sm:$0xf] %vm367, %v365
      %371 = vst.msk [vmem:[%s170 + $0xc] sm:$0xf] %vm367, %v366
      %p372 = scmp.lt.s32.totalorder %s14, 1
      %s373 = scalar_select %p372, %s14, 1
      %s374 = smul.addr %s373, 4
      %s375 = smul.addr %s374, 4
      %s376 = scalar_lea.vmem %s3, %s375
      // Predicated region
      $region33: #{cpvt_gap_forward.15} parent=31 // pred_check
        %p377 = pneg %p100
      $region34: #{cpvt_gap_forward.15} parent=31 // pred_check_branch
        %379 = sbr.rel (%p377) target = $region36
      $region35: #{cpvt_gap_forward.15} parent=31 // pred_region
        _
      $region36: #{cpvt_gap_forward.15} parent=31 // pred_fallthru
        _
    $region32: #{cpvt_gap_forward.15} parent=5 // pred_fallthru
      _
    %p380 = scmp.le.s32.totalorder 2, %s9
    // Predicated region
    $region37: #{cpvt_gap_forward.15} parent=5 // pred_check
      %p381 = pneg %p380
    $region38: #{cpvt_gap_forward.15} parent=5 // pred_check_branch
      %383 = sbr.rel (%p381) target = $region40
    $region39: #{cpvt_gap_forward.15} parent=5 // pred_region
      %s384 = ssub.s32 %s9, 2
      // Predicated region
      $region41: #{cpvt_gap_forward.15} parent=39 // pred_check
        %p385 = pneg %p106
      $region42: #{cpvt_gap_forward.15} parent=39 // pred_check_branch
        %387 = sbr.rel (%p385) target = $region44
      $region43: #{cpvt_gap_forward.15} parent=39 // pred_region
        %p388 = scmp.lt.s32.totalorder %s15, 1
        %s389 = scalar_select %p388, %s15, 1
        %s390 = smul.addr %s389, 4
        %s391 = smul.addr %s390, 4
        %s392 = scalar_lea.vmem %s3, %s391
      $region44: #{cpvt_gap_forward.15} parent=39 // pred_fallthru
        _
    $region40: #{cpvt_gap_forward.15} parent=5 // pred_fallthru
      _
  $region6: #{cpvt_gap_forward.15} parent=0 // loop_footer
    %s13 = sadd.s32 1, %s9
  $region7: #{cpvt_gap_forward.15} parent=0 // loop_footer_branch
    %8 = sbr.rel target = $region3
  $region8: #{cpvt_gap_forward.15} parent=0 // loop_exit
    _

// kernel: cpvt_gap_forward.14
$region0: #{cpvt_gap_forward.14}
  #allocation0 [shape = 'u32[]', space=smem, size = 0x4, offset = 0x4, fixed_abs, tag = 'smem constant byte address 0x4 - core index']
  #allocation1 [shape = 'u32[144,128]{1,0:T(1,128)}', space=vmem, size = 0x12000, scoped, tag = 'internal scratch']
  #allocation2 [shape = 'f32[32,32]{1,0:T(8,128)}', space=vmem, size = 0x4000, scoped, tag = 'scratch operand']
  %s0 = inlined_call_operand.vmem [shape: f32[32,48], index: 0, kind: input, shape index: {}]
  %s1 = inlined_call_operand.vmem [shape: bf16[48,32], index: 1, kind: input, shape index: {}]
  %s2 = inlined_call_operand.vmem [shape: f32[1,32], index: 2, kind: input, shape index: {}]
  %s3 = inlined_call_operand.vmem [shape: f32[32,32], index: 3, kind: output, shape index: {}]
  %s4 = sld [smem:[#allocation0]]
  $region30: #{cpvt_gap_forward.14} parent=0
    _
  %s6 = ssub.s32 1, %s4
  %s7 = scalar_select 0, %s6, %s4
  // Predicated region
  $region2: #{cpvt_gap_forward.14} parent=0 // pred_check
    _
  $region3: #{cpvt_gap_forward.14} parent=0 // pred_check_branch
    %9 = sbr.rel (0) target = $region5
  $region4: #{cpvt_gap_forward.14} parent=0 // pred_region
    _
  $region5: #{cpvt_gap_forward.14} parent=0 // pred_fallthru
    _
  // Predicated region
  $region6: #{cpvt_gap_forward.14} parent=0 // pred_check
    _
  $region7: #{cpvt_gap_forward.14} parent=0 // pred_check_branch
    %11 = sbr.rel (0) target = $region9
  $region8: #{cpvt_gap_forward.14} parent=0 // pred_region
    _
  $region9: #{cpvt_gap_forward.14} parent=0 // pred_fallthru
    _
  // Predicated region
  $region10: #{cpvt_gap_forward.14} parent=0 // pred_check
    _
  $region11: #{cpvt_gap_forward.14} parent=0 // pred_check_branch
    %13 = sbr.rel (0) target = $region13
  $region12: #{cpvt_gap_forward.14} parent=0 // pred_region
    _
  $region13: #{cpvt_gap_forward.14} parent=0 // pred_fallthru
    _
  %p15 = scmp.eq.s32.totalorder 0, 0
  // Predicated region
  $region14: #{cpvt_gap_forward.14} parent=0 // pred_check
    %p16 = pneg %p15
  $region15: #{cpvt_gap_forward.14} parent=0 // pred_check_branch
    %18 = sbr.rel (%p16) target = $region17
  $region16: #{cpvt_gap_forward.14} parent=0 // pred_region
    %vm19 = vcmask 261120
    %20 = vst.msk [vmem:[#allocation2] sm:$0xff] %vm19, 0.0
    %21 = vst.msk [vmem:[#allocation2 + $0x8] sm:$0xff] %vm19, 0.0
    %22 = vst.msk [vmem:[#allocation2 + $0x10] sm:$0xff] %vm19, 0.0
    %23 = vst.msk [vmem:[#allocation2 + $0x18] sm:$0xff] %vm19, 0.0
  $region17: #{cpvt_gap_forward.14} parent=0 // pred_fallthru
    _
  %v24 = vld [vmem:[#allocation2] sm:$0xff]
  %v25 = vld [vmem:[#allocation2 + $0x8] sm:$0xff]
  %v26 = vld [vmem:[#allocation2 + $0x10] sm:$0xff]
  %v27 = vld [vmem:[#allocation2 + $0x18] sm:$0xff]
  %v28 = vld [vmem:[%s0] sm:$0xff]
  %v29 = vld [vmem:[%s0 + $0x8] sm:$0xff]
  %v30 = vld [vmem:[%s0 + $0x10] sm:$0xff]
  %v31 = vld [vmem:[%s0 + $0x18] sm:$0xff]
  %v32 = vpack.c.bf16 %v29, %v28
  %v33 = vpack.c.bf16 %v31, %v30
  %v34 = vld [vmem:[%s1] sm:$0xf]
  %v35 = vld [vmem:[%s1 + $0x4] sm:$0xf]
  %v36 = vld [vmem:[%s1 + $0x8] sm:$0xf]
  %v37 = vld [vmem:[%s1 + $0xc] sm:$0xf]
  %v38 = vld [vmem:[%s1 + $0x10] sm:$0xf]
  %v39 = vld [vmem:[%s1 + $0x14] sm:$0xf]
  %v46 = vunpack.c.l.b16 %v34
  %v47 = vunpack.c.l.b16 %v35
  %v48 = vunpack.c.l.b16 %v36
  %v49 = vunpack.c.l.b16 %v37
  %v50 = vunpack.c.l.b16 %v38
  %v51 = vunpack.c.l.b16 %v39
  %v52 = vpack.c.b16 %v47, %v46
  %v53 = vpack.c.b16 %v49, %v48
  %v54 = vpack.c.b16 %v51, %v50
  %vm58 = vcmask 392192
  %v60 = vsel %vm58, %v32, 0
  %v63 = vsel %vm58, %v33, 0
  %65 = vmatprep.subr.bf16.mxu0 0
  %66 = vmatpush1.bf16.msra.mxu0 %v52
  %67 = vmatprep.subr.bf16.mxu0 0
  %68 = vmatpush1.bf16.msra.mxu0 %v53
  %69 = vmatprep.subr.bf16.mxu0 0
  %70 = vmatpush1.bf16.msra.mxu0 %v54
  %71 = vmatprep.subr.bf16.mxu0 0
  %72 = vmatpush1.bf16.msra.mxu0 0
  %73 = vmatprep.subr.bf16.mxu0 0
  %74 = vmatpush1.bf16.msra.mxu0 0
  %75 = vmatprep.subr.bf16.mxu0 0
  %76 = vmatpush1.bf16.msra.mxu0 0
  %77 = vmatprep.subr.bf16.mxu0 0
  %78 = vmatpush1.bf16.msra.mxu0 0
  %79 = vmatprep.subr.bf16.mxu0 0
  %80 = vmatpush1.bf16.msra.mxu0 0
  %81 = vmatprep.subr.bf16.mxu0 0
  %82 = vmatpush1.bf16.msra.mxu0 0
  %83 = vmatprep.subr.bf16.mxu0 0
  %84 = vmatpush1.bf16.msra.mxu0 0
  %85 = vmatprep.subr.bf16.mxu0 0
  %86 = vmatpush1.bf16.msra.mxu0 0
  %87 = vmatprep.subr.bf16.mxu0 0
  %88 = vmatpush1.bf16.msra.mxu0 0
  %89 = vmatprep.subr.bf16.mxu0 0
  %90 = vmatpush1.bf16.msra.mxu0 0
  %91 = vmatprep.subr.bf16.mxu0 0
  %92 = vmatpush1.bf16.msra.mxu0 0
  %93 = vmatprep.subr.bf16.mxu0 0
  %94 = vmatpush1.bf16.msra.mxu0 0
  %95 = vmatprep.subr.bf16.mxu0 0
  %96 = vmatpush1.bf16.msra.mxu0 0
  %97 = vmatprep.mubr.bf16.mxu0 0
  %98 = vmatmul.mubr.bf16.gmra.mrb[0].mxu0 %v60
  %v99 = vpop.f32.mrb[0].mxu0
  %v100 = vadd.f32 0.0, %v99
  %v101 = vpop.f32.mrb[0].mxu0
  %v102 = vpop.f32.mrb[0].mxu0
  %v103 = vadd.f32 0.0, %v102
  %v104 = vpop.f32.mrb[0].mxu0
  %105 = vmatprep.mubr.bf16.mxu0 0
  %106 = vmatmul.mubr.bf16.gmra.mrb[0].mxu0 %v63
  %v107 = vpop.f32.mrb[0].mxu0
  %v108 = vadd.f32 0.0, %v107
  %v109 = vpop.f32.mrb[0].mxu0
  %v110 = vpop.f32.mrb[0].mxu0
  %v111 = vadd.f32 0.0, %v110
  %v112 = vpop.f32.mrb[0].mxu0
  %113 = vdwg.mxu0
  %v114 = vadd.f32 %v24, %v100
  %v115 = vadd.f32 %v25, %v103
  %v116 = vadd.f32 %v26, %v108
  %v117 = vadd.f32 %v27, %v111
  %vm118 = vcmask 261120
  %119 = vst.msk [vmem:[#allocation2] sm:$0xff] %vm118, %v114
  %120 = vst.msk [vmem:[#allocation2 + $0x8] sm:$0xff] %vm118, %v115
  %121 = vst.msk [vmem:[#allocation2 + $0x10] sm:$0xff] %vm118, %v116
  %122 = vst.msk [vmem:[#allocation2 + $0x18] sm:$0xff] %vm118, %v117
  // Predicated region
  $region18: #{cpvt_gap_forward.14} parent=0 // pred_check
    %p123 = pneg %p15
  $region19: #{cpvt_gap_forward.14} parent=0 // pred_check_branch
    %125 = sbr.rel (%p123) target = $region21
  $region20: #{cpvt_gap_forward.14} parent=0 // pred_region
    %v126 = vld [vmem:[#allocation2] sm:$0xff]
    %v127 = vld [vmem:[#allocation2 + $0x8] sm:$0xff]
    %v128 = vld [vmem:[#allocation2 + $0x10] sm:$0xff]
    %v129 = vld [vmem:[#allocation2 + $0x18] sm:$0xff]
    %v130 = vld [vmem:[%s2] sm:$0x1]
    %v132 = vlaneseq
    %v133 = vshrl.u32 %v132, 7
    %v134 = vsub.s32 0, %v133
    %v135 = vrot.slane %v130, %v134
    %v137 = vadd.f32 %v126, %v135
    %v138 = vadd.f32 %v127, %v135
    %v139 = vadd.f32 %v128, %v135
    %v140 = vadd.f32 %v129, %v135
    %141 = vst.msk [vmem:[%s3] sm:$0xff] %vm118, %v137
    %142 = vst.msk [vmem:[%s3 + $0x8] sm:$0xff] %vm118, %v138
    %143 = vst.msk [vmem:[%s3 + $0x10] sm:$0xff] %vm118, %v139
    %144 = vst.msk [vmem:[%s3 + $0x18] sm:$0xff] %vm118, %v140
  $region21: #{cpvt_gap_forward.14} parent=0 // pred_fallthru
    _
  // Predicated region
  $region22: #{cpvt_gap_forward.14} parent=0 // pred_check
    _
  $region23: #{cpvt_gap_forward.14} parent=0 // pred_check_branch
    %146 = sbr.rel (0) target = $region25
  $region24: #{cpvt_gap_forward.14} parent=0 // pred_region
    _
  $region25: #{cpvt_gap_forward.14} parent=0 // pred_fallthru
    _
  // Predicated region
  $region26: #{cpvt_gap_forward.14} parent=0 // pred_check
    _
  $region27: #{cpvt_gap_forward.14} parent=0 // pred_check_branch
    %148 = sbr.rel (0) target = $region29
  $region28: #{cpvt_gap_forward.14} parent=0 // pred_region
    _
  $region29: #{cpvt_gap_forward.14} parent=0 // pred_fallthru
    _

// kernel: cpvt_gap_forward.16
$region0: #{cpvt_gap_forward.16}
  #allocation0 [shape = 'u32[]', space=smem, size = 0x4, offset = 0x4, fixed_abs, tag = 'smem constant byte address 0x4 - core index']
  #allocation1 [shape = 'u32[144,128]{1,0:T(1,128)}', space=vmem, size = 0x12000, scoped, tag = 'internal scratch']
  %s0 = inlined_call_operand.vmem [shape: f32[34,32], index: 0, kind: input, shape index: {}]
  %s1 = inlined_call_operand.vmem [shape: f32[1,32], index: 1, kind: input, shape index: {}]
  %s2 = inlined_call_operand.vmem [shape: f32[1,32], index: 2, kind: input, shape index: {}]
  %s3 = inlined_call_operand.vmem [shape: bf16[32,96], index: 3, kind: input, shape index: {}]
  %s4 = inlined_call_operand.vmem [shape: f32[1,96], index: 4, kind: input, shape index: {}]
  %s5 = inlined_call_operand.vmem [shape: f32[34,96], index: 5, kind: output, shape index: {}]
  %s6 = sld [smem:[#allocation0]]
  $region30: #{cpvt_gap_forward.16} parent=0
    _
  %s8 = ssub.s32 1, %s6
  %s9 = scalar_select 0, %s8, %s6
  // Predicated region
  $region2: #{cpvt_gap_forward.16} parent=0 // pred_check
    _
  $region3: #{cpvt_gap_forward.16} parent=0 // pred_check_branch
    %11 = sbr.rel (0) target = $region5
  $region4: #{cpvt_gap_forward.16} parent=0 // pred_region
    _
  $region5: #{cpvt_gap_forward.16} parent=0 // pred_fallthru
    _
  // Predicated region
  $region6: #{cpvt_gap_forward.16} parent=0 // pred_check
    _
  $region7: #{cpvt_gap_forward.16} parent=0 // pred_check_branch
    %13 = sbr.rel (0) target = $region9
  $region8: #{cpvt_gap_forward.16} parent=0 // pred_region
    _
  $region9: #{cpvt_gap_forward.16} parent=0 // pred_fallthru
    _
  // Predicated region
  $region10: #{cpvt_gap_forward.16} parent=0 // pred_check
    _
  $region11: #{cpvt_gap_forward.16} parent=0 // pred_check_branch
    %15 = sbr.rel (0) target = $region13
  $region12: #{cpvt_gap_forward.16} parent=0 // pred_region
    _
  $region13: #{cpvt_gap_forward.16} parent=0 // pred_fallthru
    _
  // Predicated region
  $region14: #{cpvt_gap_forward.16} parent=0 // pred_check
    _
  $region15: #{cpvt_gap_forward.16} parent=0 // pred_check_branch
    %17 = sbr.rel (0) target = $region17
  $region16: #{cpvt_gap_forward.16} parent=0 // pred_region
    _
  $region17: #{cpvt_gap_forward.16} parent=0 // pred_fallthru
    _
  // Predicated region
  $region18: #{cpvt_gap_forward.16} parent=0 // pred_check
    _
  $region19: #{cpvt_gap_forward.16} parent=0 // pred_check_branch
    %19 = sbr.rel (0) target = $region21
  $region20: #{cpvt_gap_forward.16} parent=0 // pred_region
    _
  $region21: #{cpvt_gap_forward.16} parent=0 // pred_fallthru
    _
  %v21 = vld [vmem:[%s0] sm:$0xff]
  %v22 = vld [vmem:[%s0 + $0x8] sm:$0xff]
  %v23 = vld [vmem:[%s0 + $0x10] sm:$0xff]
  %v24 = vld [vmem:[%s0 + $0x18] sm:$0xff]
  %v25 = vld [vmem:[%s0 + $0x20] sm:$0x3]
  %vm26 = vcmask 261120
  %v27 = vsel %vm26, %v21, 0.0
  %28 = vadd.xlane.f32.xlu0 %v27
  %v29 = vpop.xlane.xlu0 %28
  %v30 = vsel %vm26, %v22, 0.0
  %31 = vadd.xlane.f32.xlu0 %v30
  %v32 = vpop.xlane.xlu0 %31
  %v33 = vsel %vm26, %v23, 0.0
  %34 = vadd.xlane.f32.xlu0 %v33
  %v35 = vpop.xlane.xlu0 %34
  %v36 = vsel %vm26, %v24, 0.0
  %37 = vadd.xlane.f32.xlu0 %v36
  %v38 = vpop.xlane.xlu0 %37
  %vm39 = vcmask 254976
  %v40 = vsel %vm39, %v25, 0.0
  %41 = vadd.xlane.f32.xlu0 %v40
  %v42 = vpop.xlane.xlu0 %41
  %v43 = vrcp.pop 32.0
  %v44 = vmul.f32 %v29, %v43
  %v45 = vmul.f32 %v32, %v43
  %v46 = vmul.f32 %v35, %v43
  %v47 = vmul.f32 %v38, %v43
  %v48 = vmul.f32 %v42, %v43
  %v49 = vsub.f32 %v21, %v44
  %v50 = vsub.f32 %v22, %v45
  %v51 = vsub.f32 %v23, %v46
  %v52 = vsub.f32 %v24, %v47
  %v53 = vsub.f32 %v25, %v48
  %v54 = vmul.f32 %v49, %v49
  %v55 = vmul.f32 %v50, %v50
  %v56 = vmul.f32 %v51, %v51
  %v57 = vmul.f32 %v52, %v52
  %v58 = vmul.f32 %v53, %v53
  %v59 = vsel %vm26, %v54, 0.0
  %60 = vadd.xlane.f32.xlu0 %v59
  %v61 = vpop.xlane.xlu0 %60
  %v62 = vsel %vm26, %v55, 0.0
  %63 = vadd.xlane.f32.xlu0 %v62
  %v64 = vpop.xlane.xlu0 %63
  %v65 = vsel %vm26, %v56, 0.0
  %66 = vadd.xlane.f32.xlu0 %v65
  %v67 = vpop.xlane.xlu0 %66
  %v68 = vsel %vm26, %v57, 0.0
  %69 = vadd.xlane.f32.xlu0 %v68
  %v70 = vpop.xlane.xlu0 %69
  %v71 = vsel %vm39, %v58, 0.0
  %72 = vadd.xlane.f32.xlu0 %v71
  %v73 = vpop.xlane.xlu0 %72
  %v74 = vmul.f32 %v61, %v43
  %v75 = vmul.f32 %v64, %v43
  %v76 = vmul.f32 %v67, %v43
  %v77 = vmul.f32 %v70, %v43
  %v78 = vmul.f32 %v73, %v43
  %v79 = vadd.f32 %v74, 1e-06
  %v80 = vadd.f32 %v75, 1e-06
  %v81 = vadd.f32 %v76, 1e-06
  %v82 = vadd.f32 %v77, 1e-06
  %v83 = vadd.f32 %v78, 1e-06
  %v84 = vrsqrt.pop %v79
  %v85 = vrsqrt.pop %v80
  %v86 = vrsqrt.pop %v81
  %v87 = vrsqrt.pop %v82
  %v88 = vrsqrt.pop %v83
  %v89 = vmul.f32 %v49, %v84
  %v90 = vmul.f32 %v50, %v85
  %v91 = vmul.f32 %v51, %v86
  %v92 = vmul.f32 %v52, %v87
  %v93 = vmul.f32 %v53, %v88
  %v94 = vld [vmem:[%s1] sm:$0x1]
  %v96 = vlaneseq
  %v97 = vshrl.u32 %v96, 7
  %v98 = vsub.s32 0, %v97
  %v99 = vrot.slane %v94, %v98
  %v101 = vmul.f32 %v89, %v99
  %v102 = vmul.f32 %v90, %v99
  %v103 = vmul.f32 %v91, %v99
  %v104 = vmul.f32 %v92, %v99
  %v105 = vmul.f32 %v93, %v99
  %v106 = vld [vmem:[%s2] sm:$0x1]
  %v108 = vlaneseq
  %v109 = vshrl.u32 %v108, 7
  %v110 = vsub.s32 0, %v109
  %v111 = vrot.slane %v106, %v110
  %v113 = vadd.f32 %v101, %v111
  %v114 = vadd.f32 %v102, %v111
  %v115 = vadd.f32 %v103, %v111
  %v116 = vadd.f32 %v104, %v111
  %v117 = vadd.f32 %v105, %v111
  %v118 = vpack.c.bf16 %v114, %v113
  %v119 = vpack.c.bf16 %v116, %v115
  %v120 = vpack.c.bf16 %v117, %v117
  %v121 = vld [vmem:[%s3] sm:$0xf]
  %v122 = vld [vmem:[%s3 + $0x4] sm:$0xf]
  %v123 = vld [vmem:[%s3 + $0x8] sm:$0xf]
  %v124 = vld [vmem:[%s3 + $0xc] sm:$0xf]
  %v125 = vld [vmem:[%s4] sm:$0x1]
  %v127 = vlaneseq
  %v128 = vshrl.u32 %v127, 7
  %v129 = vsub.s32 0, %v128
  %v130 = vrot.slane %v125, %v129
  %v136 = vunpack.c.l.b16 %v121
  %v137 = vunpack.c.l.b16 %v122
  %v138 = vunpack.c.l.b16 %v123
  %v139 = vunpack.c.l.b16 %v124
  %v140 = vpack.c.b16 %v137, %v136
  %v141 = vpack.c.b16 %v139, %v138
  %v145 = vsel %vm26, %v118, 0
  %v148 = vsel %vm26, %v119, 0
  %v151 = vsel %vm26, %v120, 0
  %153 = vmatprep.subr.bf16.mxu0 0
  %154 = vmatpush1.bf16.msra.mxu0 %v140
  %155 = vmatprep.subr.bf16.mxu0 0
  %156 = vmatpush1.bf16.msra.mxu0 %v141
  %157 = vmatprep.subr.bf16.mxu0 0
  %158 = vmatpush1.bf16.msra.mxu0 0
  %159 = vmatprep.subr.bf16.mxu0 0
  %160 = vmatpush1.bf16.msra.mxu0 0
  %161 = vmatprep.subr.bf16.mxu0 0
  %162 = vmatpush1.bf16.msra.mxu0 0
  %163 = vmatprep.subr.bf16.mxu0 0
  %164 = vmatpush1.bf16.msra.mxu0 0
  %165 = vmatprep.subr.bf16.mxu0 0
  %166 = vmatpush1.bf16.msra.mxu0 0
  %167 = vmatprep.subr.bf16.mxu0 0
  %168 = vmatpush1.bf16.msra.mxu0 0
  %169 = vmatprep.subr.bf16.mxu0 0
  %170 = vmatpush1.bf16.msra.mxu0 0
  %171 = vmatprep.subr.bf16.mxu0 0
  %172 = vmatpush1.bf16.msra.mxu0 0
  %173 = vmatprep.subr.bf16.mxu0 0
  %174 = vmatpush1.bf16.msra.mxu0 0
  %175 = vmatprep.subr.bf16.mxu0 0
  %176 = vmatpush1.bf16.msra.mxu0 0
  %177 = vmatprep.subr.bf16.mxu0 0
  %178 = vmatpush1.bf16.msra.mxu0 0
  %179 = vmatprep.subr.bf16.mxu0 0
  %180 = vmatpush1.bf16.msra.mxu0 0
  %181 = vmatprep.subr.bf16.mxu0 0
  %182 = vmatpush1.bf16.msra.mxu0 0
  %183 = vmatprep.subr.bf16.mxu0 0
  %184 = vmatpush1.bf16.msra.mxu0 0
  %185 = vmatprep.mubr.bf16.mxu0 0
  %186 = vmatmul.mubr.bf16.gmra.mrb[0].mxu0 %v145
  %v187 = vpop.f32.mrb[0].mxu0
  %v188 = vadd.f32 %v130, %v187
  %v189 = vpop.f32.mrb[0].mxu0
  %v190 = vpop.f32.mrb[0].mxu0
  %v191 = vadd.f32 %v130, %v190
  %v192 = vpop.f32.mrb[0].mxu0
  %193 = vmatprep.mubr.bf16.mxu0 0
  %194 = vmatmul.mubr.bf16.gmra.mrb[0].mxu0 %v148
  %v195 = vpop.f32.mrb[0].mxu0
  %v196 = vadd.f32 %v130, %v195
  %v197 = vpop.f32.mrb[0].mxu0
  %v198 = vpop.f32.mrb[0].mxu0
  %v199 = vadd.f32 %v130, %v198
  %v200 = vpop.f32.mrb[0].mxu0
  %201 = vmatprep.mubr.bf16.mxu0 0
  %202 = vmatmul.mubr.bf16.gmra.mrb[0].mxu0 %v151
  %v203 = vpop.f32.mrb[0].mxu0
  %v204 = vadd.f32 %v130, %v203
  %v205 = vpop.f32.mrb[0].mxu0
  %v206 = vpop.f32.mrb[0].mxu0
  %v207 = vpop.f32.mrb[0].mxu0
  %208 = vdwg.mxu0
  %vm209 = vcmask 785408
  %210 = vst.msk [vmem:[%s5] sm:$0xff] %vm209, %v188
  %211 = vst.msk [vmem:[%s5 + $0x8] sm:$0xff] %vm209, %v191
  %212 = vst.msk [vmem:[%s5 + $0x10] sm:$0xff] %vm209, %v196
  %213 = vst.msk [vmem:[%s5 + $0x18] sm:$0xff] %vm209, %v199
  %vm214 = vcmask 779264
  %215 = vst.msk [vmem:[%s5 + $0x20] sm:$0x3] %vm214, %v204
  // Predicated region
  $region22: #{cpvt_gap_forward.16} parent=0 // pred_check
    _
  $region23: #{cpvt_gap_forward.16} parent=0 // pred_check_branch
    %217 = sbr.rel (0) target = $region25
  $region24: #{cpvt_gap_forward.16} parent=0 // pred_region
    _
  $region25: #{cpvt_gap_forward.16} parent=0 // pred_fallthru
    _
  // Predicated region
  $region26: #{cpvt_gap_forward.16} parent=0 // pred_check
    _
  $region27: #{cpvt_gap_forward.16} parent=0 // pred_check_branch
    %219 = sbr.rel (0) target = $region29
  $region28: #{cpvt_gap_forward.16} parent=0 // pred_region
    _
  $region29: #{cpvt_gap_forward.16} parent=0 // pred_fallthru
    _

// kernel: cpvt_gap_forward.19
$region0: #{cpvt_gap_forward.19}
  #allocation0 [shape = 'u32[]', space=smem, size = 0x4, offset = 0x4, fixed_abs, tag = 'smem constant byte address 0x4 - core index']
  #allocation1 [shape = 'u32[144,128]{1,0:T(1,128)}', space=vmem, size = 0x12000, scoped, tag = 'internal scratch']
  %s0 = inlined_call_operand.vmem [shape: f32[34,32], index: 0, kind: input, shape index: {}]
  %s1 = inlined_call_operand.vmem [shape: f32[1,32], index: 1, kind: input, shape index: {}]
  %s2 = inlined_call_operand.vmem [shape: f32[1,32], index: 2, kind: input, shape index: {}]
  %s3 = inlined_call_operand.vmem [shape: bf16[32,64], index: 3, kind: input, shape index: {}]
  %s4 = inlined_call_operand.vmem [shape: f32[1,64], index: 4, kind: input, shape index: {}]
  %s5 = inlined_call_operand.vmem [shape: f32[34,64], index: 5, kind: output, shape index: {}]
  %s6 = sld [smem:[#allocation0]]
  $region30: #{cpvt_gap_forward.19} parent=0
    _
  %s8 = ssub.s32 1, %s6
  %s9 = scalar_select 0, %s8, %s6
  // Predicated region
  $region2: #{cpvt_gap_forward.19} parent=0 // pred_check
    _
  $region3: #{cpvt_gap_forward.19} parent=0 // pred_check_branch
    %11 = sbr.rel (0) target = $region5
  $region4: #{cpvt_gap_forward.19} parent=0 // pred_region
    _
  $region5: #{cpvt_gap_forward.19} parent=0 // pred_fallthru
    _
  // Predicated region
  $region6: #{cpvt_gap_forward.19} parent=0 // pred_check
    _
  $region7: #{cpvt_gap_forward.19} parent=0 // pred_check_branch
    %13 = sbr.rel (0) target = $region9
  $region8: #{cpvt_gap_forward.19} parent=0 // pred_region
    _
  $region9: #{cpvt_gap_forward.19} parent=0 // pred_fallthru
    _
  // Predicated region
  $region10: #{cpvt_gap_forward.19} parent=0 // pred_check
    _
  $region11: #{cpvt_gap_forward.19} parent=0 // pred_check_branch
    %15 = sbr.rel (0) target = $region13
  $region12: #{cpvt_gap_forward.19} parent=0 // pred_region
    _
  $region13: #{cpvt_gap_forward.19} parent=0 // pred_fallthru
    _
  // Predicated region
  $region14: #{cpvt_gap_forward.19} parent=0 // pred_check
    _
  $region15: #{cpvt_gap_forward.19} parent=0 // pred_check_branch
    %17 = sbr.rel (0) target = $region17
  $region16: #{cpvt_gap_forward.19} parent=0 // pred_region
    _
  $region17: #{cpvt_gap_forward.19} parent=0 // pred_fallthru
    _
  // Predicated region
  $region18: #{cpvt_gap_forward.19} parent=0 // pred_check
    _
  $region19: #{cpvt_gap_forward.19} parent=0 // pred_check_branch
    %19 = sbr.rel (0) target = $region21
  $region20: #{cpvt_gap_forward.19} parent=0 // pred_region
    _
  $region21: #{cpvt_gap_forward.19} parent=0 // pred_fallthru
    _
  %v21 = vld [vmem:[%s0] sm:$0xff]
  %v22 = vld [vmem:[%s0 + $0x8] sm:$0xff]
  %v23 = vld [vmem:[%s0 + $0x10] sm:$0xff]
  %v24 = vld [vmem:[%s0 + $0x18] sm:$0xff]
  %v25 = vld [vmem:[%s0 + $0x20] sm:$0x3]
  %vm26 = vcmask 261120
  %v27 = vsel %vm26, %v21, 0.0
  %28 = vadd.xlane.f32.xlu0 %v27
  %v29 = vpop.xlane.xlu0 %28
  %v30 = vsel %vm26, %v22, 0.0
  %31 = vadd.xlane.f32.xlu0 %v30
  %v32 = vpop.xlane.xlu0 %31
  %v33 = vsel %vm26, %v23, 0.0
  %34 = vadd.xlane.f32.xlu0 %v33
  %v35 = vpop.xlane.xlu0 %34
  %v36 = vsel %vm26, %v24, 0.0
  %37 = vadd.xlane.f32.xlu0 %v36
  %v38 = vpop.xlane.xlu0 %37
  %vm39 = vcmask 254976
  %v40 = vsel %vm39, %v25, 0.0
  %41 = vadd.xlane.f32.xlu0 %v40
  %v42 = vpop.xlane.xlu0 %41
  %v43 = vrcp.pop 32.0
  %v44 = vmul.f32 %v29, %v43
  %v45 = vmul.f32 %v32, %v43
  %v46 = vmul.f32 %v35, %v43
  %v47 = vmul.f32 %v38, %v43
  %v48 = vmul.f32 %v42, %v43
  %v49 = vsub.f32 %v21, %v44
  %v50 = vsub.f32 %v22, %v45
  %v51 = vsub.f32 %v23, %v46
  %v52 = vsub.f32 %v24, %v47
  %v53 = vsub.f32 %v25, %v48
  %v54 = vmul.f32 %v49, %v49
  %v55 = vmul.f32 %v50, %v50
  %v56 = vmul.f32 %v51, %v51
  %v57 = vmul.f32 %v52, %v52
  %v58 = vmul.f32 %v53, %v53
  %v59 = vsel %vm26, %v54, 0.0
  %60 = vadd.xlane.f32.xlu0 %v59
  %v61 = vpop.xlane.xlu0 %60
  %v62 = vsel %vm26, %v55, 0.0
  %63 = vadd.xlane.f32.xlu0 %v62
  %v64 = vpop.xlane.xlu0 %63
  %v65 = vsel %vm26, %v56, 0.0
  %66 = vadd.xlane.f32.xlu0 %v65
  %v67 = vpop.xlane.xlu0 %66
  %v68 = vsel %vm26, %v57, 0.0
  %69 = vadd.xlane.f32.xlu0 %v68
  %v70 = vpop.xlane.xlu0 %69
  %v71 = vsel %vm39, %v58, 0.0
  %72 = vadd.xlane.f32.xlu0 %v71
  %v73 = vpop.xlane.xlu0 %72
  %v74 = vmul.f32 %v61, %v43
  %v75 = vmul.f32 %v64, %v43
  %v76 = vmul.f32 %v67, %v43
  %v77 = vmul.f32 %v70, %v43
  %v78 = vmul.f32 %v73, %v43
  %v79 = vadd.f32 %v74, 1e-06
  %v80 = vadd.f32 %v75, 1e-06
  %v81 = vadd.f32 %v76, 1e-06
  %v82 = vadd.f32 %v77, 1e-06
  %v83 = vadd.f32 %v78, 1e-06
  %v84 = vrsqrt.pop %v79
  %v85 = vrsqrt.pop %v80
  %v86 = vrsqrt.pop %v81
  %v87 = vrsqrt.pop %v82
  %v88 = vrsqrt.pop %v83
  %v89 = vmul.f32 %v49, %v84
  %v90 = vmul.f32 %v50, %v85
  %v91 = vmul.f32 %v51, %v86
  %v92 = vmul.f32 %v52, %v87
  %v93 = vmul.f32 %v53, %v88
  %v94 = vld [vmem:[%s1] sm:$0x1]
  %v96 = vlaneseq
  %v97 = vshrl.u32 %v96, 7
  %v98 = vsub.s32 0, %v97
  %v99 = vrot.slane %v94, %v98
  %v101 = vmul.f32 %v89, %v99
  %v102 = vmul.f32 %v90, %v99
  %v103 = vmul.f32 %v91, %v99
  %v104 = vmul.f32 %v92, %v99
  %v105 = vmul.f32 %v93, %v99
  %v106 = vld [vmem:[%s2] sm:$0x1]
  %v108 = vlaneseq
  %v109 = vshrl.u32 %v108, 7
  %v110 = vsub.s32 0, %v109
  %v111 = vrot.slane %v106, %v110
  %v113 = vadd.f32 %v101, %v111
  %v114 = vadd.f32 %v102, %v111
  %v115 = vadd.f32 %v103, %v111
  %v116 = vadd.f32 %v104, %v111
  %v117 = vadd.f32 %v105, %v111
  %v118 = vpack.c.bf16 %v114, %v113
  %v119 = vpack.c.bf16 %v116, %v115
  %v120 = vpack.c.bf16 %v117, %v117
  %v121 = vld [vmem:[%s3] sm:$0xf]
  %v122 = vld [vmem:[%s3 + $0x4] sm:$0xf]
  %v123 = vld [vmem:[%s3 + $0x8] sm:$0xf]
  %v124 = vld [vmem:[%s3 + $0xc] sm:$0xf]
  %v125 = vld [vmem:[%s4] sm:$0x1]
  %v127 = vlaneseq
  %v128 = vshrl.u32 %v127, 7
  %v129 = vsub.s32 0, %v128
  %v130 = vrot.slane %v125, %v129
  %v136 = vunpack.c.l.b16 %v121
  %v137 = vunpack.c.l.b16 %v122
  %v138 = vunpack.c.l.b16 %v123
  %v139 = vunpack.c.l.b16 %v124
  %v140 = vpack.c.b16 %v137, %v136
  %v141 = vpack.c.b16 %v139, %v138
  %v145 = vsel %vm26, %v118, 0
  %v148 = vsel %vm26, %v119, 0
  %v151 = vsel %vm26, %v120, 0
  %153 = vmatprep.subr.bf16.mxu0 0
  %154 = vmatpush1.bf16.msra.mxu0 %v140
  %155 = vmatprep.subr.bf16.mxu0 0
  %156 = vmatpush1.bf16.msra.mxu0 %v141
  %157 = vmatprep.subr.bf16.mxu0 0
  %158 = vmatpush1.bf16.msra.mxu0 0
  %159 = vmatprep.subr.bf16.mxu0 0
  %160 = vmatpush1.bf16.msra.mxu0 0
  %161 = vmatprep.subr.bf16.mxu0 0
  %162 = vmatpush1.bf16.msra.mxu0 0
  %163 = vmatprep.subr.bf16.mxu0 0
  %164 = vmatpush1.bf16.msra.mxu0 0
  %165 = vmatprep.subr.bf16.mxu0 0
  %166 = vmatpush1.bf16.msra.mxu0 0
  %167 = vmatprep.subr.bf16.mxu0 0
  %168 = vmatpush1.bf16.msra.mxu0 0
  %169 = vmatprep.subr.bf16.mxu0 0
  %170 = vmatpush1.bf16.msra.mxu0 0
  %171 = vmatprep.subr.bf16.mxu0 0
  %172 = vmatpush1.bf16.msra.mxu0 0
  %173 = vmatprep.subr.bf16.mxu0 0
  %174 = vmatpush1.bf16.msra.mxu0 0
  %175 = vmatprep.subr.bf16.mxu0 0
  %176 = vmatpush1.bf16.msra.mxu0 0
  %177 = vmatprep.subr.bf16.mxu0 0
  %178 = vmatpush1.bf16.msra.mxu0 0
  %179 = vmatprep.subr.bf16.mxu0 0
  %180 = vmatpush1.bf16.msra.mxu0 0
  %181 = vmatprep.subr.bf16.mxu0 0
  %182 = vmatpush1.bf16.msra.mxu0 0
  %183 = vmatprep.subr.bf16.mxu0 0
  %184 = vmatpush1.bf16.msra.mxu0 0
  %185 = vmatprep.mubr.bf16.mxu0 0
  %186 = vmatmul.mubr.bf16.gmra.mrb[0].mxu0 %v145
  %v187 = vpop.f32.mrb[0].mxu0
  %v188 = vadd.f32 %v130, %v187
  %v189 = vpop.f32.mrb[0].mxu0
  %v190 = vpop.f32.mrb[0].mxu0
  %v191 = vadd.f32 %v130, %v190
  %v192 = vpop.f32.mrb[0].mxu0
  %193 = vmatprep.mubr.bf16.mxu0 0
  %194 = vmatmul.mubr.bf16.gmra.mrb[0].mxu0 %v148
  %v195 = vpop.f32.mrb[0].mxu0
  %v196 = vadd.f32 %v130, %v195
  %v197 = vpop.f32.mrb[0].mxu0
  %v198 = vpop.f32.mrb[0].mxu0
  %v199 = vadd.f32 %v130, %v198
  %v200 = vpop.f32.mrb[0].mxu0
  %201 = vmatprep.mubr.bf16.mxu0 0
  %202 = vmatmul.mubr.bf16.gmra.mrb[0].mxu0 %v151
  %v203 = vpop.f32.mrb[0].mxu0
  %v204 = vadd.f32 %v130, %v203
  %v205 = vpop.f32.mrb[0].mxu0
  %v206 = vpop.f32.mrb[0].mxu0
  %v207 = vpop.f32.mrb[0].mxu0
  %208 = vdwg.mxu0
  %vm209 = vcmask 523264
  %210 = vst.msk [vmem:[%s5] sm:$0xff] %vm209, %v188
  %211 = vst.msk [vmem:[%s5 + $0x8] sm:$0xff] %vm209, %v191
  %212 = vst.msk [vmem:[%s5 + $0x10] sm:$0xff] %vm209, %v196
  %213 = vst.msk [vmem:[%s5 + $0x18] sm:$0xff] %vm209, %v199
  %vm214 = vcmask 517120
  %215 = vst.msk [vmem:[%s5 + $0x20] sm:$0x3] %vm214, %v204
  // Predicated region
  $region22: #{cpvt_gap_forward.19} parent=0 // pred_check
    _
  $region23: #{cpvt_gap_forward.19} parent=0 // pred_check_branch
    %217 = sbr.rel (0) target = $region25
  $region24: #{cpvt_gap_forward.19} parent=0 // pred_region
    _
  $region25: #{cpvt_gap_forward.19} parent=0 // pred_fallthru
    _
  // Predicated region
  $region26: #{cpvt_gap_forward.19} parent=0 // pred_check
    _
  $region27: #{cpvt_gap_forward.19} parent=0 // pred_check_branch
    %219 = sbr.rel (0) target = $region29
  $region28: #{cpvt_gap_forward.19} parent=0 // pred_region
    _
  $region29: #{cpvt_gap_forward.19} parent=0 // pred_fallthru
    _

// kernel: cpvt_gap_forward.18
$region0: #{cpvt_gap_forward.18}
  #allocation0 [shape = 'u32[]', space=smem, size = 0x4, offset = 0x4, fixed_abs, tag = 'smem constant byte address 0x4 - core index']
  #allocation1 [shape = 'u32[144,128]{1,0:T(1,128)}', space=vmem, size = 0x12000, scoped, tag = 'internal scratch']
  #allocation2 [shape = 'f32[34,32]{1,0:T(8,128)}', space=vmem, size = 0x5000, scoped, tag = 'scratch operand']
  %s0 = inlined_call_operand.vmem [shape: f32[34,32], index: 0, kind: input, shape index: {}]
  %s1 = inlined_call_operand.vmem [shape: bf16[32,32], index: 1, kind: input, shape index: {}]
  %s2 = inlined_call_operand.vmem [shape: f32[1,32], index: 2, kind: input, shape index: {}]
  %s3 = inlined_call_operand.vmem [shape: f32[34,32], index: 3, kind: input, shape index: {}]
  %s4 = inlined_call_operand.vmem [shape: f32[34,32], index: 4, kind: output, shape index: {}]
  %s5 = sld [smem:[#allocation0]]
  $region34: #{cpvt_gap_forward.18} parent=0
    _
  %s7 = ssub.s32 1, %s5
  %s8 = scalar_select 0, %s7, %s5
  // Predicated region
  $region2: #{cpvt_gap_forward.18} parent=0 // pred_check
    _
  $region3: #{cpvt_gap_forward.18} parent=0 // pred_check_branch
    %10 = sbr.rel (0) target = $region5
  $region4: #{cpvt_gap_forward.18} parent=0 // pred_region
    _
  $region5: #{cpvt_gap_forward.18} parent=0 // pred_fallthru
    _
  // Predicated region
  $region6: #{cpvt_gap_forward.18} parent=0 // pred_check
    _
  $region7: #{cpvt_gap_forward.18} parent=0 // pred_check_branch
    %12 = sbr.rel (0) target = $region9
  $region8: #{cpvt_gap_forward.18} parent=0 // pred_region
    _
  $region9: #{cpvt_gap_forward.18} parent=0 // pred_fallthru
    _
  // Predicated region
  $region10: #{cpvt_gap_forward.18} parent=0 // pred_check
    _
  $region11: #{cpvt_gap_forward.18} parent=0 // pred_check_branch
    %14 = sbr.rel (0) target = $region13
  $region12: #{cpvt_gap_forward.18} parent=0 // pred_region
    _
  $region13: #{cpvt_gap_forward.18} parent=0 // pred_fallthru
    _
  // Predicated region
  $region14: #{cpvt_gap_forward.18} parent=0 // pred_check
    _
  $region15: #{cpvt_gap_forward.18} parent=0 // pred_check_branch
    %16 = sbr.rel (0) target = $region17
  $region16: #{cpvt_gap_forward.18} parent=0 // pred_region
    _
  $region17: #{cpvt_gap_forward.18} parent=0 // pred_fallthru
    _
  %p18 = scmp.eq.s32.totalorder 0, 0
  // Predicated region
  $region18: #{cpvt_gap_forward.18} parent=0 // pred_check
    %p19 = pneg %p18
  $region19: #{cpvt_gap_forward.18} parent=0 // pred_check_branch
    %21 = sbr.rel (%p19) target = $region21
  $region20: #{cpvt_gap_forward.18} parent=0 // pred_region
    %vm22 = vcmask 261120
    %23 = vst.msk [vmem:[#allocation2] sm:$0xff] %vm22, 0.0
    %24 = vst.msk [vmem:[#allocation2 + $0x8] sm:$0xff] %vm22, 0.0
    %25 = vst.msk [vmem:[#allocation2 + $0x10] sm:$0xff] %vm22, 0.0
    %26 = vst.msk [vmem:[#allocation2 + $0x18] sm:$0xff] %vm22, 0.0
    %vm27 = vcmask 254976
    %28 = vst.msk [vmem:[#allocation2 + $0x20] sm:$0x3] %vm27, 0.0
  $region21: #{cpvt_gap_forward.18} parent=0 // pred_fallthru
    _
  %v29 = vld [vmem:[#allocation2] sm:$0xff]
  %v30 = vld [vmem:[#allocation2 + $0x8] sm:$0xff]
  %v31 = vld [vmem:[#allocation2 + $0x10] sm:$0xff]
  %v32 = vld [vmem:[#allocation2 + $0x18] sm:$0xff]
  %v33 = vld [vmem:[#allocation2 + $0x20] sm:$0x3]
  %v34 = vld [vmem:[%s0] sm:$0xff]
  %v35 = vld [vmem:[%s0 + $0x8] sm:$0xff]
  %v36 = vld [vmem:[%s0 + $0x10] sm:$0xff]
  %v37 = vld [vmem:[%s0 + $0x18] sm:$0xff]
  %v38 = vld [vmem:[%s0 + $0x20] sm:$0x3]
  %v39 = vpack.c.bf16 %v35, %v34
  %v40 = vpack.c.bf16 %v37, %v36
  %v41 = vpack.c.bf16 %v38, %v38
  %v42 = vld [vmem:[%s1] sm:$0xf]
  %v43 = vld [vmem:[%s1 + $0x4] sm:$0xf]
  %v44 = vld [vmem:[%s1 + $0x8] sm:$0xf]
  %v45 = vld [vmem:[%s1 + $0xc] sm:$0xf]
  %v50 = vunpack.c.l.b16 %v42
  %v51 = vunpack.c.l.b16 %v43
  %v52 = vunpack.c.l.b16 %v44
  %v53 = vunpack.c.l.b16 %v45
  %v54 = vpack.c.b16 %v51, %v50
  %v55 = vpack.c.b16 %v53, %v52
  %vm58 = vcmask 261120
  %v60 = vsel %vm58, %v39, 0
  %v63 = vsel %vm58, %v40, 0
  %v66 = vsel %vm58, %v41, 0
  %68 = vmatprep.subr.bf16.mxu0 0
  %69 = vmatpush1.bf16.msra.mxu0 %v54
  %70 = vmatprep.subr.bf16.mxu0 0
  %71 = vmatpush1.bf16.msra.mxu0 %v55
  %72 = vmatprep.subr.bf16.mxu0 0
  %73 = vmatpush1.bf16.msra.mxu0 0
  %74 = vmatprep.subr.bf16.mxu0 0
  %75 = vmatpush1.bf16.msra.mxu0 0
  %76 = vmatprep.subr.bf16.mxu0 0
  %77 = vmatpush1.bf16.msra.mxu0 0
  %78 = vmatprep.subr.bf16.mxu0 0
  %79 = vmatpush1.bf16.msra.mxu0 0
  %80 = vmatprep.subr.bf16.mxu0 0
  %81 = vmatpush1.bf16.msra.mxu0 0
  %82 = vmatprep.subr.bf16.mxu0 0
  %83 = vmatpush1.bf16.msra.mxu0 0
  %84 = vmatprep.subr.bf16.mxu0 0
  %85 = vmatpush1.bf16.msra.mxu0 0
  %86 = vmatprep.subr.bf16.mxu0 0
  %87 = vmatpush1.bf16.msra.mxu0 0
  %88 = vmatprep.subr.bf16.mxu0 0
  %89 = vmatpush1.bf16.msra.mxu0 0
  %90 = vmatprep.subr.bf16.mxu0 0
  %91 = vmatpush1.bf16.msra.mxu0 0
  %92 = vmatprep.subr.bf16.mxu0 0
  %93 = vmatpush1.bf16.msra.mxu0 0
  %94 = vmatprep.subr.bf16.mxu0 0
  %95 = vmatpush1.bf16.msra.mxu0 0
  %96 = vmatprep.subr.bf16.mxu0 0
  %97 = vmatpush1.bf16.msra.mxu0 0
  %98 = vmatprep.subr.bf16.mxu0 0
  %99 = vmatpush1.bf16.msra.mxu0 0
  %100 = vmatprep.mubr.bf16.mxu0 0
  %101 = vmatmul.mubr.bf16.gmra.mrb[0].mxu0 %v60
  %v102 = vpop.f32.mrb[0].mxu0
  %v103 = vadd.f32 0.0, %v102
  %v104 = vpop.f32.mrb[0].mxu0
  %v105 = vpop.f32.mrb[0].mxu0
  %v106 = vadd.f32 0.0, %v105
  %v107 = vpop.f32.mrb[0].mxu0
  %108 = vmatprep.mubr.bf16.mxu0 0
  %109 = vmatmul.mubr.bf16.gmra.mrb[0].mxu0 %v63
  %v110 = vpop.f32.mrb[0].mxu0
  %v111 = vadd.f32 0.0, %v110
  %v112 = vpop.f32.mrb[0].mxu0
  %v113 = vpop.f32.mrb[0].mxu0
  %v114 = vadd.f32 0.0, %v113
  %v115 = vpop.f32.mrb[0].mxu0
  %116 = vmatprep.mubr.bf16.mxu0 0
  %117 = vmatmul.mubr.bf16.gmra.mrb[0].mxu0 %v66
  %v118 = vpop.f32.mrb[0].mxu0
  %v119 = vadd.f32 0.0, %v118
  %v120 = vpop.f32.mrb[0].mxu0
  %v121 = vpop.f32.mrb[0].mxu0
  %v122 = vpop.f32.mrb[0].mxu0
  %123 = vdwg.mxu0
  %v124 = vadd.f32 %v29, %v103
  %v125 = vadd.f32 %v30, %v106
  %v126 = vadd.f32 %v31, %v111
  %v127 = vadd.f32 %v32, %v114
  %v128 = vadd.f32 %v33, %v119
  %129 = vst.msk [vmem:[#allocation2] sm:$0xff] %vm58, %v124
  %130 = vst.msk [vmem:[#allocation2 + $0x8] sm:$0xff] %vm58, %v125
  %131 = vst.msk [vmem:[#allocation2 + $0x10] sm:$0xff] %vm58, %v126
  %132 = vst.msk [vmem:[#allocation2 + $0x18] sm:$0xff] %vm58, %v127
  %vm133 = vcmask 254976
  %134 = vst.msk [vmem:[#allocation2 + $0x20] sm:$0x3] %vm133, %v128
  // Predicated region
  $region22: #{cpvt_gap_forward.18} parent=0 // pred_check
    %p135 = pneg %p18
  $region23: #{cpvt_gap_forward.18} parent=0 // pred_check_branch
    %137 = sbr.rel (%p135) target = $region25
  $region24: #{cpvt_gap_forward.18} parent=0 // pred_region
    %v138 = vld [vmem:[#allocation2] sm:$0xff]
    %v139 = vld [vmem:[#allocation2 + $0x8] sm:$0xff]
    %v140 = vld [vmem:[#allocation2 + $0x10] sm:$0xff]
    %v141 = vld [vmem:[#allocation2 + $0x18] sm:$0xff]
    %v142 = vld [vmem:[#allocation2 + $0x20] sm:$0x3]
    %v143 = vld [vmem:[%s2] sm:$0x1]
    %v145 = vlaneseq
    %v146 = vshrl.u32 %v145, 7
    %v147 = vsub.s32 0, %v146
    %v148 = vrot.slane %v143, %v147
    %v150 = vadd.f32 %v138, %v148
    %v151 = vadd.f32 %v139, %v148
    %v152 = vadd.f32 %v140, %v148
    %v153 = vadd.f32 %v141, %v148
    %v154 = vadd.f32 %v142, %v148
    %v155 = vld [vmem:[%s3] sm:$0xff]
    %v156 = vld [vmem:[%s3 + $0x8] sm:$0xff]
    %v157 = vld [vmem:[%s3 + $0x10] sm:$0xff]
    %v158 = vld [vmem:[%s3 + $0x18] sm:$0xff]
    %v159 = vld [vmem:[%s3 + $0x20] sm:$0x3]
    %v160 = vadd.f32 %v150, %v155
    %v161 = vadd.f32 %v151, %v156
    %v162 = vadd.f32 %v152, %v157
    %v163 = vadd.f32 %v153, %v158
    %v164 = vadd.f32 %v154, %v159
    %165 = vst.msk [vmem:[%s4] sm:$0xff] %vm58, %v160
    %166 = vst.msk [vmem:[%s4 + $0x8] sm:$0xff] %vm58, %v161
    %167 = vst.msk [vmem:[%s4 + $0x10] sm:$0xff] %vm58, %v162
    %168 = vst.msk [vmem:[%s4 + $0x18] sm:$0xff] %vm58, %v163
    %169 = vst.msk [vmem:[%s4 + $0x20] sm:$0x3] %vm133, %v164
  $region25: #{cpvt_gap_forward.18} parent=0 // pred_fallthru
    _
  // Predicated region
  $region26: #{cpvt_gap_forward.18} parent=0 // pred_check
    _
  $region27: #{cpvt_gap_forward.18} parent=0 // pred_check_branch
    %171 = sbr.rel (0) target = $region29
  $region28: #{cpvt_gap_forward.18} parent=0 // pred_region
    _
  $region29: #{cpvt_gap_forward.18} parent=0 // pred_fallthru
    _
  // Predicated region
  $region30: #{cpvt_gap_forward.18} parent=0 // pred_check
    _
  $region31: #{cpvt_gap_forward.18} parent=0 // pred_check_branch
    %173 = sbr.rel (0) target = $region33
  $region32: #{cpvt_gap_forward.18} parent=0 // pred_region
    _
  $region33: #{cpvt_gap_forward.18} parent=0 // pred_fallthru
    _

// kernel: cpvt_gap_forward.20
$region0: #{cpvt_gap_forward.20}
  #allocation0 [shape = 'u32[]', space=smem, size = 0x4, offset = 0x4, fixed_abs, tag = 'smem constant byte address 0x4 - core index']
  #allocation1 [shape = 'u32[144,128]{1,0:T(1,128)}', space=vmem, size = 0x12000, scoped, tag = 'internal scratch']
  #allocation2 [shape = 'f32[34,32]{1,0:T(8,128)}', space=vmem, size = 0x5000, scoped, tag = 'scratch operand']
  %s0 = inlined_call_operand.vmem [shape: f32[34,64], index: 0, kind: input, shape index: {}]
  %s1 = inlined_call_operand.vmem [shape: bf16[64,32], index: 1, kind: input, shape index: {}]
  %s2 = inlined_call_operand.vmem [shape: f32[1,32], index: 2, kind: input, shape index: {}]
  %s3 = inlined_call_operand.vmem [shape: f32[34,32], index: 3, kind: output, shape index: {}]
  %s4 = sld [smem:[#allocation0]]
  $region30: #{cpvt_gap_forward.20} parent=0
    _
  %s6 = ssub.s32 1, %s4
  %s7 = scalar_select 0, %s6, %s4
  // Predicated region
  $region2: #{cpvt_gap_forward.20} parent=0 // pred_check
    _
  $region3: #{cpvt_gap_forward.20} parent=0 // pred_check_branch
    %9 = sbr.rel (0) target = $region5
  $region4: #{cpvt_gap_forward.20} parent=0 // pred_region
    _
  $region5: #{cpvt_gap_forward.20} parent=0 // pred_fallthru
    _
  // Predicated region
  $region6: #{cpvt_gap_forward.20} parent=0 // pred_check
    _
  $region7: #{cpvt_gap_forward.20} parent=0 // pred_check_branch
    %11 = sbr.rel (0) target = $region9
  $region8: #{cpvt_gap_forward.20} parent=0 // pred_region
    _
  $region9: #{cpvt_gap_forward.20} parent=0 // pred_fallthru
    _
  // Predicated region
  $region10: #{cpvt_gap_forward.20} parent=0 // pred_check
    _
  $region11: #{cpvt_gap_forward.20} parent=0 // pred_check_branch
    %13 = sbr.rel (0) target = $region13
  $region12: #{cpvt_gap_forward.20} parent=0 // pred_region
    _
  $region13: #{cpvt_gap_forward.20} parent=0 // pred_fallthru
    _
  %p15 = scmp.eq.s32.totalorder 0, 0
  // Predicated region
  $region14: #{cpvt_gap_forward.20} parent=0 // pred_check
    %p16 = pneg %p15
  $region15: #{cpvt_gap_forward.20} parent=0 // pred_check_branch
    %18 = sbr.rel (%p16) target = $region17
  $region16: #{cpvt_gap_forward.20} parent=0 // pred_region
    %vm19 = vcmask 261120
    %20 = vst.msk [vmem:[#allocation2] sm:$0xff] %vm19, 0.0
    %21 = vst.msk [vmem:[#allocation2 + $0x8] sm:$0xff] %vm19, 0.0
    %22 = vst.msk [vmem:[#allocation2 + $0x10] sm:$0xff] %vm19, 0.0
    %23 = vst.msk [vmem:[#allocation2 + $0x18] sm:$0xff] %vm19, 0.0
    %vm24 = vcmask 254976
    %25 = vst.msk [vmem:[#allocation2 + $0x20] sm:$0x3] %vm24, 0.0
  $region17: #{cpvt_gap_forward.20} parent=0 // pred_fallthru
    _
  %v26 = vld [vmem:[#allocation2] sm:$0xff]
  %v27 = vld [vmem:[#allocation2 + $0x8] sm:$0xff]
  %v28 = vld [vmem:[#allocation2 + $0x10] sm:$0xff]
  %v29 = vld [vmem:[#allocation2 + $0x18] sm:$0xff]
  %v30 = vld [vmem:[#allocation2 + $0x20] sm:$0x3]
  %v31 = vld [vmem:[%s0] sm:$0xff]
  %v32 = vld [vmem:[%s0 + $0x8] sm:$0xff]
  %v33 = vld [vmem:[%s0 + $0x10] sm:$0xff]
  %v34 = vld [vmem:[%s0 + $0x18] sm:$0xff]
  %v35 = vld [vmem:[%s0 + $0x20] sm:$0x3]
  %v36 = vpack.c.bf16 %v32, %v31
  %v37 = vpack.c.bf16 %v34, %v33
  %v38 = vpack.c.bf16 %v35, %v35
  %v39 = vld [vmem:[%s1] sm:$0xf]
  %v40 = vld [vmem:[%s1 + $0x4] sm:$0xf]
  %v41 = vld [vmem:[%s1 + $0x8] sm:$0xf]
  %v42 = vld [vmem:[%s1 + $0xc] sm:$0xf]
  %v43 = vld [vmem:[%s1 + $0x10] sm:$0xf]
  %v44 = vld [vmem:[%s1 + $0x14] sm:$0xf]
  %v45 = vld [vmem:[%s1 + $0x18] sm:$0xf]
  %v46 = vld [vmem:[%s1 + $0x1c] sm:$0xf]
  %v55 = vunpack.c.l.b16 %v39
  %v56 = vunpack.c.l.b16 %v40
  %v57 = vunpack.c.l.b16 %v41
  %v58 = vunpack.c.l.b16 %v42
  %v59 = vunpack.c.l.b16 %v43
  %v60 = vunpack.c.l.b16 %v44
  %v61 = vunpack.c.l.b16 %v45
  %v62 = vunpack.c.l.b16 %v46
  %v63 = vpack.c.b16 %v56, %v55
  %v64 = vpack.c.b16 %v58, %v57
  %v65 = vpack.c.b16 %v60, %v59
  %v66 = vpack.c.b16 %v62, %v61
  %vm71 = vcmask 523264
  %v73 = vsel %vm71, %v36, 0
  %v76 = vsel %vm71, %v37, 0
  %v79 = vsel %vm71, %v38, 0
  %81 = vmatprep.subr.bf16.mxu0 0
  %82 = vmatpush1.bf16.msra.mxu0 %v63
  %83 = vmatprep.subr.bf16.mxu0 0
  %84 = vmatpush1.bf16.msra.mxu0 %v64
  %85 = vmatprep.subr.bf16.mxu0 0
  %86 = vmatpush1.bf16.msra.mxu0 %v65
  %87 = vmatprep.subr.bf16.mxu0 0
  %88 = vmatpush1.bf16.msra.mxu0 %v66
  %89 = vmatprep.subr.bf16.mxu0 0
  %90 = vmatpush1.bf16.msra.mxu0 0
  %91 = vmatprep.subr.bf16.mxu0 0
  %92 = vmatpush1.bf16.msra.mxu0 0
  %93 = vmatprep.subr.bf16.mxu0 0
  %94 = vmatpush1.bf16.msra.mxu0 0
  %95 = vmatprep.subr.bf16.mxu0 0
  %96 = vmatpush1.bf16.msra.mxu0 0
  %97 = vmatprep.subr.bf16.mxu0 0
  %98 = vmatpush1.bf16.msra.mxu0 0
  %99 = vmatprep.subr.bf16.mxu0 0
  %100 = vmatpush1.bf16.msra.mxu0 0
  %101 = vmatprep.subr.bf16.mxu0 0
  %102 = vmatpush1.bf16.msra.mxu0 0
  %103 = vmatprep.subr.bf16.mxu0 0
  %104 = vmatpush1.bf16.msra.mxu0 0
  %105 = vmatprep.subr.bf16.mxu0 0
  %106 = vmatpush1.bf16.msra.mxu0 0
  %107 = vmatprep.subr.bf16.mxu0 0
  %108 = vmatpush1.bf16.msra.mxu0 0
  %109 = vmatprep.subr.bf16.mxu0 0
  %110 = vmatpush1.bf16.msra.mxu0 0
  %111 = vmatprep.subr.bf16.mxu0 0
  %112 = vmatpush1.bf16.msra.mxu0 0
  %113 = vmatprep.mubr.bf16.mxu0 0
  %114 = vmatmul.mubr.bf16.gmra.mrb[0].mxu0 %v73
  %v115 = vpop.f32.mrb[0].mxu0
  %v116 = vadd.f32 0.0, %v115
  %v117 = vpop.f32.mrb[0].mxu0
  %v118 = vpop.f32.mrb[0].mxu0
  %v119 = vadd.f32 0.0, %v118
  %v120 = vpop.f32.mrb[0].mxu0
  %121 = vmatprep.mubr.bf16.mxu0 0
  %122 = vmatmul.mubr.bf16.gmra.mrb[0].mxu0 %v76
  %v123 = vpop.f32.mrb[0].mxu0
  %v124 = vadd.f32 0.0, %v123
  %v125 = vpop.f32.mrb[0].mxu0
  %v126 = vpop.f32.mrb[0].mxu0
  %v127 = vadd.f32 0.0, %v126
  %v128 = vpop.f32.mrb[0].mxu0
  %129 = vmatprep.mubr.bf16.mxu0 0
  %130 = vmatmul.mubr.bf16.gmra.mrb[0].mxu0 %v79
  %v131 = vpop.f32.mrb[0].mxu0
  %v132 = vadd.f32 0.0, %v131
  %v133 = vpop.f32.mrb[0].mxu0
  %v134 = vpop.f32.mrb[0].mxu0
  %v135 = vpop.f32.mrb[0].mxu0
  %136 = vdwg.mxu0
  %v137 = vadd.f32 %v26, %v116
  %v138 = vadd.f32 %v27, %v119
  %v139 = vadd.f32 %v28, %v124
  %v140 = vadd.f32 %v29, %v127
  %v141 = vadd.f32 %v30, %v132
  %vm142 = vcmask 261120
  %143 = vst.msk [vmem:[#allocation2] sm:$0xff] %vm142, %v137
  %144 = vst.msk [vmem:[#allocation2 + $0x8] sm:$0xff] %vm142, %v138
  %145 = vst.msk [vmem:[#allocation2 + $0x10] sm:$0xff] %vm142, %v139
  %146 = vst.msk [vmem:[#allocation2 + $0x18] sm:$0xff] %vm142, %v140
  %vm147 = vcmask 254976
  %148 = vst.msk [vmem:[#allocation2 + $0x20] sm:$0x3] %vm147, %v141
  // Predicated region
  $region18: #{cpvt_gap_forward.20} parent=0 // pred_check
    %p149 = pneg %p15
  $region19: #{cpvt_gap_forward.20} parent=0 // pred_check_branch
    %151 = sbr.rel (%p149) target = $region21
  $region20: #{cpvt_gap_forward.20} parent=0 // pred_region
    %v152 = vld [vmem:[#allocation2] sm:$0xff]
    %v153 = vld [vmem:[#allocation2 + $0x8] sm:$0xff]
    %v154 = vld [vmem:[#allocation2 + $0x10] sm:$0xff]
    %v155 = vld [vmem:[#allocation2 + $0x18] sm:$0xff]
    %v156 = vld [vmem:[#allocation2 + $0x20] sm:$0x3]
    %v157 = vld [vmem:[%s2] sm:$0x1]
    %v159 = vlaneseq
    %v160 = vshrl.u32 %v159, 7
    %v161 = vsub.s32 0, %v160
    %v162 = vrot.slane %v157, %v161
    %v164 = vadd.f32 %v152, %v162
    %v165 = vadd.f32 %v153, %v162
    %v166 = vadd.f32 %v154, %v162
    %v167 = vadd.f32 %v155, %v162
    %v168 = vadd.f32 %v156, %v162
    %169 = vst.msk [vmem:[%s3] sm:$0xff] %vm142, %v164
    %170 = vst.msk [vmem:[%s3 + $0x8] sm:$0xff] %vm142, %v165
    %171 = vst.msk [vmem:[%s3 + $0x10] sm:$0xff] %vm142, %v166
    %172 = vst.msk [vmem:[%s3 + $0x18] sm:$0xff] %vm142, %v167
    %173 = vst.msk [vmem:[%s3 + $0x20] sm:$0x3] %vm147, %v168
  $region21: #{cpvt_gap_forward.20} parent=0 // pred_fallthru
    _
  // Predicated region
  $region22: #{cpvt_gap_forward.20} parent=0 // pred_check
    _
  $region23: #{cpvt_gap_forward.20} parent=0 // pred_check_branch
    %175 = sbr.rel (0) target = $region25
  $region24: #{cpvt_gap_forward.20} parent=0 // pred_region
    _
  $region25: #{cpvt_gap_forward.20} parent=0 // pred_fallthru
    _
  // Predicated region
  $region26: #{cpvt_gap_forward.20} parent=0 // pred_check
    _
  $region27: #{cpvt_gap_forward.20} parent=0 // pred_check_branch
    %177 = sbr.rel (0) target = $region29
  $region28: #{cpvt_gap_forward.20} parent=0 // pred_region
    _
  $region29: #{cpvt_gap_forward.20} parent=0 // pred_fallthru
    _

// kernel: cpvt_gap_forward.17
$region0: #{cpvt_gap_forward.17}
  #allocation0 [shape = 'u32[]', space=smem, size = 0x4, offset = 0x4, fixed_abs, tag = 'smem constant byte address 0x4 - core index']
  #allocation1 [shape = 'u32[144,128]{1,0:T(1,128)}', space=vmem, size = 0x12000, scoped, tag = 'internal scratch']
  #allocation2 [shape = 'f32[8,17,1]{2,1,0:T(8,128)}', space=vmem, size = 0x18000, scoped, tag = 'scratch operand']
  #allocation3 [shape = 'f32[8,17,1]{2,1,0:T(8,128)}', space=vmem, size = 0x18000, scoped, tag = 'scratch operand']
  #allocation4 [shape = 'f32[8,17,8]{2,1,0:T(8,128)}', space=vmem, size = 0x18000, scoped, tag = 'scratch operand']
  %s0 = inlined_call_operand.vmem [shape: bf16[8,17,8], index: 0, kind: input, shape index: {}]
  %s1 = inlined_call_operand.vmem [shape: bf16[8,17,8], index: 1, kind: input, shape index: {}]
  %s2 = inlined_call_operand.vmem [shape: bf16[8,17,8], index: 2, kind: input, shape index: {}]
  %s3 = inlined_call_operand.vmem [shape: f32[8,17,8], index: 3, kind: output, shape index: {}]
  %s4 = sld [smem:[#allocation0]]
  $region30: #{cpvt_gap_forward.17} parent=0
    _
  %s6 = ssub.s32 1, %s4
  %s7 = scalar_select 0, %s6, %s4
  // Predicated region
  $region2: #{cpvt_gap_forward.17} parent=0 // pred_check
    _
  $region3: #{cpvt_gap_forward.17} parent=0 // pred_check_branch
    %9 = sbr.rel (0) target = $region5
  $region4: #{cpvt_gap_forward.17} parent=0 // pred_region
    _
  $region5: #{cpvt_gap_forward.17} parent=0 // pred_fallthru
    _
  // Predicated region
  $region6: #{cpvt_gap_forward.17} parent=0 // pred_check
    _
  $region7: #{cpvt_gap_forward.17} parent=0 // pred_check_branch
    %11 = sbr.rel (0) target = $region9
  $region8: #{cpvt_gap_forward.17} parent=0 // pred_region
    _
  $region9: #{cpvt_gap_forward.17} parent=0 // pred_fallthru
    _
  // Predicated region
  $region10: #{cpvt_gap_forward.17} parent=0 // pred_check
    _
  $region11: #{cpvt_gap_forward.17} parent=0 // pred_check_branch
    %13 = sbr.rel (0) target = $region13
  $region12: #{cpvt_gap_forward.17} parent=0 // pred_region
    _
  $region13: #{cpvt_gap_forward.17} parent=0 // pred_fallthru
    _
  %p15 = scmp.eq.s32.totalorder 0, 0
  // Predicated region
  $region14: #{cpvt_gap_forward.17} parent=0 // pred_check
    %p16 = pneg %p15
  $region15: #{cpvt_gap_forward.17} parent=0 // pred_check_branch
    %18 = sbr.rel (%p16) target = $region17
  $region16: #{cpvt_gap_forward.17} parent=0 // pred_region
    %vm19 = vcmask 7168
    %20 = vst.msk [vmem:[#allocation2] sm:$0xff] %vm19, -inf
    %21 = vst.msk [vmem:[#allocation2 + $0x8] sm:$0xff] %vm19, -inf
    %vm22 = vcmask 0
    %23 = vst.msk [vmem:[#allocation2 + $0x10] sm:$0x1] %vm22, -inf
    %24 = vst.msk [vmem:[#allocation2 + $0x18] sm:$0xff] %vm19, -inf
    %25 = vst.msk [vmem:[#allocation2 + $0x20] sm:$0xff] %vm19, -inf
    %26 = vst.msk [vmem:[#allocation2 + $0x28] sm:$0x1] %vm22, -inf
    %27 = vst.msk [vmem:[#allocation2 + $0x30] sm:$0xff] %vm19, -inf
    %28 = vst.msk [vmem:[#allocation2 + $0x38] sm:$0xff] %vm19, -inf
    %29 = vst.msk [vmem:[#allocation2 + $0x40] sm:$0x1] %vm22, -inf
    %30 = vst.msk [vmem:[#allocation2 + $0x48] sm:$0xff] %vm19, -inf
    %31 = vst.msk [vmem:[#allocation2 + $0x50] sm:$0xff] %vm19, -inf
    %32 = vst.msk [vmem:[#allocation2 + $0x58] sm:$0x1] %vm22, -inf
    %33 = vst.msk [vmem:[#allocation2 + $0x60] sm:$0xff] %vm19, -inf
    %34 = vst.msk [vmem:[#allocation2 + $0x68] sm:$0xff] %vm19, -inf
    %35 = vst.msk [vmem:[#allocation2 + $0x70] sm:$0x1] %vm22, -inf
    %36 = vst.msk [vmem:[#allocation2 + $0x78] sm:$0xff] %vm19, -inf
    %37 = vst.msk [vmem:[#allocation2 + $0x80] sm:$0xff] %vm19, -inf
    %38 = vst.msk [vmem:[#allocation2 + $0x88] sm:$0x1] %vm22, -inf
    %39 = vst.msk [vmem:[#allocation2 + $0x90] sm:$0xff] %vm19, -inf
    %40 = vst.msk [vmem:[#allocation2 + $0x98] sm:$0xff] %vm19, -inf
    %41 = vst.msk [vmem:[#allocation2 + $0xa0] sm:$0x1] %vm22, -inf
    %42 = vst.msk [vmem:[#allocation2 + $0xa8] sm:$0xff] %vm19, -inf
    %43 = vst.msk [vmem:[#allocation2 + $0xb0] sm:$0xff] %vm19, -inf
    %44 = vst.msk [vmem:[#allocation2 + $0xb8] sm:$0x1] %vm22, -inf
    %45 = vst.msk [vmem:[#allocation3] sm:$0xff] %vm19, 0.0
    %46 = vst.msk [vmem:[#allocation3 + $0x8] sm:$0xff] %vm19, 0.0
    %47 = vst.msk [vmem:[#allocation3 + $0x10] sm:$0x1] %vm22, 0.0
    %48 = vst.msk [vmem:[#allocation3 + $0x18] sm:$0xff] %vm19, 0.0
    %49 = vst.msk [vmem:[#allocation3 + $0x20] sm:$0xff] %vm19, 0.0
    %50 = vst.msk [vmem:[#allocation3 + $0x28] sm:$0x1] %vm22, 0.0
    %51 = vst.msk [vmem:[#allocation3 + $0x30] sm:$0xff] %vm19, 0.0
    %52 = vst.msk [vmem:[#allocation3 + $0x38] sm:$0xff] %vm19, 0.0
    %53 = vst.msk [vmem:[#allocation3 + $0x40] sm:$0x1] %vm22, 0.0
    %54 = vst.msk [vmem:[#allocation3 + $0x48] sm:$0xff] %vm19, 0.0
    %55 = vst.msk [vmem:[#allocation3 + $0x50] sm:$0xff] %vm19, 0.0
    %56 = vst.msk [vmem:[#allocation3 + $0x58] sm:$0x1] %vm22, 0.0
    %57 = vst.msk [vmem:[#allocation3 + $0x60] sm:$0xff] %vm19, 0.0
    %58 = vst.msk [vmem:[#allocation3 + $0x68] sm:$0xff] %vm19, 0.0
    %59 = vst.msk [vmem:[#allocation3 + $0x70] sm:$0x1] %vm22, 0.0
    %60 = vst.msk [vmem:[#allocation3 + $0x78] sm:$0xff] %vm19, 0.0
    %61 = vst.msk [vmem:[#allocation3 + $0x80] sm:$0xff] %vm19, 0.0
    %62 = vst.msk [vmem:[#allocation3 + $0x88] sm:$0x1] %vm22, 0.0
    %63 = vst.msk [vmem:[#allocation3 + $0x90] sm:$0xff] %vm19, 0.0
    %64 = vst.msk [vmem:[#allocation3 + $0x98] sm:$0xff] %vm19, 0.0
    %65 = vst.msk [vmem:[#allocation3 + $0xa0] sm:$0x1] %vm22, 0.0
    %66 = vst.msk [vmem:[#allocation3 + $0xa8] sm:$0xff] %vm19, 0.0
    %67 = vst.msk [vmem:[#allocation3 + $0xb0] sm:$0xff] %vm19, 0.0
    %68 = vst.msk [vmem:[#allocation3 + $0xb8] sm:$0x1] %vm22, 0.0
    %vm69 = vcmask 64512
    %70 = vst.msk [vmem:[#allocation4] sm:$0xff] %vm69, 0.0
    %71 = vst.msk [vmem:[#allocation4 + $0x8] sm:$0xff] %vm69, 0.0
    %vm72 = vcmask 57344
    %73 = vst.msk [vmem:[#allocation4 + $0x10] sm:$0x1] %vm72, 0.0
    %74 = vst.msk [vmem:[#allocation4 + $0x18] sm:$0xff] %vm69, 0.0
    %75 = vst.msk [vmem:[#allocation4 + $0x20] sm:$0xff] %vm69, 0.0
    %76 = vst.msk [vmem:[#allocation4 + $0x28] sm:$0x1] %vm72, 0.0
    %77 = vst.msk [vmem:[#allocation4 + $0x30] sm:$0xff] %vm69, 0.0
    %78 = vst.msk [vmem:[#allocation4 + $0x38] sm:$0xff] %vm69, 0.0
    %79 = vst.msk [vmem:[#allocation4 + $0x40] sm:$0x1] %vm72, 0.0
    %80 = vst.msk [vmem:[#allocation4 + $0x48] sm:$0xff] %vm69, 0.0
    %81 = vst.msk [vmem:[#allocation4 + $0x50] sm:$0xff] %vm69, 0.0
    %82 = vst.msk [vmem:[#allocation4 + $0x58] sm:$0x1] %vm72, 0.0
    %83 = vst.msk [vmem:[#allocation4 + $0x60] sm:$0xff] %vm69, 0.0
    %84 = vst.msk [vmem:[#allocation4 + $0x68] sm:$0xff] %vm69, 0.0
    %85 = vst.msk [vmem:[#allocation4 + $0x70] sm:$0x1] %vm72, 0.0
    %86 = vst.msk [vmem:[#allocation4 + $0x78] sm:$0xff] %vm69, 0.0
    %87 = vst.msk [vmem:[#allocation4 + $0x80] sm:$0xff] %vm69, 0.0
    %88 = vst.msk [vmem:[#allocation4 + $0x88] sm:$0x1] %vm72, 0.0
    %89 = vst.msk [vmem:[#allocation4 + $0x90] sm:$0xff] %vm69, 0.0
    %90 = vst.msk [vmem:[#allocation4 + $0x98] sm:$0xff] %vm69, 0.0
    %91 = vst.msk [vmem:[#allocation4 + $0xa0] sm:$0x1] %vm72, 0.0
    %92 = vst.msk [vmem:[#allocation4 + $0xa8] sm:$0xff] %vm69, 0.0
    %93 = vst.msk [vmem:[#allocation4 + $0xb0] sm:$0xff] %vm69, 0.0
    %94 = vst.msk [vmem:[#allocation4 + $0xb8] sm:$0x1] %vm72, 0.0
  $region17: #{cpvt_gap_forward.17} parent=0 // pred_fallthru
    _
  %v95 = vld [vmem:[%s0] sm:$0xf]
  %v96 = vld [vmem:[%s0 + $0x4] sm:$0xf]
  %v97 = vld [vmem:[%s0 + $0x8] sm:$0x1]
  %v98 = vld [vmem:[%s0 + $0xc] sm:$0xf]
  %v99 = vld [vmem:[%s0 + $0x10] sm:$0xf]
  %v100 = vld [vmem:[%s0 + $0x14] sm:$0x1]
  %v101 = vld [vmem:[%s0 + $0x18] sm:$0xf]
  %v102 = vld [vmem:[%s0 + $0x1c] sm:$0xf]
  %v103 = vld [vmem:[%s0 + $0x20] sm:$0x1]
  %v104 = vld [vmem:[%s0 + $0x24] sm:$0xf]
  %v105 = vld [vmem:[%s0 + $0x28] sm:$0xf]
  %v106 = vld [vmem:[%s0 + $0x2c] sm:$0x1]
  %v107 = vld [vmem:[%s0 + $0x30] sm:$0xf]
  %v108 = vld [vmem:[%s0 + $0x34] sm:$0xf]
  %v109 = vld [vmem:[%s0 + $0x38] sm:$0x1]
  %v110 = vld [vmem:[%s0 + $0x3c] sm:$0xf]
  %v111 = vld [vmem:[%s0 + $0x40] sm:$0xf]
  %v112 = vld [vmem:[%s0 + $0x44] sm:$0x1]
  %v113 = vld [vmem:[%s0 + $0x48] sm:$0xf]
  %v114 = vld [vmem:[%s0 + $0x4c] sm:$0xf]
  %v115 = vld [vmem:[%s0 + $0x50] sm:$0x1]
  %v116 = vld [vmem:[%s0 + $0x54] sm:$0xf]
  %v117 = vld [vmem:[%s0 + $0x58] sm:$0xf]
  %v118 = vld [vmem:[%s0 + $0x5c] sm:$0x1]
  %v119 = vld [vmem:[%s1] sm:$0xf]
  %v120 = vld [vmem:[%s1 + $0x4] sm:$0xf]
  %v121 = vld [vmem:[%s1 + $0x8] sm:$0x1]
  %v122 = vld [vmem:[%s1 + $0xc] sm:$0xf]
  %v123 = vld [vmem:[%s1 + $0x10] sm:$0xf]
  %v124 = vld [vmem:[%s1 + $0x14] sm:$0x1]
  %v125 = vld [vmem:[%s1 + $0x18] sm:$0xf]
  %v126 = vld [vmem:[%s1 + $0x1c] sm:$0xf]
  %v127 = vld [vmem:[%s1 + $0x20] sm:$0x1]
  %v128 = vld [vmem:[%s1 + $0x24] sm:$0xf]
  %v129 = vld [vmem:[%s1 + $0x28] sm:$0xf]
  %v130 = vld [vmem:[%s1 + $0x2c] sm:$0x1]
  %v131 = vld [vmem:[%s1 + $0x30] sm:$0xf]
  %v132 = vld [vmem:[%s1 + $0x34] sm:$0xf]
  %v133 = vld [vmem:[%s1 + $0x38] sm:$0x1]
  %v134 = vld [vmem:[%s1 + $0x3c] sm:$0xf]
  %v135 = vld [vmem:[%s1 + $0x40] sm:$0xf]
  %v136 = vld [vmem:[%s1 + $0x44] sm:$0x1]
  %v137 = vld [vmem:[%s1 + $0x48] sm:$0xf]
  %v138 = vld [vmem:[%s1 + $0x4c] sm:$0xf]
  %v139 = vld [vmem:[%s1 + $0x50] sm:$0x1]
  %v140 = vld [vmem:[%s1 + $0x54] sm:$0xf]
  %v141 = vld [vmem:[%s1 + $0x58] sm:$0xf]
  %v142 = vld [vmem:[%s1 + $0x5c] sm:$0x1]
  %v143 = vld [vmem:[%s2] sm:$0xf]
  %v144 = vld [vmem:[%s2 + $0x4] sm:$0xf]
  %v145 = vld [vmem:[%s2 + $0x8] sm:$0x1]
  %v146 = vld [vmem:[%s2 + $0xc] sm:$0xf]
  %v147 = vld [vmem:[%s2 + $0x10] sm:$0xf]
  %v148 = vld [vmem:[%s2 + $0x14] sm:$0x1]
  %v149 = vld [vmem:[%s2 + $0x18] sm:$0xf]
  %v150 = vld [vmem:[%s2 + $0x1c] sm:$0xf]
  %v151 = vld [vmem:[%s2 + $0x20] sm:$0x1]
  %v152 = vld [vmem:[%s2 + $0x24] sm:$0xf]
  %v153 = vld [vmem:[%s2 + $0x28] sm:$0xf]
  %v154 = vld [vmem:[%s2 + $0x2c] sm:$0x1]
  %v155 = vld [vmem:[%s2 + $0x30] sm:$0xf]
  %v156 = vld [vmem:[%s2 + $0x34] sm:$0xf]
  %v157 = vld [vmem:[%s2 + $0x38] sm:$0x1]
  %v158 = vld [vmem:[%s2 + $0x3c] sm:$0xf]
  %v159 = vld [vmem:[%s2 + $0x40] sm:$0xf]
  %v160 = vld [vmem:[%s2 + $0x44] sm:$0x1]
  %v161 = vld [vmem:[%s2 + $0x48] sm:$0xf]
  %v162 = vld [vmem:[%s2 + $0x4c] sm:$0xf]
  %v163 = vld [vmem:[%s2 + $0x50] sm:$0x1]
  %v164 = vld [vmem:[%s2 + $0x54] sm:$0xf]
  %v165 = vld [vmem:[%s2 + $0x58] sm:$0xf]
  %v166 = vld [vmem:[%s2 + $0x5c] sm:$0x1]
  %v170 = vunpack.c.l.b16 %v95
  %v171 = vunpack.c.l.b16 %v96
  %v172 = vunpack.c.l.b16 %v97
  %v173 = vpack.c.b16 %v171, %v170
  %v174 = vpack.c.b16 %v172, %v172
  %v178 = vunpack.c.l.b16 %v119
  %v179 = vunpack.c.l.b16 %v120
  %v180 = vunpack.c.l.b16 %v121
  %v181 = vpack.c.b16 %v179, %v178
  %v182 = vpack.c.b16 %v180, %v180
  %vm183 = vcmask 64512
  %v185 = vsel %vm183, %v173, 0
  %v188 = vsel %vm183, %v174, 0
  %v191 = vsel %vm183, %v181, 0
  %v194 = vsel %vm183, %v182, 0
  %196 = vmatprep.subr.bf16.mxu0 0
  %197 = vmatpush1.bf16.xpose.msra.mxu0 %v191
  %198 = vmatprep.subr.bf16.mxu0 0
  %199 = vmatpush1.bf16.xpose.msra.mxu0 %v194
  %200 = vmatprep.subr.bf16.mxu0 0
  %201 = vmatpush1.bf16.xpose.msra.mxu0 0
  %202 = vmatprep.subr.bf16.mxu0 0
  %203 = vmatpush1.bf16.xpose.msra.mxu0 0
  %204 = vmatprep.subr.bf16.mxu0 0
  %205 = vmatpush1.bf16.xpose.msra.mxu0 0
  %206 = vmatprep.subr.bf16.mxu0 0
  %207 = vmatpush1.bf16.xpose.msra.mxu0 0
  %208 = vmatprep.subr.bf16.mxu0 0
  %209 = vmatpush1.bf16.xpose.msra.mxu0 0
  %210 = vmatprep.subr.bf16.mxu0 0
  %211 = vmatpush1.bf16.xpose.msra.mxu0 0
  %212 = vmatprep.subr.bf16.mxu0 0
  %213 = vmatpush1.bf16.xpose.msra.mxu0 0
  %214 = vmatprep.subr.bf16.mxu0 0
  %215 = vmatpush1.bf16.xpose.msra.mxu0 0
  %216 = vmatprep.subr.bf16.mxu0 0
  %217 = vmatpush1.bf16.xpose.msra.mxu0 0
  %218 = vmatprep.subr.bf16.mxu0 0
  %219 = vmatpush1.bf16.xpose.msra.mxu0 0
  %220 = vmatprep.subr.bf16.mxu0 0
  %221 = vmatpush1.bf16.xpose.msra.mxu0 0
  %222 = vmatprep.subr.bf16.mxu0 0
  %223 = vmatpush1.bf16.xpose.msra.mxu0 0
  %224 = vmatprep.subr.bf16.mxu0 0
  %225 = vmatpush1.bf16.xpose.msra.mxu0 0
  %226 = vmatprep.subr.bf16.mxu0 0
  %227 = vmatpush1.bf16.xpose.msra.mxu0 0
  %228 = vmatprep.mubr.bf16.mxu0 0
  %229 = vmatmul.mubr.bf16.gmra.mrb[0].mxu0 %v185
  %v230 = vpop.f32.mrb[0].mxu0
  %v231 = vadd.f32 0.0, %v230
  %v232 = vpop.f32.mrb[0].mxu0
  %v233 = vpop.f32.mrb[0].mxu0
  %v234 = vadd.f32 0.0, %v233
  %v235 = vpop.f32.mrb[0].mxu0
  %236 = vmatprep.mubr.bf16.mxu0 0
  %237 = vmatmul.mubr.bf16.gmra.mrb[0].mxu0 %v188
  %v238 = vpop.f32.mrb[0].mxu0
  %v239 = vadd.f32 0.0, %v238
  %v240 = vpop.f32.mrb[0].mxu0
  %v241 = vpop.f32.mrb[0].mxu0
  %v242 = vpop.f32.mrb[0].mxu0
  %243 = vdwg.mxu0
  %v247 = vunpack.c.l.b16 %v98
  %v248 = vunpack.c.l.b16 %v99
  %v249 = vunpack.c.l.b16 %v100
  %v250 = vpack.c.b16 %v248, %v247
  %v251 = vpack.c.b16 %v249, %v249
  %v255 = vunpack.c.l.b16 %v122
  %v256 = vunpack.c.l.b16 %v123
  %v257 = vunpack.c.l.b16 %v124
  %v258 = vpack.c.b16 %v256, %v255
  %v259 = vpack.c.b16 %v257, %v257
  %v261 = vsel %vm183, %v250, 0
  %v264 = vsel %vm183, %v251, 0
  %v267 = vsel %vm183, %v258, 0
  %v270 = vsel %vm183, %v259, 0
  %272 = vmatprep.subr.bf16.mxu0 0
  %273 = vmatpush1.bf16.xpose.msra.mxu0 %v267
  %274 = vmatprep.subr.bf16.mxu0 0
  %275 = vmatpush1.bf16.xpose.msra.mxu0 %v270
  %276 = vmatprep.subr.bf16.mxu0 0
  %277 = vmatpush1.bf16.xpose.msra.mxu0 0
  %278 = vmatprep.subr.bf16.mxu0 0
  %279 = vmatpush1.bf16.xpose.msra.mxu0 0
  %280 = vmatprep.subr.bf16.mxu0 0
  %281 = vmatpush1.bf16.xpose.msra.mxu0 0
  %282 = vmatprep.subr.bf16.mxu0 0
  %283 = vmatpush1.bf16.xpose.msra.mxu0 0
  %284 = vmatprep.subr.bf16.mxu0 0
  %285 = vmatpush1.bf16.xpose.msra.mxu0 0
  %286 = vmatprep.subr.bf16.mxu0 0
  %287 = vmatpush1.bf16.xpose.msra.mxu0 0
  %288 = vmatprep.subr.bf16.mxu0 0
  %289 = vmatpush1.bf16.xpose.msra.mxu0 0
  %290 = vmatprep.subr.bf16.mxu0 0
  %291 = vmatpush1.bf16.xpose.msra.mxu0 0
  %292 = vmatprep.subr.bf16.mxu0 0
  %293 = vmatpush1.bf16.xpose.msra.mxu0 0
  %294 = vmatprep.subr.bf16.mxu0 0
  %295 = vmatpush1.bf16.xpose.msra.mxu0 0
  %296 = vmatprep.subr.bf16.mxu0 0
  %297 = vmatpush1.bf16.xpose.msra.mxu0 0
  %298 = vmatprep.subr.bf16.mxu0 0
  %299 = vmatpush1.bf16.xpose.msra.mxu0 0
  %300 = vmatprep.subr.bf16.mxu0 0
  %301 = vmatpush1.bf16.xpose.msra.mxu0 0
  %302 = vmatprep.subr.bf16.mxu0 0
  %303 = vmatpush1.bf16.xpose.msra.mxu0 0
  %304 = vmatprep.mubr.bf16.mxu0 0
  %305 = vmatmul.mubr.bf16.gmra.mrb[0].mxu0 %v261
  %v306 = vpop.f32.mrb[0].mxu0
  %v307 = vadd.f32 0.0, %v306
  %v308 = vpop.f32.mrb[0].mxu0
  %v309 = vpop.f32.mrb[0].mxu0
  %v310 = vadd.f32 0.0, %v309
  %v311 = vpop.f32.mrb[0].mxu0
  %312 = vmatprep.mubr.bf16.mxu0 0
  %313 = vmatmul.mubr.bf16.gmra.mrb[0].mxu0 %v264
  %v314 = vpop.f32.mrb[0].mxu0
  %v315 = vadd.f32 0.0, %v314
  %v316 = vpop.f32.mrb[0].mxu0
  %v317 = vpop.f32.mrb[0].mxu0
  %v318 = vpop.f32.mrb[0].mxu0
  %319 = vdwg.mxu0
  %v323 = vunpack.c.l.b16 %v101
  %v324 = vunpack.c.l.b16 %v102
  %v325 = vunpack.c.l.b16 %v103
  %v326 = vpack.c.b16 %v324, %v323
  %v327 = vpack.c.b16 %v325, %v325
  %v331 = vunpack.c.l.b16 %v125
  %v332 = vunpack.c.l.b16 %v126
  %v333 = vunpack.c.l.b16 %v127
  %v334 = vpack.c.b16 %v332, %v331
  %v335 = vpack.c.b16 %v333, %v333
  %v337 = vsel %vm183, %v326, 0
  %v340 = vsel %vm183, %v327, 0
  %v343 = vsel %vm183, %v334, 0
  %v346 = vsel %vm183, %v335, 0
  %348 = vmatprep.subr.bf16.mxu0 0
  %349 = vmatpush1.bf16.xpose.msra.mxu0 %v343
  %350 = vmatprep.subr.bf16.mxu0 0
  %351 = vmatpush1.bf16.xpose.msra.mxu0 %v346
  %352 = vmatprep.subr.bf16.mxu0 0
  %353 = vmatpush1.bf16.xpose.msra.mxu0 0
  %354 = vmatprep.subr.bf16.mxu0 0
  %355 = vmatpush1.bf16.xpose.msra.mxu0 0
  %356 = vmatprep.subr.bf16.mxu0 0
  %357 = vmatpush1.bf16.xpose.msra.mxu0 0
  %358 = vmatprep.subr.bf16.mxu0 0
  %359 = vmatpush1.bf16.xpose.msra.mxu0 0
  %360 = vmatprep.subr.bf16.mxu0 0
  %361 = vmatpush1.bf16.xpose.msra.mxu0 0
  %362 = vmatprep.subr.bf16.mxu0 0
  %363 = vmatpush1.bf16.xpose.msra.mxu0 0
  %364 = vmatprep.subr.bf16.mxu0 0
  %365 = vmatpush1.bf16.xpose.msra.mxu0 0
  %366 = vmatprep.subr.bf16.mxu0 0
  %367 = vmatpush1.bf16.xpose.msra.mxu0 0
  %368 = vmatprep.subr.bf16.mxu0 0
  %369 = vmatpush1.bf16.xpose.msra.mxu0 0
  %370 = vmatprep.subr.bf16.mxu0 0
  %371 = vmatpush1.bf16.xpose.msra.mxu0 0
  %372 = vmatprep.subr.bf16.mxu0 0
  %373 = vmatpush1.bf16.xpose.msra.mxu0 0
  %374 = vmatprep.subr.bf16.mxu0 0
  %375 = vmatpush1.bf16.xpose.msra.mxu0 0
  %376 = vmatprep.subr.bf16.mxu0 0
  %377 = vmatpush1.bf16.xpose.msra.mxu0 0
  %378 = vmatprep.subr.bf16.mxu0 0
  %379 = vmatpush1.bf16.xpose.msra.mxu0 0
  %380 = vmatprep.mubr.bf16.mxu0 0
  %381 = vmatmul.mubr.bf16.gmra.mrb[0].mxu0 %v337
  %v382 = vpop.f32.mrb[0].mxu0
  %v383 = vadd.f32 0.0, %v382
  %v384 = vpop.f32.mrb[0].mxu0
  %v385 = vpop.f32.mrb[0].mxu0
  %v386 = vadd.f32 0.0, %v385
  %v387 = vpop.f32.mrb[0].mxu0
  %388 = vmatprep.mubr.bf16.mxu0 0
  %389 = vmatmul.mubr.bf16.gmra.mrb[0].mxu0 %v340
  %v390 = vpop.f32.mrb[0].mxu0
  %v391 = vadd.f32 0.0, %v390
  %v392 = vpop.f32.mrb[0].mxu0
  %v393 = vpop.f32.mrb[0].mxu0
  %v394 = vpop.f32.mrb[0].mxu0
  %395 = vdwg.mxu0
  %v399 = vunpack.c.l.b16 %v104
  %v400 = vunpack.c.l.b16 %v105
  %v401 = vunpack.c.l.b16 %v106
  %v402 = vpack.c.b16 %v400, %v399
  %v403 = vpack.c.b16 %v401, %v401
  %v407 = vunpack.c.l.b16 %v128
  %v408 = vunpack.c.l.b16 %v129
  %v409 = vunpack.c.l.b16 %v130
  %v410 = vpack.c.b16 %v408, %v407
  %v411 = vpack.c.b16 %v409, %v409
  %v413 = vsel %vm183, %v402, 0
  %v416 = vsel %vm183, %v403, 0
  %v419 = vsel %vm183, %v410, 0
  %v422 = vsel %vm183, %v411, 0
  %424 = vmatprep.subr.bf16.mxu0 0
  %425 = vmatpush1.bf16.xpose.msra.mxu0 %v419
  %426 = vmatprep.subr.bf16.mxu0 0
  %427 = vmatpush1.bf16.xpose.msra.mxu0 %v422
  %428 = vmatprep.subr.bf16.mxu0 0
  %429 = vmatpush1.bf16.xpose.msra.mxu0 0
  %430 = vmatprep.subr.bf16.mxu0 0
  %431 = vmatpush1.bf16.xpose.msra.mxu0 0
  %432 = vmatprep.subr.bf16.mxu0 0
  %433 = vmatpush1.bf16.xpose.msra.mxu0 0
  %434 = vmatprep.subr.bf16.mxu0 0
  %435 = vmatpush1.bf16.xpose.msra.mxu0 0
  %436 = vmatprep.subr.bf16.mxu0 0
  %437 = vmatpush1.bf16.xpose.msra.mxu0 0
  %438 = vmatprep.subr.bf16.mxu0 0
  %439 = vmatpush1.bf16.xpose.msra.mxu0 0
  %440 = vmatprep.subr.bf16.mxu0 0
  %441 = vmatpush1.bf16.xpose.msra.mxu0 0
  %442 = vmatprep.subr.bf16.mxu0 0
  %443 = vmatpush1.bf16.xpose.msra.mxu0 0
  %444 = vmatprep.subr.bf16.mxu0 0
  %445 = vmatpush1.bf16.xpose.msra.mxu0 0
  %446 = vmatprep.subr.bf16.mxu0 0
  %447 = vmatpush1.bf16.xpose.msra.mxu0 0
  %448 = vmatprep.subr.bf16.mxu0 0
  %449 = vmatpush1.bf16.xpose.msra.mxu0 0
  %450 = vmatprep.subr.bf16.mxu0 0
  %451 = vmatpush1.bf16.xpose.msra.mxu0 0
  %452 = vmatprep.subr.bf16.mxu0 0
  %453 = vmatpush1.bf16.xpose.msra.mxu0 0
  %454 = vmatprep.subr.bf16.mxu0 0
  %455 = vmatpush1.bf16.xpose.msra.mxu0 0
  %456 = vmatprep.mubr.bf16.mxu0 0
  %457 = vmatmul.mubr.bf16.gmra.mrb[0].mxu0 %v413
  %v458 = vpop.f32.mrb[0].mxu0
  %v459 = vadd.f32 0.0, %v458
  %v460 = vpop.f32.mrb[0].mxu0
  %v461 = vpop.f32.mrb[0].mxu0
  %v462 = vadd.f32 0.0, %v461
  %v463 = vpop.f32.mrb[0].mxu0
  %464 = vmatprep.mubr.bf16.mxu0 0
  %465 = vmatmul.mubr.bf16.gmra.mrb[0].mxu0 %v416
  %v466 = vpop.f32.mrb[0].mxu0
  %v467 = vadd.f32 0.0, %v466
  %v468 = vpop.f32.mrb[0].mxu0
  %v469 = vpop.f32.mrb[0].mxu0
  %v470 = vpop.f32.mrb[0].mxu0
  %471 = vdwg.mxu0
  %v475 = vunpack.c.l.b16 %v107
  %v476 = vunpack.c.l.b16 %v108
  %v477 = vunpack.c.l.b16 %v109
  %v478 = vpack.c.b16 %v476, %v475
  %v479 = vpack.c.b16 %v477, %v477
  %v483 = vunpack.c.l.b16 %v131
  %v484 = vunpack.c.l.b16 %v132
  %v485 = vunpack.c.l.b16 %v133
  %v486 = vpack.c.b16 %v484, %v483
  %v487 = vpack.c.b16 %v485, %v485
  %v489 = vsel %vm183, %v478, 0
  %v492 = vsel %vm183, %v479, 0
  %v495 = vsel %vm183, %v486, 0
  %v498 = vsel %vm183, %v487, 0
  %500 = vmatprep.subr.bf16.mxu0 0
  %501 = vmatpush1.bf16.xpose.msra.mxu0 %v495
  %502 = vmatprep.subr.bf16.mxu0 0
  %503 = vmatpush1.bf16.xpose.msra.mxu0 %v498
  %504 = vmatprep.subr.bf16.mxu0 0
  %505 = vmatpush1.bf16.xpose.msra.mxu0 0
  %506 = vmatprep.subr.bf16.mxu0 0
  %507 = vmatpush1.bf16.xpose.msra.mxu0 0
  %508 = vmatprep.subr.bf16.mxu0 0
  %509 = vmatpush1.bf16.xpose.msra.mxu0 0
  %510 = vmatprep.subr.bf16.mxu0 0
  %511 = vmatpush1.bf16.xpose.msra.mxu0 0
  %512 = vmatprep.subr.bf16.mxu0 0
  %513 = vmatpush1.bf16.xpose.msra.mxu0 0
  %514 = vmatprep.subr.bf16.mxu0 0
  %515 = vmatpush1.bf16.xpose.msra.mxu0 0
  %516 = vmatprep.subr.bf16.mxu0 0
  %517 = vmatpush1.bf16.xpose.msra.mxu0 0
  %518 = vmatprep.subr.bf16.mxu0 0
  %519 = vmatpush1.bf16.xpose.msra.mxu0 0
  %520 = vmatprep.subr.bf16.mxu0 0
  %521 = vmatpush1.bf16.xpose.msra.mxu0 0
  %522 = vmatprep.subr.bf16.mxu0 0
  %523 = vmatpush1.bf16.xpose.msra.mxu0 0
  %524 = vmatprep.subr.bf16.mxu0 0
  %525 = vmatpush1.bf16.xpose.msra.mxu0 0
  %526 = vmatprep.subr.bf16.mxu0 0
  %527 = vmatpush1.bf16.xpose.msra.mxu0 0
  %528 = vmatprep.subr.bf16.mxu0 0
  %529 = vmatpush1.bf16.xpose.msra.mxu0 0
  %530 = vmatprep.subr.bf16.mxu0 0
  %531 = vmatpush1.bf16.xpose.msra.mxu0 0
  %532 = vmatprep.mubr.bf16.mxu0 0
  %533 = vmatmul.mubr.bf16.gmra.mrb[0].mxu0 %v489
  %v534 = vpop.f32.mrb[0].mxu0
  %v535 = vadd.f32 0.0, %v534
  %v536 = vpop.f32.mrb[0].mxu0
  %v537 = vpop.f32.mrb[0].mxu0
  %v538 = vadd.f32 0.0, %v537
  %v539 = vpop.f32.mrb[0].mxu0
  %540 = vmatprep.mubr.bf16.mxu0 0
  %541 = vmatmul.mubr.bf16.gmra.mrb[0].mxu0 %v492
  %v542 = vpop.f32.mrb[0].mxu0
  %v543 = vadd.f32 0.0, %v542
  %v544 = vpop.f32.mrb[0].mxu0
  %v545 = vpop.f32.mrb[0].mxu0
  %v546 = vpop.f32.mrb[0].mxu0
  %547 = vdwg.mxu0
  %v551 = vunpack.c.l.b16 %v110
  %v552 = vunpack.c.l.b16 %v111
  %v553 = vunpack.c.l.b16 %v112
  %v554 = vpack.c.b16 %v552, %v551
  %v555 = vpack.c.b16 %v553, %v553
  %v559 = vunpack.c.l.b16 %v134
  %v560 = vunpack.c.l.b16 %v135
  %v561 = vunpack.c.l.b16 %v136
  %v562 = vpack.c.b16 %v560, %v559
  %v563 = vpack.c.b16 %v561, %v561
  %v565 = vsel %vm183, %v554, 0
  %v568 = vsel %vm183, %v555, 0
  %v571 = vsel %vm183, %v562, 0
  %v574 = vsel %vm183, %v563, 0
  %576 = vmatprep.subr.bf16.mxu0 0
  %577 = vmatpush1.bf16.xpose.msra.mxu0 %v571
  %578 = vmatprep.subr.bf16.mxu0 0
  %579 = vmatpush1.bf16.xpose.msra.mxu0 %v574
  %580 = vmatprep.subr.bf16.mxu0 0
  %581 = vmatpush1.bf16.xpose.msra.mxu0 0
  %582 = vmatprep.subr.bf16.mxu0 0
  %583 = vmatpush1.bf16.xpose.msra.mxu0 0
  %584 = vmatprep.subr.bf16.mxu0 0
  %585 = vmatpush1.bf16.xpose.msra.mxu0 0
  %586 = vmatprep.subr.bf16.mxu0 0
  %587 = vmatpush1.bf16.xpose.msra.mxu0 0
  %588 = vmatprep.subr.bf16.mxu0 0
  %589 = vmatpush1.bf16.xpose.msra.mxu0 0
  %590 = vmatprep.subr.bf16.mxu0 0
  %591 = vmatpush1.bf16.xpose.msra.mxu0 0
  %592 = vmatprep.subr.bf16.mxu0 0
  %593 = vmatpush1.bf16.xpose.msra.mxu0 0
  %594 = vmatprep.subr.bf16.mxu0 0
  %595 = vmatpush1.bf16.xpose.msra.mxu0 0
  %596 = vmatprep.subr.bf16.mxu0 0
  %597 = vmatpush1.bf16.xpose.msra.mxu0 0
  %598 = vmatprep.subr.bf16.mxu0 0
  %599 = vmatpush1.bf16.xpose.msra.mxu0 0
  %600 = vmatprep.subr.bf16.mxu0 0
  %601 = vmatpush1.bf16.xpose.msra.mxu0 0
  %602 = vmatprep.subr.bf16.mxu0 0
  %603 = vmatpush1.bf16.xpose.msra.mxu0 0
  %604 = vmatprep.subr.bf16.mxu0 0
  %605 = vmatpush1.bf16.xpose.msra.mxu0 0
  %606 = vmatprep.subr.bf16.mxu0 0
  %607 = vmatpush1.bf16.xpose.msra.mxu0 0
  %608 = vmatprep.mubr.bf16.mxu0 0
  %609 = vmatmul.mubr.bf16.gmra.mrb[0].mxu0 %v565
  %v610 = vpop.f32.mrb[0].mxu0
  %v611 = vadd.f32 0.0, %v610
  %v612 = vpop.f32.mrb[0].mxu0
  %v613 = vpop.f32.mrb[0].mxu0
  %v614 = vadd.f32 0.0, %v613
  %v615 = vpop.f32.mrb[0].mxu0
  %616 = vmatprep.mubr.bf16.mxu0 0
  %617 = vmatmul.mubr.bf16.gmra.mrb[0].mxu0 %v568
  %v618 = vpop.f32.mrb[0].mxu0
  %v619 = vadd.f32 0.0, %v618
  %v620 = vpop.f32.mrb[0].mxu0
  %v621 = vpop.f32.mrb[0].mxu0
  %v622 = vpop.f32.mrb[0].mxu0
  %623 = vdwg.mxu0
  %v627 = vunpack.c.l.b16 %v113
  %v628 = vunpack.c.l.b16 %v114
  %v629 = vunpack.c.l.b16 %v115
  %v630 = vpack.c.b16 %v628, %v627
  %v631 = vpack.c.b16 %v629, %v629
  %v635 = vunpack.c.l.b16 %v137
  %v636 = vunpack.c.l.b16 %v138
  %v637 = vunpack.c.l.b16 %v139
  %v638 = vpack.c.b16 %v636, %v635
  %v639 = vpack.c.b16 %v637, %v637
  %v641 = vsel %vm183, %v630, 0
  %v644 = vsel %vm183, %v631, 0
  %v647 = vsel %vm183, %v638, 0
  %v650 = vsel %vm183, %v639, 0
  %652 = vmatprep.subr.bf16.mxu0 0
  %653 = vmatpush1.bf16.xpose.msra.mxu0 %v647
  %654 = vmatprep.subr.bf16.mxu0 0
  %655 = vmatpush1.bf16.xpose.msra.mxu0 %v650
  %656 = vmatprep.subr.bf16.mxu0 0
  %657 = vmatpush1.bf16.xpose.msra.mxu0 0
  %658 = vmatprep.subr.bf16.mxu0 0
  %659 = vmatpush1.bf16.xpose.msra.mxu0 0
  %660 = vmatprep.subr.bf16.mxu0 0
  %661 = vmatpush1.bf16.xpose.msra.mxu0 0
  %662 = vmatprep.subr.bf16.mxu0 0
  %663 = vmatpush1.bf16.xpose.msra.mxu0 0
  %664 = vmatprep.subr.bf16.mxu0 0
  %665 = vmatpush1.bf16.xpose.msra.mxu0 0
  %666 = vmatprep.subr.bf16.mxu0 0
  %667 = vmatpush1.bf16.xpose.msra.mxu0 0
  %668 = vmatprep.subr.bf16.mxu0 0
  %669 = vmatpush1.bf16.xpose.msra.mxu0 0
  %670 = vmatprep.subr.bf16.mxu0 0
  %671 = vmatpush1.bf16.xpose.msra.mxu0 0
  %672 = vmatprep.subr.bf16.mxu0 0
  %673 = vmatpush1.bf16.xpose.msra.mxu0 0
  %674 = vmatprep.subr.bf16.mxu0 0
  %675 = vmatpush1.bf16.xpose.msra.mxu0 0
  %676 = vmatprep.subr.bf16.mxu0 0
  %677 = vmatpush1.bf16.xpose.msra.mxu0 0
  %678 = vmatprep.subr.bf16.mxu0 0
  %679 = vmatpush1.bf16.xpose.msra.mxu0 0
  %680 = vmatprep.subr.bf16.mxu0 0
  %681 = vmatpush1.bf16.xpose.msra.mxu0 0
  %682 = vmatprep.subr.bf16.mxu0 0
  %683 = vmatpush1.bf16.xpose.msra.mxu0 0
  %684 = vmatprep.mubr.bf16.mxu0 0
  %685 = vmatmul.mubr.bf16.gmra.mrb[0].mxu0 %v641
  %v686 = vpop.f32.mrb[0].mxu0
  %v687 = vadd.f32 0.0, %v686
  %v688 = vpop.f32.mrb[0].mxu0
  %v689 = vpop.f32.mrb[0].mxu0
  %v690 = vadd.f32 0.0, %v689
  %v691 = vpop.f32.mrb[0].mxu0
  %692 = vmatprep.mubr.bf16.mxu0 0
  %693 = vmatmul.mubr.bf16.gmra.mrb[0].mxu0 %v644
  %v694 = vpop.f32.mrb[0].mxu0
  %v695 = vadd.f32 0.0, %v694
  %v696 = vpop.f32.mrb[0].mxu0
  %v697 = vpop.f32.mrb[0].mxu0
  %v698 = vpop.f32.mrb[0].mxu0
  %699 = vdwg.mxu0
  %v703 = vunpack.c.l.b16 %v116
  %v704 = vunpack.c.l.b16 %v117
  %v705 = vunpack.c.l.b16 %v118
  %v706 = vpack.c.b16 %v704, %v703
  %v707 = vpack.c.b16 %v705, %v705
  %v711 = vunpack.c.l.b16 %v140
  %v712 = vunpack.c.l.b16 %v141
  %v713 = vunpack.c.l.b16 %v142
  %v714 = vpack.c.b16 %v712, %v711
  %v715 = vpack.c.b16 %v713, %v713
  %v717 = vsel %vm183, %v706, 0
  %v720 = vsel %vm183, %v707, 0
  %v723 = vsel %vm183, %v714, 0
  %v726 = vsel %vm183, %v715, 0
  %728 = vmatprep.subr.bf16.mxu0 0
  %729 = vmatpush1.bf16.xpose.msra.mxu0 %v723
  %730 = vmatprep.subr.bf16.mxu0 0
  %731 = vmatpush1.bf16.xpose.msra.mxu0 %v726
  %732 = vmatprep.subr.bf16.mxu0 0
  %733 = vmatpush1.bf16.xpose.msra.mxu0 0
  %734 = vmatprep.subr.bf16.mxu0 0
  %735 = vmatpush1.bf16.xpose.msra.mxu0 0
  %736 = vmatprep.subr.bf16.mxu0 0
  %737 = vmatpush1.bf16.xpose.msra.mxu0 0
  %738 = vmatprep.subr.bf16.mxu0 0
  %739 = vmatpush1.bf16.xpose.msra.mxu0 0
  %740 = vmatprep.subr.bf16.mxu0 0
  %741 = vmatpush1.bf16.xpose.msra.mxu0 0
  %742 = vmatprep.subr.bf16.mxu0 0
  %743 = vmatpush1.bf16.xpose.msra.mxu0 0
  %744 = vmatprep.subr.bf16.mxu0 0
  %745 = vmatpush1.bf16.xpose.msra.mxu0 0
  %746 = vmatprep.subr.bf16.mxu0 0
  %747 = vmatpush1.bf16.xpose.msra.mxu0 0
  %748 = vmatprep.subr.bf16.mxu0 0
  %749 = vmatpush1.bf16.xpose.msra.mxu0 0
  %750 = vmatprep.subr.bf16.mxu0 0
  %751 = vmatpush1.bf16.xpose.msra.mxu0 0
  %752 = vmatprep.subr.bf16.mxu0 0
  %753 = vmatpush1.bf16.xpose.msra.mxu0 0
  %754 = vmatprep.subr.bf16.mxu0 0
  %755 = vmatpush1.bf16.xpose.msra.mxu0 0
  %756 = vmatprep.subr.bf16.mxu0 0
  %757 = vmatpush1.bf16.xpose.msra.mxu0 0
  %758 = vmatprep.subr.bf16.mxu0 0
  %759 = vmatpush1.bf16.xpose.msra.mxu0 0
  %760 = vmatprep.mubr.bf16.mxu0 0
  %761 = vmatmul.mubr.bf16.gmra.mrb[0].mxu0 %v717
  %v762 = vpop.f32.mrb[0].mxu0
  %v763 = vadd.f32 0.0, %v762
  %v764 = vpop.f32.mrb[0].mxu0
  %v765 = vpop.f32.mrb[0].mxu0
  %v766 = vadd.f32 0.0, %v765
  %v767 = vpop.f32.mrb[0].mxu0
  %768 = vmatprep.mubr.bf16.mxu0 0
  %769 = vmatmul.mubr.bf16.gmra.mrb[0].mxu0 %v720
  %v770 = vpop.f32.mrb[0].mxu0
  %v771 = vadd.f32 0.0, %v770
  %v772 = vpop.f32.mrb[0].mxu0
  %v773 = vpop.f32.mrb[0].mxu0
  %v774 = vpop.f32.mrb[0].mxu0
  %775 = vdwg.mxu0
  %v776 = vmul.f32 %v231, 0.35355338
  %v777 = vmul.f32 %v234, 0.35355338
  %v778 = vmul.f32 %v239, 0.35355338
  %v779 = vmul.f32 %v307, 0.35355338
  %v780 = vmul.f32 %v310, 0.35355338
  %v781 = vmul.f32 %v315, 0.35355338
  %v782 = vmul.f32 %v383, 0.35355338
  %v783 = vmul.f32 %v386, 0.35355338
  %v784 = vmul.f32 %v391, 0.35355338
  %v785 = vmul.f32 %v459, 0.35355338
  %v786 = vmul.f32 %v462, 0.35355338
  %v787 = vmul.f32 %v467, 0.35355338
  %v788 = vmul.f32 %v535, 0.35355338
  %v789 = vmul.f32 %v538, 0.35355338
  %v790 = vmul.f32 %v543, 0.35355338
  %v791 = vmul.f32 %v611, 0.35355338
  %v792 = vmul.f32 %v614, 0.35355338
  %v793 = vmul.f32 %v619, 0.35355338
  %v794 = vmul.f32 %v687, 0.35355338
  %v795 = vmul.f32 %v690, 0.35355338
  %v796 = vmul.f32 %v695, 0.35355338
  %v797 = vmul.f32 %v763, 0.35355338
  %v798 = vmul.f32 %v766, 0.35355338
  %v799 = vmul.f32 %v771, 0.35355338
  %v800 = vld [vmem:[#allocation2] sm:$0xff]
  %v801 = vld [vmem:[#allocation2 + $0x8] sm:$0xff]
  %v802 = vld [vmem:[#allocation2 + $0x10] sm:$0x1]
  %v803 = vld [vmem:[#allocation2 + $0x18] sm:$0xff]
  %v804 = vld [vmem:[#allocation2 + $0x20] sm:$0xff]
  %v805 = vld [vmem:[#allocation2 + $0x28] sm:$0x1]
  %v806 = vld [vmem:[#allocation2 + $0x30] sm:$0xff]
  %v807 = vld [vmem:[#allocation2 + $0x38] sm:$0xff]
  %v808 = vld [vmem:[#allocation2 + $0x40] sm:$0x1]
  %v809 = vld [vmem:[#allocation2 + $0x48] sm:$0xff]
  %v810 = vld [vmem:[#allocation2 + $0x50] sm:$0xff]
  %v811 = vld [vmem:[#allocation2 + $0x58] sm:$0x1]
  %v812 = vld [vmem:[#allocation2 + $0x60] sm:$0xff]
  %v813 = vld [vmem:[#allocation2 + $0x68] sm:$0xff]
  %v814 = vld [vmem:[#allocation2 + $0x70] sm:$0x1]
  %v815 = vld [vmem:[#allocation2 + $0x78] sm:$0xff]
  %v816 = vld [vmem:[#allocation2 + $0x80] sm:$0xff]
  %v817 = vld [vmem:[#allocation2 + $0x88] sm:$0x1]
  %v818 = vld [vmem:[#allocation2 + $0x90] sm:$0xff]
  %v819 = vld [vmem:[#allocation2 + $0x98] sm:$0xff]
  %v820 = vld [vmem:[#allocation2 + $0xa0] sm:$0x1]
  %v821 = vld [vmem:[#allocation2 + $0xa8] sm:$0xff]
  %v822 = vld [vmem:[#allocation2 + $0xb0] sm:$0xff]
  %v823 = vld [vmem:[#allocation2 + $0xb8] sm:$0x1]
  %vm824 = vcmask 138240
  %v825 = vsel %vm824, %v776, -inf
  %826 = vmax.xlane.f32.xlu0 %v825
  %v827 = vpop.xlane.xlu0 %826
  %v828 = vsel %vm824, %v777, -inf
  %829 = vmax.xlane.f32.xlu0 %v828
  %v830 = vpop.xlane.xlu0 %829
  %vm831 = vcmask 131072
  %v832 = vsel %vm831, %v778, -inf
  %833 = vmax.xlane.f32.xlu0 %v832
  %v834 = vpop.xlane.xlu0 %833
  %v835 = vsel %vm824, %v779, -inf
  %836 = vmax.xlane.f32.xlu0 %v835
  %v837 = vpop.xlane.xlu0 %836
  %v838 = vsel %vm824, %v780, -inf
  %839 = vmax.xlane.f32.xlu0 %v838
  %v840 = vpop.xlane.xlu0 %839
  %v841 = vsel %vm831, %v781, -inf
  %842 = vmax.xlane.f32.xlu0 %v841
  %v843 = vpop.xlane.xlu0 %842
  %v844 = vsel %vm824, %v782, -inf
  %845 = vmax.xlane.f32.xlu0 %v844
  %v846 = vpop.xlane.xlu0 %845
  %v847 = vsel %vm824, %v783, -inf
  %848 = vmax.xlane.f32.xlu0 %v847
  %v849 = vpop.xlane.xlu0 %848
  %v850 = vsel %vm831, %v784, -inf
  %851 = vmax.xlane.f32.xlu0 %v850
  %v852 = vpop.xlane.xlu0 %851
  %v853 = vsel %vm824, %v785, -inf
  %854 = vmax.xlane.f32.xlu0 %v853
  %v855 = vpop.xlane.xlu0 %854
  %v856 = vsel %vm824, %v786, -inf
  %857 = vmax.xlane.f32.xlu0 %v856
  %v858 = vpop.xlane.xlu0 %857
  %v859 = vsel %vm831, %v787, -inf
  %860 = vmax.xlane.f32.xlu0 %v859
  %v861 = vpop.xlane.xlu0 %860
  %v862 = vsel %vm824, %v788, -inf
  %863 = vmax.xlane.f32.xlu0 %v862
  %v864 = vpop.xlane.xlu0 %863
  %v865 = vsel %vm824, %v789, -inf
  %866 = vmax.xlane.f32.xlu0 %v865
  %v867 = vpop.xlane.xlu0 %866
  %v868 = vsel %vm831, %v790, -inf
  %869 = vmax.xlane.f32.xlu0 %v868
  %v870 = vpop.xlane.xlu0 %869
  %v871 = vsel %vm824, %v791, -inf
  %872 = vmax.xlane.f32.xlu0 %v871
  %v873 = vpop.xlane.xlu0 %872
  %v874 = vsel %vm824, %v792, -inf
  %875 = vmax.xlane.f32.xlu0 %v874
  %v876 = vpop.xlane.xlu0 %875
  %v877 = vsel %vm831, %v793, -inf
  %878 = vmax.xlane.f32.xlu0 %v877
  %v879 = vpop.xlane.xlu0 %878
  %v880 = vsel %vm824, %v794, -inf
  %881 = vmax.xlane.f32.xlu0 %v880
  %v882 = vpop.xlane.xlu0 %881
  %v883 = vsel %vm824, %v795, -inf
  %884 = vmax.xlane.f32.xlu0 %v883
  %v885 = vpop.xlane.xlu0 %884
  %v886 = vsel %vm831, %v796, -inf
  %887 = vmax.xlane.f32.xlu0 %v886
  %v888 = vpop.xlane.xlu0 %887
  %v889 = vsel %vm824, %v797, -inf
  %890 = vmax.xlane.f32.xlu0 %v889
  %v891 = vpop.xlane.xlu0 %890
  %v892 = vsel %vm824, %v798, -inf
  %893 = vmax.xlane.f32.xlu0 %v892
  %v894 = vpop.xlane.xlu0 %893
  %v895 = vsel %vm831, %v799, -inf
  %896 = vmax.xlane.f32.xlu0 %v895
  %v897 = vpop.xlane.xlu0 %896
  %v898 = vmax.f32 %v800, %v827
  %v899 = vmax.f32 %v801, %v830
  %v900 = vmax.f32 %v802, %v834
  %v901 = vmax.f32 %v803, %v837
  %v902 = vmax.f32 %v804, %v840
  %v903 = vmax.f32 %v805, %v843
  %v904 = vmax.f32 %v806, %v846
  %v905 = vmax.f32 %v807, %v849
  %v906 = vmax.f32 %v808, %v852
  %v907 = vmax.f32 %v809, %v855
  %v908 = vmax.f32 %v810, %v858
  %v909 = vmax.f32 %v811, %v861
  %v910 = vmax.f32 %v812, %v864
  %v911 = vmax.f32 %v813, %v867
  %v912 = vmax.f32 %v814, %v870
  %v913 = vmax.f32 %v815, %v873
  %v914 = vmax.f32 %v816, %v876
  %v915 = vmax.f32 %v817, %v879
  %v916 = vmax.f32 %v818, %v882
  %v917 = vmax.f32 %v819, %v885
  %v918 = vmax.f32 %v820, %v888
  %v919 = vmax.f32 %v821, %v891
  %v920 = vmax.f32 %v822, %v894
  %v921 = vmax.f32 %v823, %v897
  %v922 = vsub.f32 %v800, %v898
  %v923 = vsub.f32 %v801, %v899
  %v924 = vsub.f32 %v802, %v900
  %v925 = vsub.f32 %v803, %v901
  %v926 = vsub.f32 %v804, %v902
  %v927 = vsub.f32 %v805, %v903
  %v928 = vsub.f32 %v806, %v904
  %v929 = vsub.f32 %v807, %v905
  %v930 = vsub.f32 %v808, %v906
  %v931 = vsub.f32 %v809, %v907
  %v932 = vsub.f32 %v810, %v908
  %v933 = vsub.f32 %v811, %v909
  %v934 = vsub.f32 %v812, %v910
  %v935 = vsub.f32 %v813, %v911
  %v936 = vsub.f32 %v814, %v912
  %v937 = vsub.f32 %v815, %v913
  %v938 = vsub.f32 %v816, %v914
  %v939 = vsub.f32 %v817, %v915
  %v940 = vsub.f32 %v818, %v916
  %v941 = vsub.f32 %v819, %v917
  %v942 = vsub.f32 %v820, %v918
  %v943 = vsub.f32 %v821, %v919
  %v944 = vsub.f32 %v822, %v920
  %v945 = vsub.f32 %v823, %v921
  %v946 = vmul.f32 %v922, 1.442695
  %v947 = vpow.pop %v946
  %v948 = vmul.f32 %v923, 1.442695
  %v949 = vpow.pop %v948
  %v950 = vmul.f32 %v924, 1.442695
  %v951 = vpow.pop %v950
  %v952 = vmul.f32 %v925, 1.442695
  %v953 = vpow.pop %v952
  %v954 = vmul.f32 %v926, 1.442695
  %v955 = vpow.pop %v954
  %v956 = vmul.f32 %v927, 1.442695
  %v957 = vpow.pop %v956
  %v958 = vmul.f32 %v928, 1.442695
  %v959 = vpow.pop %v958
  %v960 = vmul.f32 %v929, 1.442695
  %v961 = vpow.pop %v960
  %v962 = vmul.f32 %v930, 1.442695
  %v963 = vpow.pop %v962
  %v964 = vmul.f32 %v931, 1.442695
  %v965 = vpow.pop %v964
  %v966 = vmul.f32 %v932, 1.442695
  %v967 = vpow.pop %v966
  %v968 = vmul.f32 %v933, 1.442695
  %v969 = vpow.pop %v968
  %v970 = vmul.f32 %v934, 1.442695
  %v971 = vpow.pop %v970
  %v972 = vmul.f32 %v935, 1.442695
  %v973 = vpow.pop %v972
  %v974 = vmul.f32 %v936, 1.442695
  %v975 = vpow.pop %v974
  %v976 = vmul.f32 %v937, 1.442695
  %v977 = vpow.pop %v976
  %v978 = vmul.f32 %v938, 1.442695
  %v979 = vpow.pop %v978
  %v980 = vmul.f32 %v939, 1.442695
  %v981 = vpow.pop %v980
  %v982 = vmul.f32 %v940, 1.442695
  %v983 = vpow.pop %v982
  %v984 = vmul.f32 %v941, 1.442695
  %v985 = vpow.pop %v984
  %v986 = vmul.f32 %v942, 1.442695
  %v987 = vpow.pop %v986
  %v988 = vmul.f32 %v943, 1.442695
  %v989 = vpow.pop %v988
  %v990 = vmul.f32 %v944, 1.442695
  %v991 = vpow.pop %v990
  %v992 = vmul.f32 %v945, 1.442695
  %v993 = vpow.pop %v992
  %995 = vset.pattern.permute.xlu0 0
  %996 = vperm.xlu0 %995, %v898
  %v997 = vpop.permute.xlu0 %996
  %1000 = vset.pattern.permute.xlu0 0
  %1001 = vperm.xlu0 %1000, %v899
  %v1002 = vpop.permute.xlu0 %1001
  %1005 = vset.pattern.permute.xlu0 0
  %1006 = vperm.xlu0 %1005, %v900
  %v1007 = vpop.permute.xlu0 %1006
  %1010 = vset.pattern.permute.xlu0 0
  %1011 = vperm.xlu0 %1010, %v901
  %v1012 = vpop.permute.xlu0 %1011
  %1015 = vset.pattern.permute.xlu0 0
  %1016 = vperm.xlu0 %1015, %v902
  %v1017 = vpop.permute.xlu0 %1016
  %1020 = vset.pattern.permute.xlu0 0
  %1021 = vperm.xlu0 %1020, %v903
  %v1022 = vpop.permute.xlu0 %1021
  %1025 = vset.pattern.permute.xlu0 0
  %1026 = vperm.xlu0 %1025, %v904
  %v1027 = vpop.permute.xlu0 %1026
  %1030 = vset.pattern.permute.xlu0 0
  %1031 = vperm.xlu0 %1030, %v905
  %v1032 = vpop.permute.xlu0 %1031
  %1035 = vset.pattern.permute.xlu0 0
  %1036 = vperm.xlu0 %1035, %v906
  %v1037 = vpop.permute.xlu0 %1036
  %1040 = vset.pattern.permute.xlu0 0
  %1041 = vperm.xlu0 %1040, %v907
  %v1042 = vpop.permute.xlu0 %1041
  %1045 = vset.pattern.permute.xlu0 0
  %1046 = vperm.xlu0 %1045, %v908
  %v1047 = vpop.permute.xlu0 %1046
  %1050 = vset.pattern.permute.xlu0 0
  %1051 = vperm.xlu0 %1050, %v909
  %v1052 = vpop.permute.xlu0 %1051
  %1055 = vset.pattern.permute.xlu0 0
  %1056 = vperm.xlu0 %1055, %v910
  %v1057 = vpop.permute.xlu0 %1056
  %1060 = vset.pattern.permute.xlu0 0
  %1061 = vperm.xlu0 %1060, %v911
  %v1062 = vpop.permute.xlu0 %1061
  %1065 = vset.pattern.permute.xlu0 0
  %1066 = vperm.xlu0 %1065, %v912
  %v1067 = vpop.permute.xlu0 %1066
  %1070 = vset.pattern.permute.xlu0 0
  %1071 = vperm.xlu0 %1070, %v913
  %v1072 = vpop.permute.xlu0 %1071
  %1075 = vset.pattern.permute.xlu0 0
  %1076 = vperm.xlu0 %1075, %v914
  %v1077 = vpop.permute.xlu0 %1076
  %1080 = vset.pattern.permute.xlu0 0
  %1081 = vperm.xlu0 %1080, %v915
  %v1082 = vpop.permute.xlu0 %1081
  %1085 = vset.pattern.permute.xlu0 0
  %1086 = vperm.xlu0 %1085, %v916
  %v1087 = vpop.permute.xlu0 %1086
  %1090 = vset.pattern.permute.xlu0 0
  %1091 = vperm.xlu0 %1090, %v917
  %v1092 = vpop.permute.xlu0 %1091
  %1095 = vset.pattern.permute.xlu0 0
  %1096 = vperm.xlu0 %1095, %v918
  %v1097 = vpop.permute.xlu0 %1096
  %1100 = vset.pattern.permute.xlu0 0
  %1101 = vperm.xlu0 %1100, %v919
  %v1102 = vpop.permute.xlu0 %1101
  %1105 = vset.pattern.permute.xlu0 0
  %1106 = vperm.xlu0 %1105, %v920
  %v1107 = vpop.permute.xlu0 %1106
  %1110 = vset.pattern.permute.xlu0 0
  %1111 = vperm.xlu0 %1110, %v921
  %v1112 = vpop.permute.xlu0 %1111
  %v1114 = vsub.f32 %v776, %v997
  %v1115 = vsub.f32 %v777, %v1002
  %v1116 = vsub.f32 %v778, %v1007
  %v1117 = vsub.f32 %v779, %v1012
  %v1118 = vsub.f32 %v780, %v1017
  %v1119 = vsub.f32 %v781, %v1022
  %v1120 = vsub.f32 %v782, %v1027
  %v1121 = vsub.f32 %v783, %v1032
  %v1122 = vsub.f32 %v784, %v1037
  %v1123 = vsub.f32 %v785, %v1042
  %v1124 = vsub.f32 %v786, %v1047
  %v1125 = vsub.f32 %v787, %v1052
  %v1126 = vsub.f32 %v788, %v1057
  %v1127 = vsub.f32 %v789, %v1062
  %v1128 = vsub.f32 %v790, %v1067
  %v1129 = vsub.f32 %v791, %v1072
  %v1130 = vsub.f32 %v792, %v1077
  %v1131 = vsub.f32 %v793, %v1082
  %v1132 = vsub.f32 %v794, %v1087
  %v1133 = vsub.f32 %v795, %v1092
  %v1134 = vsub.f32 %v796, %v1097
  %v1135 = vsub.f32 %v797, %v1102
  %v1136 = vsub.f32 %v798, %v1107
  %v1137 = vsub.f32 %v799, %v1112
  %v1138 = vmul.f32 %v1114, 1.442695
  %v1139 = vpow.pop %v1138
  %v1140 = vmul.f32 %v1115, 1.442695
  %v1141 = vpow.pop %v1140
  %v1142 = vmul.f32 %v1116, 1.442695
  %v1143 = vpow.pop %v1142
  %v1144 = vmul.f32 %v1117, 1.442695
  %v1145 = vpow.pop %v1144
  %v1146 = vmul.f32 %v1118, 1.442695
  %v1147 = vpow.pop %v1146
  %v1148 = vmul.f32 %v1119, 1.442695
  %v1149 = vpow.pop %v1148
  %v1150 = vmul.f32 %v1120, 1.442695
  %v1151 = vpow.pop %v1150
  %v1152 = vmul.f32 %v1121, 1.442695
  %v1153 = vpow.pop %v1152
  %v1154 = vmul.f32 %v1122, 1.442695
  %v1155 = vpow.pop %v1154
  %v1156 = vmul.f32 %v1123, 1.442695
  %v1157 = vpow.pop %v1156
  %v1158 = vmul.f32 %v1124, 1.442695
  %v1159 = vpow.pop %v1158
  %v1160 = vmul.f32 %v1125, 1.442695
  %v1161 = vpow.pop %v1160
  %v1162 = vmul.f32 %v1126, 1.442695
  %v1163 = vpow.pop %v1162
  %v1164 = vmul.f32 %v1127, 1.442695
  %v1165 = vpow.pop %v1164
  %v1166 = vmul.f32 %v1128, 1.442695
  %v1167 = vpow.pop %v1166
  %v1168 = vmul.f32 %v1129, 1.442695
  %v1169 = vpow.pop %v1168
  %v1170 = vmul.f32 %v1130, 1.442695
  %v1171 = vpow.pop %v1170
  %v1172 = vmul.f32 %v1131, 1.442695
  %v1173 = vpow.pop %v1172
  %v1174 = vmul.f32 %v1132, 1.442695
  %v1175 = vpow.pop %v1174
  %v1176 = vmul.f32 %v1133, 1.442695
  %v1177 = vpow.pop %v1176
  %v1178 = vmul.f32 %v1134, 1.442695
  %v1179 = vpow.pop %v1178
  %v1180 = vmul.f32 %v1135, 1.442695
  %v1181 = vpow.pop %v1180
  %v1182 = vmul.f32 %v1136, 1.442695
  %v1183 = vpow.pop %v1182
  %v1184 = vmul.f32 %v1137, 1.442695
  %v1185 = vpow.pop %v1184
  %v1186 = vld [vmem:[#allocation3] sm:$0xff]
  %v1187 = vld [vmem:[#allocation3 + $0x8] sm:$0xff]
  %v1188 = vld [vmem:[#allocation3 + $0x10] sm:$0x1]
  %v1189 = vld [vmem:[#allocation3 + $0x18] sm:$0xff]
  %v1190 = vld [vmem:[#allocation3 + $0x20] sm:$0xff]
  %v1191 = vld [vmem:[#allocation3 + $0x28] sm:$0x1]
  %v1192 = vld [vmem:[#allocation3 + $0x30] sm:$0xff]
  %v1193 = vld [vmem:[#allocation3 + $0x38] sm:$0xff]
  %v1194 = vld [vmem:[#allocation3 + $0x40] sm:$0x1]
  %v1195 = vld [vmem:[#allocation3 + $0x48] sm:$0xff]
  %v1196 = vld [vmem:[#allocation3 + $0x50] sm:$0xff]
  %v1197 = vld [vmem:[#allocation3 + $0x58] sm:$0x1]
  %v1198 = vld [vmem:[#allocation3 + $0x60] sm:$0xff]
  %v1199 = vld [vmem:[#allocation3 + $0x68] sm:$0xff]
  %v1200 = vld [vmem:[#allocation3 + $0x70] sm:$0x1]
  %v1201 = vld [vmem:[#allocation3 + $0x78] sm:$0xff]
  %v1202 = vld [vmem:[#allocation3 + $0x80] sm:$0xff]
  %v1203 = vld [vmem:[#allocation3 + $0x88] sm:$0x1]
  %v1204 = vld [vmem:[#allocation3 + $0x90] sm:$0xff]
  %v1205 = vld [vmem:[#allocation3 + $0x98] sm:$0xff]
  %v1206 = vld [vmem:[#allocation3 + $0xa0] sm:$0x1]
  %v1207 = vld [vmem:[#allocation3 + $0xa8] sm:$0xff]
  %v1208 = vld [vmem:[#allocation3 + $0xb0] sm:$0xff]
  %v1209 = vld [vmem:[#allocation3 + $0xb8] sm:$0x1]
  %v1210 = vmul.f32 %v947, %v1186
  %v1211 = vmul.f32 %v949, %v1187
  %v1212 = vmul.f32 %v951, %v1188
  %v1213 = vmul.f32 %v953, %v1189
  %v1214 = vmul.f32 %v955, %v1190
  %v1215 = vmul.f32 %v957, %v1191
  %v1216 = vmul.f32 %v959, %v1192
  %v1217 = vmul.f32 %v961, %v1193
  %v1218 = vmul.f32 %v963, %v1194
  %v1219 = vmul.f32 %v965, %v1195
  %v1220 = vmul.f32 %v967, %v1196
  %v1221 = vmul.f32 %v969, %v1197
  %v1222 = vmul.f32 %v971, %v1198
  %v1223 = vmul.f32 %v973, %v1199
  %v1224 = vmul.f32 %v975, %v1200
  %v1225 = vmul.f32 %v977, %v1201
  %v1226 = vmul.f32 %v979, %v1202
  %v1227 = vmul.f32 %v981, %v1203
  %v1228 = vmul.f32 %v983, %v1204
  %v1229 = vmul.f32 %v985, %v1205
  %v1230 = vmul.f32 %v987, %v1206
  %v1231 = vmul.f32 %v989, %v1207
  %v1232 = vmul.f32 %v991, %v1208
  %v1233 = vmul.f32 %v993, %v1209
  %v1234 = vsel %vm824, %v1139, 0.0
  %1235 = vadd.xlane.f32.xlu0 %v1234
  %v1236 = vpop.xlane.xlu0 %1235
  %v1237 = vsel %vm824, %v1141, 0.0
  %1238 = vadd.xlane.f32.xlu0 %v1237
  %v1239 = vpop.xlane.xlu0 %1238
  %v1240 = vsel %vm831, %v1143, 0.0
  %1241 = vadd.xlane.f32.xlu0 %v1240
  %v1242 = vpop.xlane.xlu0 %1241
  %v1243 = vsel %vm824, %v1145, 0.0
  %1244 = vadd.xlane.f32.xlu0 %v1243
  %v1245 = vpop.xlane.xlu0 %1244
  %v1246 = vsel %vm824, %v1147, 0.0
  %1247 = vadd.xlane.f32.xlu0 %v1246
  %v1248 = vpop.xlane.xlu0 %1247
  %v1249 = vsel %vm831, %v1149, 0.0
  %1250 = vadd.xlane.f32.xlu0 %v1249
  %v1251 = vpop.xlane.xlu0 %1250
  %v1252 = vsel %vm824, %v1151, 0.0
  %1253 = vadd.xlane.f32.xlu0 %v1252
  %v1254 = vpop.xlane.xlu0 %1253
  %v1255 = vsel %vm824, %v1153, 0.0
  %1256 = vadd.xlane.f32.xlu0 %v1255
  %v1257 = vpop.xlane.xlu0 %1256
  %v1258 = vsel %vm831, %v1155, 0.0
  %1259 = vadd.xlane.f32.xlu0 %v1258
  %v1260 = vpop.xlane.xlu0 %1259
  %v1261 = vsel %vm824, %v1157, 0.0
  %1262 = vadd.xlane.f32.xlu0 %v1261
  %v1263 = vpop.xlane.xlu0 %1262
  %v1264 = vsel %vm824, %v1159, 0.0
  %1265 = vadd.xlane.f32.xlu0 %v1264
  %v1266 = vpop.xlane.xlu0 %1265
  %v1267 = vsel %vm831, %v1161, 0.0
  %1268 = vadd.xlane.f32.xlu0 %v1267
  %v1269 = vpop.xlane.xlu0 %1268
  %v1270 = vsel %vm824, %v1163, 0.0
  %1271 = vadd.xlane.f32.xlu0 %v1270
  %v1272 = vpop.xlane.xlu0 %1271
  %v1273 = vsel %vm824, %v1165, 0.0
  %1274 = vadd.xlane.f32.xlu0 %v1273
  %v1275 = vpop.xlane.xlu0 %1274
  %v1276 = vsel %vm831, %v1167, 0.0
  %1277 = vadd.xlane.f32.xlu0 %v1276
  %v1278 = vpop.xlane.xlu0 %1277
  %v1279 = vsel %vm824, %v1169, 0.0
  %1280 = vadd.xlane.f32.xlu0 %v1279
  %v1281 = vpop.xlane.xlu0 %1280
  %v1282 = vsel %vm824, %v1171, 0.0
  %1283 = vadd.xlane.f32.xlu0 %v1282
  %v1284 = vpop.xlane.xlu0 %1283
  %v1285 = vsel %vm831, %v1173, 0.0
  %1286 = vadd.xlane.f32.xlu0 %v1285
  %v1287 = vpop.xlane.xlu0 %1286
  %v1288 = vsel %vm824, %v1175, 0.0
  %1289 = vadd.xlane.f32.xlu0 %v1288
  %v1290 = vpop.xlane.xlu0 %1289
  %v1291 = vsel %vm824, %v1177, 0.0
  %1292 = vadd.xlane.f32.xlu0 %v1291
  %v1293 = vpop.xlane.xlu0 %1292
  %v1294 = vsel %vm831, %v1179, 0.0
  %1295 = vadd.xlane.f32.xlu0 %v1294
  %v1296 = vpop.xlane.xlu0 %1295
  %v1297 = vsel %vm824, %v1181, 0.0
  %1298 = vadd.xlane.f32.xlu0 %v1297
  %v1299 = vpop.xlane.xlu0 %1298
  %v1300 = vsel %vm824, %v1183, 0.0
  %1301 = vadd.xlane.f32.xlu0 %v1300
  %v1302 = vpop.xlane.xlu0 %1301
  %v1303 = vsel %vm831, %v1185, 0.0
  %1304 = vadd.xlane.f32.xlu0 %v1303
  %v1305 = vpop.xlane.xlu0 %1304
  %v1306 = vadd.f32 %v1210, %v1236
  %v1307 = vadd.f32 %v1211, %v1239
  %v1308 = vadd.f32 %v1212, %v1242
  %v1309 = vadd.f32 %v1213, %v1245
  %v1310 = vadd.f32 %v1214, %v1248
  %v1311 = vadd.f32 %v1215, %v1251
  %v1312 = vadd.f32 %v1216, %v1254
  %v1313 = vadd.f32 %v1217, %v1257
  %v1314 = vadd.f32 %v1218, %v1260
  %v1315 = vadd.f32 %v1219, %v1263
  %v1316 = vadd.f32 %v1220, %v1266
  %v1317 = vadd.f32 %v1221, %v1269
  %v1318 = vadd.f32 %v1222, %v1272
  %v1319 = vadd.f32 %v1223, %v1275
  %v1320 = vadd.f32 %v1224, %v1278
  %v1321 = vadd.f32 %v1225, %v1281
  %v1322 = vadd.f32 %v1226, %v1284
  %v1323 = vadd.f32 %v1227, %v1287
  %v1324 = vadd.f32 %v1228, %v1290
  %v1325 = vadd.f32 %v1229, %v1293
  %v1326 = vadd.f32 %v1230, %v1296
  %v1327 = vadd.f32 %v1231, %v1299
  %v1328 = vadd.f32 %v1232, %v1302
  %v1329 = vadd.f32 %v1233, %v1305
  %vm1330 = vcmask 7168
  %1331 = vst.msk [vmem:[#allocation3] sm:$0xff] %vm1330, %v1306
  %1332 = vst.msk [vmem:[#allocation3 + $0x8] sm:$0xff] %vm1330, %v1307
  %vm1333 = vcmask 0
  %1334 = vst.msk [vmem:[#allocation3 + $0x10] sm:$0x1] %vm1333, %v1308
  %1335 = vst.msk [vmem:[#allocation3 + $0x18] sm:$0xff] %vm1330, %v1309
  %1336 = vst.msk [vmem:[#allocation3 + $0x20] sm:$0xff] %vm1330, %v1310
  %1337 = vst.msk [vmem:[#allocation3 + $0x28] sm:$0x1] %vm1333, %v1311
  %1338 = vst.msk [vmem:[#allocation3 + $0x30] sm:$0xff] %vm1330, %v1312
  %1339 = vst.msk [vmem:[#allocation3 + $0x38] sm:$0xff] %vm1330, %v1313
  %1340 = vst.msk [vmem:[#allocation3 + $0x40] sm:$0x1] %vm1333, %v1314
  %1341 = vst.msk [vmem:[#allocation3 + $0x48] sm:$0xff] %vm1330, %v1315
  %1342 = vst.msk [vmem:[#allocation3 + $0x50] sm:$0xff] %vm1330, %v1316
  %1343 = vst.msk [vmem:[#allocation3 + $0x58] sm:$0x1] %vm1333, %v1317
  %1344 = vst.msk [vmem:[#allocation3 + $0x60] sm:$0xff] %vm1330, %v1318
  %1345 = vst.msk [vmem:[#allocation3 + $0x68] sm:$0xff] %vm1330, %v1319
  %1346 = vst.msk [vmem:[#allocation3 + $0x70] sm:$0x1] %vm1333, %v1320
  %1347 = vst.msk [vmem:[#allocation3 + $0x78] sm:$0xff] %vm1330, %v1321
  %1348 = vst.msk [vmem:[#allocation3 + $0x80] sm:$0xff] %vm1330, %v1322
  %1349 = vst.msk [vmem:[#allocation3 + $0x88] sm:$0x1] %vm1333, %v1323
  %1350 = vst.msk [vmem:[#allocation3 + $0x90] sm:$0xff] %vm1330, %v1324
  %1351 = vst.msk [vmem:[#allocation3 + $0x98] sm:$0xff] %vm1330, %v1325
  %1352 = vst.msk [vmem:[#allocation3 + $0xa0] sm:$0x1] %vm1333, %v1326
  %1353 = vst.msk [vmem:[#allocation3 + $0xa8] sm:$0xff] %vm1330, %v1327
  %1354 = vst.msk [vmem:[#allocation3 + $0xb0] sm:$0xff] %vm1330, %v1328
  %1355 = vst.msk [vmem:[#allocation3 + $0xb8] sm:$0x1] %vm1333, %v1329
  %v1356 = vld [vmem:[#allocation4] sm:$0xff]
  %v1357 = vld [vmem:[#allocation4 + $0x8] sm:$0xff]
  %v1358 = vld [vmem:[#allocation4 + $0x10] sm:$0x1]
  %v1359 = vld [vmem:[#allocation4 + $0x18] sm:$0xff]
  %v1360 = vld [vmem:[#allocation4 + $0x20] sm:$0xff]
  %v1361 = vld [vmem:[#allocation4 + $0x28] sm:$0x1]
  %v1362 = vld [vmem:[#allocation4 + $0x30] sm:$0xff]
  %v1363 = vld [vmem:[#allocation4 + $0x38] sm:$0xff]
  %v1364 = vld [vmem:[#allocation4 + $0x40] sm:$0x1]
  %v1365 = vld [vmem:[#allocation4 + $0x48] sm:$0xff]
  %v1366 = vld [vmem:[#allocation4 + $0x50] sm:$0xff]
  %v1367 = vld [vmem:[#allocation4 + $0x58] sm:$0x1]
  %v1368 = vld [vmem:[#allocation4 + $0x60] sm:$0xff]
  %v1369 = vld [vmem:[#allocation4 + $0x68] sm:$0xff]
  %v1370 = vld [vmem:[#allocation4 + $0x70] sm:$0x1]
  %v1371 = vld [vmem:[#allocation4 + $0x78] sm:$0xff]
  %v1372 = vld [vmem:[#allocation4 + $0x80] sm:$0xff]
  %v1373 = vld [vmem:[#allocation4 + $0x88] sm:$0x1]
  %v1374 = vld [vmem:[#allocation4 + $0x90] sm:$0xff]
  %v1375 = vld [vmem:[#allocation4 + $0x98] sm:$0xff]
  %v1376 = vld [vmem:[#allocation4 + $0xa0] sm:$0x1]
  %v1377 = vld [vmem:[#allocation4 + $0xa8] sm:$0xff]
  %v1378 = vld [vmem:[#allocation4 + $0xb0] sm:$0xff]
  %v1379 = vld [vmem:[#allocation4 + $0xb8] sm:$0x1]
  %1381 = vset.pattern.permute.xlu0 0
  %1382 = vperm.xlu0 %1381, %v947
  %v1383 = vpop.permute.xlu0 %1382
  %1386 = vset.pattern.permute.xlu0 0
  %1387 = vperm.xlu0 %1386, %v949
  %v1388 = vpop.permute.xlu0 %1387
  %1391 = vset.pattern.permute.xlu0 0
  %1392 = vperm.xlu0 %1391, %v951
  %v1393 = vpop.permute.xlu0 %1392
  %1396 = vset.pattern.permute.xlu0 0
  %1397 = vperm.xlu0 %1396, %v953
  %v1398 = vpop.permute.xlu0 %1397
  %1401 = vset.pattern.permute.xlu0 0
  %1402 = vperm.xlu0 %1401, %v955
  %v1403 = vpop.permute.xlu0 %1402
  %1406 = vset.pattern.permute.xlu0 0
  %1407 = vperm.xlu0 %1406, %v957
  %v1408 = vpop.permute.xlu0 %1407
  %1411 = vset.pattern.permute.xlu0 0
  %1412 = vperm.xlu0 %1411, %v959
  %v1413 = vpop.permute.xlu0 %1412
  %1416 = vset.pattern.permute.xlu0 0
  %1417 = vperm.xlu0 %1416, %v961
  %v1418 = vpop.permute.xlu0 %1417
  %1421 = vset.pattern.permute.xlu0 0
  %1422 = vperm.xlu0 %1421, %v963
  %v1423 = vpop.permute.xlu0 %1422
  %1426 = vset.pattern.permute.xlu0 0
  %1427 = vperm.xlu0 %1426, %v965
  %v1428 = vpop.permute.xlu0 %1427
  %1431 = vset.pattern.permute.xlu0 0
  %1432 = vperm.xlu0 %1431, %v967
  %v1433 = vpop.permute.xlu0 %1432
  %1436 = vset.pattern.permute.xlu0 0
  %1437 = vperm.xlu0 %1436, %v969
  %v1438 = vpop.permute.xlu0 %1437
  %1441 = vset.pattern.permute.xlu0 0
  %1442 = vperm.xlu0 %1441, %v971
  %v1443 = vpop.permute.xlu0 %1442
  %1446 = vset.pattern.permute.xlu0 0
  %1447 = vperm.xlu0 %1446, %v973
  %v1448 = vpop.permute.xlu0 %1447
  %1451 = vset.pattern.permute.xlu0 0
  %1452 = vperm.xlu0 %1451, %v975
  %v1453 = vpop.permute.xlu0 %1452
  %1456 = vset.pattern.permute.xlu0 0
  %1457 = vperm.xlu0 %1456, %v977
  %v1458 = vpop.permute.xlu0 %1457
  %1461 = vset.pattern.permute.xlu0 0
  %1462 = vperm.xlu0 %1461, %v979
  %v1463 = vpop.permute.xlu0 %1462
  %1466 = vset.pattern.permute.xlu0 0
  %1467 = vperm.xlu0 %1466, %v981
  %v1468 = vpop.permute.xlu0 %1467
  %1471 = vset.pattern.permute.xlu0 0
  %1472 = vperm.xlu0 %1471, %v983
  %v1473 = vpop.permute.xlu0 %1472
  %1476 = vset.pattern.permute.xlu0 0
  %1477 = vperm.xlu0 %1476, %v985
  %v1478 = vpop.permute.xlu0 %1477
  %1481 = vset.pattern.permute.xlu0 0
  %1482 = vperm.xlu0 %1481, %v987
  %v1483 = vpop.permute.xlu0 %1482
  %1486 = vset.pattern.permute.xlu0 0
  %1487 = vperm.xlu0 %1486, %v989
  %v1488 = vpop.permute.xlu0 %1487
  %1491 = vset.pattern.permute.xlu0 0
  %1492 = vperm.xlu0 %1491, %v991
  %v1493 = vpop.permute.xlu0 %1492
  %1496 = vset.pattern.permute.xlu0 0
  %1497 = vperm.xlu0 %1496, %v993
  %v1498 = vpop.permute.xlu0 %1497
  %v1500 = vmul.f32 %v1383, %v1356
  %v1501 = vmul.f32 %v1388, %v1357
  %v1502 = vmul.f32 %v1393, %v1358
  %v1503 = vmul.f32 %v1398, %v1359
  %v1504 = vmul.f32 %v1403, %v1360
  %v1505 = vmul.f32 %v1408, %v1361
  %v1506 = vmul.f32 %v1413, %v1362
  %v1507 = vmul.f32 %v1418, %v1363
  %v1508 = vmul.f32 %v1423, %v1364
  %v1509 = vmul.f32 %v1428, %v1365
  %v1510 = vmul.f32 %v1433, %v1366
  %v1511 = vmul.f32 %v1438, %v1367
  %v1512 = vmul.f32 %v1443, %v1368
  %v1513 = vmul.f32 %v1448, %v1369
  %v1514 = vmul.f32 %v1453, %v1370
  %v1515 = vmul.f32 %v1458, %v1371
  %v1516 = vmul.f32 %v1463, %v1372
  %v1517 = vmul.f32 %v1468, %v1373
  %v1518 = vmul.f32 %v1473, %v1374
  %v1519 = vmul.f32 %v1478, %v1375
  %v1520 = vmul.f32 %v1483, %v1376
  %v1521 = vmul.f32 %v1488, %v1377
  %v1522 = vmul.f32 %v1493, %v1378
  %v1523 = vmul.f32 %v1498, %v1379
  %v1524 = vpack.c.bf16 %v1141, %v1139
  %v1525 = vpack.c.bf16 %v1143, %v1143
  %v1526 = vpack.c.bf16 %v1147, %v1145
  %v1527 = vpack.c.bf16 %v1149, %v1149
  %v1528 = vpack.c.bf16 %v1153, %v1151
  %v1529 = vpack.c.bf16 %v1155, %v1155
  %v1530 = vpack.c.bf16 %v1159, %v1157
  %v1531 = vpack.c.bf16 %v1161, %v1161
  %v1532 = vpack.c.bf16 %v1165, %v1163
  %v1533 = vpack.c.bf16 %v1167, %v1167
  %v1534 = vpack.c.bf16 %v1171, %v1169
  %v1535 = vpack.c.bf16 %v1173, %v1173
  %v1536 = vpack.c.bf16 %v1177, %v1175
  %v1537 = vpack.c.bf16 %v1179, %v1179
  %v1538 = vpack.c.bf16 %v1183, %v1181
  %v1539 = vpack.c.bf16 %v1185, %v1185
  %v1543 = vunpack.c.l.b16 %v143
  %v1544 = vunpack.c.l.b16 %v144
  %v1545 = vunpack.c.l.b16 %v145
  %v1546 = vpack.c.b16 %v1544, %v1543
  %v1547 = vpack.c.b16 %v1545, %v1545
  %v1550 = vsel %vm824, %v1524, 0
  %v1553 = vsel %vm824, %v1525, 0
  %vm1555 = vcmask 1040384
  %v1556 = vsel 0, 4294967295, 65535
  %v1557 = vsel %vm1555, %v1556, 0
  %v1559 = vand.u32 %v1547, %v1557
  %1561 = vmatprep.subr.bf16.mxu0 0
  %1562 = vmatpush1.bf16.msra.mxu0 %v1546
  %1563 = vmatprep.subr.bf16.mxu0 0
  %1564 = vmatpush1.bf16.msra.mxu0 %v1559
  %1565 = vmatprep.subr.bf16.mxu0 0
  %1566 = vmatpush1.bf16.msra.mxu0 0
  %1567 = vmatprep.subr.bf16.mxu0 0
  %1568 = vmatpush1.bf16.msra.mxu0 0
  %1569 = vmatprep.subr.bf16.mxu0 0
  %1570 = vmatpush1.bf16.msra.mxu0 0
  %1571 = vmatprep.subr.bf16.mxu0 0
  %1572 = vmatpush1.bf16.msra.mxu0 0
  %1573 = vmatprep.subr.bf16.mxu0 0
  %1574 = vmatpush1.bf16.msra.mxu0 0
  %1575 = vmatprep.subr.bf16.mxu0 0
  %1576 = vmatpush1.bf16.msra.mxu0 0
  %1577 = vmatprep.subr.bf16.mxu0 0
  %1578 = vmatpush1.bf16.msra.mxu0 0
  %1579 = vmatprep.subr.bf16.mxu0 0
  %1580 = vmatpush1.bf16.msra.mxu0 0
  %1581 = vmatprep.subr.bf16.mxu0 0
  %1582 = vmatpush1.bf16.msra.mxu0 0
  %1583 = vmatprep.subr.bf16.mxu0 0
  %1584 = vmatpush1.bf16.msra.mxu0 0
  %1585 = vmatprep.subr.bf16.mxu0 0
  %1586 = vmatpush1.bf16.msra.mxu0 0
  %1587 = vmatprep.subr.bf16.mxu0 0
  %1588 = vmatpush1.bf16.msra.mxu0 0
  %1589 = vmatprep.subr.bf16.mxu0 0
  %1590 = vmatpush1.bf16.msra.mxu0 0
  %1591 = vmatprep.subr.bf16.mxu0 0
  %1592 = vmatpush1.bf16.msra.mxu0 0
  %1593 = vmatprep.mubr.bf16.mxu0 0
  %1594 = vmatmul.mubr.bf16.gmra.mrb[0].mxu0 %v1550
  %v1595 = vpop.f32.mrb[0].mxu0
  %v1596 = vadd.f32 0.0, %v1595
  %v1597 = vpop.f32.mrb[0].mxu0
  %v1598 = vpop.f32.mrb[0].mxu0
  %v1599 = vadd.f32 0.0, %v1598
  %v1600 = vpop.f32.mrb[0].mxu0
  %1601 = vmatprep.mubr.bf16.mxu0 0
  %1602 = vmatmul.mubr.bf16.gmra.mrb[0].mxu0 %v1553
  %v1603 = vpop.f32.mrb[0].mxu0
  %v1604 = vadd.f32 0.0, %v1603
  %v1605 = vpop.f32.mrb[0].mxu0
  %v1606 = vpop.f32.mrb[0].mxu0
  %v1607 = vpop.f32.mrb[0].mxu0
  %1608 = vdwg.mxu0
  %v1612 = vunpack.c.l.b16 %v146
  %v1613 = vunpack.c.l.b16 %v147
  %v1614 = vunpack.c.l.b16 %v148
  %v1615 = vpack.c.b16 %v1613, %v1612
  %v1616 = vpack.c.b16 %v1614, %v1614
  %v1619 = vsel %vm824, %v1526, 0
  %v1622 = vsel %vm824, %v1527, 0
  %v1625 = vand.u32 %v1616, %v1557
  %1627 = vmatprep.subr.bf16.mxu0 0
  %1628 = vmatpush1.bf16.msra.mxu0 %v1615
  %1629 = vmatprep.subr.bf16.mxu0 0
  %1630 = vmatpush1.bf16.msra.mxu0 %v1625
  %1631 = vmatprep.subr.bf16.mxu0 0
  %1632 = vmatpush1.bf16.msra.mxu0 0
  %1633 = vmatprep.subr.bf16.mxu0 0
  %1634 = vmatpush1.bf16.msra.mxu0 0
  %1635 = vmatprep.subr.bf16.mxu0 0
  %1636 = vmatpush1.bf16.msra.mxu0 0
  %1637 = vmatprep.subr.bf16.mxu0 0
  %1638 = vmatpush1.bf16.msra.mxu0 0
  %1639 = vmatprep.subr.bf16.mxu0 0
  %1640 = vmatpush1.bf16.msra.mxu0 0
  %1641 = vmatprep.subr.bf16.mxu0 0
  %1642 = vmatpush1.bf16.msra.mxu0 0
  %1643 = vmatprep.subr.bf16.mxu0 0
  %1644 = vmatpush1.bf16.msra.mxu0 0
  %1645 = vmatprep.subr.bf16.mxu0 0
  %1646 = vmatpush1.bf16.msra.mxu0 0
  %1647 = vmatprep.subr.bf16.mxu0 0
  %1648 = vmatpush1.bf16.msra.mxu0 0
  %1649 = vmatprep.subr.bf16.mxu0 0
  %1650 = vmatpush1.bf16.msra.mxu0 0
  %1651 = vmatprep.subr.bf16.mxu0 0
  %1652 = vmatpush1.bf16.msra.mxu0 0
  %1653 = vmatprep.subr.bf16.mxu0 0
  %1654 = vmatpush1.bf16.msra.mxu0 0
  %1655 = vmatprep.subr.bf16.mxu0 0
  %1656 = vmatpush1.bf16.msra.mxu0 0
  %1657 = vmatprep.subr.bf16.mxu0 0
  %1658 = vmatpush1.bf16.msra.mxu0 0
  %1659 = vmatprep.mubr.bf16.mxu0 0
  %1660 = vmatmul.mubr.bf16.gmra.mrb[0].mxu0 %v1619
  %v1661 = vpop.f32.mrb[0].mxu0
  %v1662 = vadd.f32 0.0, %v1661
  %v1663 = vpop.f32.mrb[0].mxu0
  %v1664 = vpop.f32.mrb[0].mxu0
  %v1665 = vadd.f32 0.0, %v1664
  %v1666 = vpop.f32.mrb[0].mxu0
  %1667 = vmatprep.mubr.bf16.mxu0 0
  %1668 = vmatmul.mubr.bf16.gmra.mrb[0].mxu0 %v1622
  %v1669 = vpop.f32.mrb[0].mxu0
  %v1670 = vadd.f32 0.0, %v1669
  %v1671 = vpop.f32.mrb[0].mxu0
  %v1672 = vpop.f32.mrb[0].mxu0
  %v1673 = vpop.f32.mrb[0].mxu0
  %1674 = vdwg.mxu0
  %v1678 = vunpack.c.l.b16 %v149
  %v1679 = vunpack.c.l.b16 %v150
  %v1680 = vunpack.c.l.b16 %v151
  %v1681 = vpack.c.b16 %v1679, %v1678
  %v1682 = vpack.c.b16 %v1680, %v1680
  %v1685 = vsel %vm824, %v1528, 0
  %v1688 = vsel %vm824, %v1529, 0
  %v1691 = vand.u32 %v1682, %v1557
  %1693 = vmatprep.subr.bf16.mxu0 0
  %1694 = vmatpush1.bf16.msra.mxu0 %v1681
  %1695 = vmatprep.subr.bf16.mxu0 0
  %1696 = vmatpush1.bf16.msra.mxu0 %v1691
  %1697 = vmatprep.subr.bf16.mxu0 0
  %1698 = vmatpush1.bf16.msra.mxu0 0
  %1699 = vmatprep.subr.bf16.mxu0 0
  %1700 = vmatpush1.bf16.msra.mxu0 0
  %1701 = vmatprep.subr.bf16.mxu0 0
  %1702 = vmatpush1.bf16.msra.mxu0 0
  %1703 = vmatprep.subr.bf16.mxu0 0
  %1704 = vmatpush1.bf16.msra.mxu0 0
  %1705 = vmatprep.subr.bf16.mxu0 0
  %1706 = vmatpush1.bf16.msra.mxu0 0
  %1707 = vmatprep.subr.bf16.mxu0 0
  %1708 = vmatpush1.bf16.msra.mxu0 0
  %1709 = vmatprep.subr.bf16.mxu0 0
  %1710 = vmatpush1.bf16.msra.mxu0 0
  %1711 = vmatprep.subr.bf16.mxu0 0
  %1712 = vmatpush1.bf16.msra.mxu0 0
  %1713 = vmatprep.subr.bf16.mxu0 0
  %1714 = vmatpush1.bf16.msra.mxu0 0
  %1715 = vmatprep.subr.bf16.mxu0 0
  %1716 = vmatpush1.bf16.msra.mxu0 0
  %1717 = vmatprep.subr.bf16.mxu0 0
  %1718 = vmatpush1.bf16.msra.mxu0 0
  %1719 = vmatprep.subr.bf16.mxu0 0
  %1720 = vmatpush1.bf16.msra.mxu0 0
  %1721 = vmatprep.subr.bf16.mxu0 0
  %1722 = vmatpush1.bf16.msra.mxu0 0
  %1723 = vmatprep.subr.bf16.mxu0 0
  %1724 = vmatpush1.bf16.msra.mxu0 0
  %1725 = vmatprep.mubr.bf16.mxu0 0
  %1726 = vmatmul.mubr.bf16.gmra.mrb[0].mxu0 %v1685
  %v1727 = vpop.f32.mrb[0].mxu0
  %v1728 = vadd.f32 0.0, %v1727
  %v1729 = vpop.f32.mrb[0].mxu0
  %v1730 = vpop.f32.mrb[0].mxu0
  %v1731 = vadd.f32 0.0, %v1730
  %v1732 = vpop.f32.mrb[0].mxu0
  %1733 = vmatprep.mubr.bf16.mxu0 0
  %1734 = vmatmul.mubr.bf16.gmra.mrb[0].mxu0 %v1688
  %v1735 = vpop.f32.mrb[0].mxu0
  %v1736 = vadd.f32 0.0, %v1735
  %v1737 = vpop.f32.mrb[0].mxu0
  %v1738 = vpop.f32.mrb[0].mxu0
  %v1739 = vpop.f32.mrb[0].mxu0
  %1740 = vdwg.mxu0
  %v1744 = vunpack.c.l.b16 %v152
  %v1745 = vunpack.c.l.b16 %v153
  %v1746 = vunpack.c.l.b16 %v154
  %v1747 = vpack.c.b16 %v1745, %v1744
  %v1748 = vpack.c.b16 %v1746, %v1746
  %v1751 = vsel %vm824, %v1530, 0
  %v1754 = vsel %vm824, %v1531, 0
  %v1757 = vand.u32 %v1748, %v1557
  %1759 = vmatprep.subr.bf16.mxu0 0
  %1760 = vmatpush1.bf16.msra.mxu0 %v1747
  %1761 = vmatprep.subr.bf16.mxu0 0
  %1762 = vmatpush1.bf16.msra.mxu0 %v1757
  %1763 = vmatprep.subr.bf16.mxu0 0
  %1764 = vmatpush1.bf16.msra.mxu0 0
  %1765 = vmatprep.subr.bf16.mxu0 0
  %1766 = vmatpush1.bf16.msra.mxu0 0
  %1767 = vmatprep.subr.bf16.mxu0 0
  %1768 = vmatpush1.bf16.msra.mxu0 0
  %1769 = vmatprep.subr.bf16.mxu0 0
  %1770 = vmatpush1.bf16.msra.mxu0 0
  %1771 = vmatprep.subr.bf16.mxu0 0
  %1772 = vmatpush1.bf16.msra.mxu0 0
  %1773 = vmatprep.subr.bf16.mxu0 0
  %1774 = vmatpush1.bf16.msra.mxu0 0
  %1775 = vmatprep.subr.bf16.mxu0 0
  %1776 = vmatpush1.bf16.msra.mxu0 0
  %1777 = vmatprep.subr.bf16.mxu0 0
  %1778 = vmatpush1.bf16.msra.mxu0 0
  %1779 = vmatprep.subr.bf16.mxu0 0
  %1780 = vmatpush1.bf16.msra.mxu0 0
  %1781 = vmatprep.subr.bf16.mxu0 0
  %1782 = vmatpush1.bf16.msra.mxu0 0
  %1783 = vmatprep.subr.bf16.mxu0 0
  %1784 = vmatpush1.bf16.msra.mxu0 0
  %1785 = vmatprep.subr.bf16.mxu0 0
  %1786 = vmatpush1.bf16.msra.mxu0 0
  %1787 = vmatprep.subr.bf16.mxu0 0
  %1788 = vmatpush1.bf16.msra.mxu0 0
  %1789 = vmatprep.subr.bf16.mxu0 0
  %1790 = vmatpush1.bf16.msra.mxu0 0
  %1791 = vmatprep.mubr.bf16.mxu0 0
  %1792 = vmatmul.mubr.bf16.gmra.mrb[0].mxu0 %v1751
  %v1793 = vpop.f32.mrb[0].mxu0
  %v1794 = vadd.f32 0.0, %v1793
  %v1795 = vpop.f32.mrb[0].mxu0
  %v1796 = vpop.f32.mrb[0].mxu0
  %v1797 = vadd.f32 0.0, %v1796
  %v1798 = vpop.f32.mrb[0].mxu0
  %1799 = vmatprep.mubr.bf16.mxu0 0
  %1800 = vmatmul.mubr.bf16.gmra.mrb[0].mxu0 %v1754
  %v1801 = vpop.f32.mrb[0].mxu0
  %v1802 = vadd.f32 0.0, %v1801
  %v1803 = vpop.f32.mrb[0].mxu0
  %v1804 = vpop.f32.mrb[0].mxu0
  %v1805 = vpop.f32.mrb[0].mxu0
  %1806 = vdwg.mxu0
  %v1810 = vunpack.c.l.b16 %v155
  %v1811 = vunpack.c.l.b16 %v156
  %v1812 = vunpack.c.l.b16 %v157
  %v1813 = vpack.c.b16 %v1811, %v1810
  %v1814 = vpack.c.b16 %v1812, %v1812
  %v1817 = vsel %vm824, %v1532, 0
  %v1820 = vsel %vm824, %v1533, 0
  %v1823 = vand.u32 %v1814, %v1557
  %1825 = vmatprep.subr.bf16.mxu0 0
  %1826 = vmatpush1.bf16.msra.mxu0 %v1813
  %1827 = vmatprep.subr.bf16.mxu0 0
  %1828 = vmatpush1.bf16.msra.mxu0 %v1823
  %1829 = vmatprep.subr.bf16.mxu0 0
  %1830 = vmatpush1.bf16.msra.mxu0 0
  %1831 = vmatprep.subr.bf16.mxu0 0
  %1832 = vmatpush1.bf16.msra.mxu0 0
  %1833 = vmatprep.subr.bf16.mxu0 0
  %1834 = vmatpush1.bf16.msra.mxu0 0
  %1835 = vmatprep.subr.bf16.mxu0 0
  %1836 = vmatpush1.bf16.msra.mxu0 0
  %1837 = vmatprep.subr.bf16.mxu0 0
  %1838 = vmatpush1.bf16.msra.mxu0 0
  %1839 = vmatprep.subr.bf16.mxu0 0
  %1840 = vmatpush1.bf16.msra.mxu0 0
  %1841 = vmatprep.subr.bf16.mxu0 0
  %1842 = vmatpush1.bf16.msra.mxu0 0
  %1843 = vmatprep.subr.bf16.mxu0 0
  %1844 = vmatpush1.bf16.msra.mxu0 0
  %1845 = vmatprep.subr.bf16.mxu0 0
  %1846 = vmatpush1.bf16.msra.mxu0 0
  %1847 = vmatprep.subr.bf16.mxu0 0
  %1848 = vmatpush1.bf16.msra.mxu0 0
  %1849 = vmatprep.subr.bf16.mxu0 0
  %1850 = vmatpush1.bf16.msra.mxu0 0
  %1851 = vmatprep.subr.bf16.mxu0 0
  %1852 = vmatpush1.bf16.msra.mxu0 0
  %1853 = vmatprep.subr.bf16.mxu0 0
  %1854 = vmatpush1.bf16.msra.mxu0 0
  %1855 = vmatprep.subr.bf16.mxu0 0
  %1856 = vmatpush1.bf16.msra.mxu0 0
  %1857 = vmatprep.mubr.bf16.mxu0 0
  %1858 = vmatmul.mubr.bf16.gmra.mrb[0].mxu0 %v1817
  %v1859 = vpop.f32.mrb[0].mxu0
  %v1860 = vadd.f32 0.0, %v1859
  %v1861 = vpop.f32.mrb[0].mxu0
  %v1862 = vpop.f32.mrb[0].mxu0
  %v1863 = vadd.f32 0.0, %v1862
  %v1864 = vpop.f32.mrb[0].mxu0
  %1865 = vmatprep.mubr.bf16.mxu0 0
  %1866 = vmatmul.mubr.bf16.gmra.mrb[0].mxu0 %v1820
  %v1867 = vpop.f32.mrb[0].mxu0
  %v1868 = vadd.f32 0.0, %v1867
  %v1869 = vpop.f32.mrb[0].mxu0
  %v1870 = vpop.f32.mrb[0].mxu0
  %v1871 = vpop.f32.mrb[0].mxu0
  %1872 = vdwg.mxu0
  %v1876 = vunpack.c.l.b16 %v158
  %v1877 = vunpack.c.l.b16 %v159
  %v1878 = vunpack.c.l.b16 %v160
  %v1879 = vpack.c.b16 %v1877, %v1876
  %v1880 = vpack.c.b16 %v1878, %v1878
  %v1883 = vsel %vm824, %v1534, 0
  %v1886 = vsel %vm824, %v1535, 0
  %v1889 = vand.u32 %v1880, %v1557
  %1891 = vmatprep.subr.bf16.mxu0 0
  %1892 = vmatpush1.bf16.msra.mxu0 %v1879
  %1893 = vmatprep.subr.bf16.mxu0 0
  %1894 = vmatpush1.bf16.msra.mxu0 %v1889
  %1895 = vmatprep.subr.bf16.mxu0 0
  %1896 = vmatpush1.bf16.msra.mxu0 0
  %1897 = vmatprep.subr.bf16.mxu0 0
  %1898 = vmatpush1.bf16.msra.mxu0 0
  %1899 = vmatprep.subr.bf16.mxu0 0
  %1900 = vmatpush1.bf16.msra.mxu0 0
  %1901 = vmatprep.subr.bf16.mxu0 0
  %1902 = vmatpush1.bf16.msra.mxu0 0
  %1903 = vmatprep.subr.bf16.mxu0 0
  %1904 = vmatpush1.bf16.msra.mxu0 0
  %1905 = vmatprep.subr.bf16.mxu0 0
  %1906 = vmatpush1.bf16.msra.mxu0 0
  %1907 = vmatprep.subr.bf16.mxu0 0
  %1908 = vmatpush1.bf16.msra.mxu0 0
  %1909 = vmatprep.subr.bf16.mxu0 0
  %1910 = vmatpush1.bf16.msra.mxu0 0
  %1911 = vmatprep.subr.bf16.mxu0 0
  %1912 = vmatpush1.bf16.msra.mxu0 0
  %1913 = vmatprep.subr.bf16.mxu0 0
  %1914 = vmatpush1.bf16.msra.mxu0 0
  %1915 = vmatprep.subr.bf16.mxu0 0
  %1916 = vmatpush1.bf16.msra.mxu0 0
  %1917 = vmatprep.subr.bf16.mxu0 0
  %1918 = vmatpush1.bf16.msra.mxu0 0
  %1919 = vmatprep.subr.bf16.mxu0 0
  %1920 = vmatpush1.bf16.msra.mxu0 0
  %1921 = vmatprep.subr.bf16.mxu0 0
  %1922 = vmatpush1.bf16.msra.mxu0 0
  %1923 = vmatprep.mubr.bf16.mxu0 0
  %1924 = vmatmul.mubr.bf16.gmra.mrb[0].mxu0 %v1883
  %v1925 = vpop.f32.mrb[0].mxu0
  %v1926 = vadd.f32 0.0, %v1925
  %v1927 = vpop.f32.mrb[0].mxu0
  %v1928 = vpop.f32.mrb[0].mxu0
  %v1929 = vadd.f32 0.0, %v1928
  %v1930 = vpop.f32.mrb[0].mxu0
  %1931 = vmatprep.mubr.bf16.mxu0 0
  %1932 = vmatmul.mubr.bf16.gmra.mrb[0].mxu0 %v1886
  %v1933 = vpop.f32.mrb[0].mxu0
  %v1934 = vadd.f32 0.0, %v1933
  %v1935 = vpop.f32.mrb[0].mxu0
  %v1936 = vpop.f32.mrb[0].mxu0
  %v1937 = vpop.f32.mrb[0].mxu0
  %1938 = vdwg.mxu0
  %v1942 = vunpack.c.l.b16 %v161
  %v1943 = vunpack.c.l.b16 %v162
  %v1944 = vunpack.c.l.b16 %v163
  %v1945 = vpack.c.b16 %v1943, %v1942
  %v1946 = vpack.c.b16 %v1944, %v1944
  %v1949 = vsel %vm824, %v1536, 0
  %v1952 = vsel %vm824, %v1537, 0
  %v1955 = vand.u32 %v1946, %v1557
  %1957 = vmatprep.subr.bf16.mxu0 0
  %1958 = vmatpush1.bf16.msra.mxu0 %v1945
  %1959 = vmatprep.subr.bf16.mxu0 0
  %1960 = vmatpush1.bf16.msra.mxu0 %v1955
  %1961 = vmatprep.subr.bf16.mxu0 0
  %1962 = vmatpush1.bf16.msra.mxu0 0
  %1963 = vmatprep.subr.bf16.mxu0 0
  %1964 = vmatpush1.bf16.msra.mxu0 0
  %1965 = vmatprep.subr.bf16.mxu0 0
  %1966 = vmatpush1.bf16.msra.mxu0 0
  %1967 = vmatprep.subr.bf16.mxu0 0
  %1968 = vmatpush1.bf16.msra.mxu0 0
  %1969 = vmatprep.subr.bf16.mxu0 0
  %1970 = vmatpush1.bf16.msra.mxu0 0
  %1971 = vmatprep.subr.bf16.mxu0 0
  %1972 = vmatpush1.bf16.msra.mxu0 0
  %1973 = vmatprep.subr.bf16.mxu0 0
  %1974 = vmatpush1.bf16.msra.mxu0 0
  %1975 = vmatprep.subr.bf16.mxu0 0
  %1976 = vmatpush1.bf16.msra.mxu0 0
  %1977 = vmatprep.subr.bf16.mxu0 0
  %1978 = vmatpush1.bf16.msra.mxu0 0
  %1979 = vmatprep.subr.bf16.mxu0 0
  %1980 = vmatpush1.bf16.msra.mxu0 0
  %1981 = vmatprep.subr.bf16.mxu0 0
  %1982 = vmatpush1.bf16.msra.mxu0 0
  %1983 = vmatprep.subr.bf16.mxu0 0
  %1984 = vmatpush1.bf16.msra.mxu0 0
  %1985 = vmatprep.subr.bf16.mxu0 0
  %1986 = vmatpush1.bf16.msra.mxu0 0
  %1987 = vmatprep.subr.bf16.mxu0 0
  %1988 = vmatpush1.bf16.msra.mxu0 0
  %1989 = vmatprep.mubr.bf16.mxu0 0
  %1990 = vmatmul.mubr.bf16.gmra.mrb[0].mxu0 %v1949
  %v1991 = vpop.f32.mrb[0].mxu0
  %v1992 = vadd.f32 0.0, %v1991
  %v1993 = vpop.f32.mrb[0].mxu0
  %v1994 = vpop.f32.mrb[0].mxu0
  %v1995 = vadd.f32 0.0, %v1994
  %v1996 = vpop.f32.mrb[0].mxu0
  %1997 = vmatprep.mubr.bf16.mxu0 0
  %1998 = vmatmul.mubr.bf16.gmra.mrb[0].mxu0 %v1952
  %v1999 = vpop.f32.mrb[0].mxu0
  %v2000 = vadd.f32 0.0, %v1999
  %v2001 = vpop.f32.mrb[0].mxu0
  %v2002 = vpop.f32.mrb[0].mxu0
  %v2003 = vpop.f32.mrb[0].mxu0
  %2004 = vdwg.mxu0
  %v2008 = vunpack.c.l.b16 %v164
  %v2009 = vunpack.c.l.b16 %v165
  %v2010 = vunpack.c.l.b16 %v166
  %v2011 = vpack.c.b16 %v2009, %v2008
  %v2012 = vpack.c.b16 %v2010, %v2010
  %v2015 = vsel %vm824, %v1538, 0
  %v2018 = vsel %vm824, %v1539, 0
  %v2021 = vand.u32 %v2012, %v1557
  %2023 = vmatprep.subr.bf16.mxu0 0
  %2024 = vmatpush1.bf16.msra.mxu0 %v2011
  %2025 = vmatprep.subr.bf16.mxu0 0
  %2026 = vmatpush1.bf16.msra.mxu0 %v2021
  %2027 = vmatprep.subr.bf16.mxu0 0
  %2028 = vmatpush1.bf16.msra.mxu0 0
  %2029 = vmatprep.subr.bf16.mxu0 0
  %2030 = vmatpush1.bf16.msra.mxu0 0
  %2031 = vmatprep.subr.bf16.mxu0 0
  %2032 = vmatpush1.bf16.msra.mxu0 0
  %2033 = vmatprep.subr.bf16.mxu0 0
  %2034 = vmatpush1.bf16.msra.mxu0 0
  %2035 = vmatprep.subr.bf16.mxu0 0
  %2036 = vmatpush1.bf16.msra.mxu0 0
  %2037 = vmatprep.subr.bf16.mxu0 0
  %2038 = vmatpush1.bf16.msra.mxu0 0
  %2039 = vmatprep.subr.bf16.mxu0 0
  %2040 = vmatpush1.bf16.msra.mxu0 0
  %2041 = vmatprep.subr.bf16.mxu0 0
  %2042 = vmatpush1.bf16.msra.mxu0 0
  %2043 = vmatprep.subr.bf16.mxu0 0
  %2044 = vmatpush1.bf16.msra.mxu0 0
  %2045 = vmatprep.subr.bf16.mxu0 0
  %2046 = vmatpush1.bf16.msra.mxu0 0
  %2047 = vmatprep.subr.bf16.mxu0 0
  %2048 = vmatpush1.bf16.msra.mxu0 0
  %2049 = vmatprep.subr.bf16.mxu0 0
  %2050 = vmatpush1.bf16.msra.mxu0 0
  %2051 = vmatprep.subr.bf16.mxu0 0
  %2052 = vmatpush1.bf16.msra.mxu0 0
  %2053 = vmatprep.subr.bf16.mxu0 0
  %2054 = vmatpush1.bf16.msra.mxu0 0
  %2055 = vmatprep.mubr.bf16.mxu0 0
  %2056 = vmatmul.mubr.bf16.gmra.mrb[0].mxu0 %v2015
  %v2057 = vpop.f32.mrb[0].mxu0
  %v2058 = vadd.f32 0.0, %v2057
  %v2059 = vpop.f32.mrb[0].mxu0
  %v2060 = vpop.f32.mrb[0].mxu0
  %v2061 = vadd.f32 0.0, %v2060
  %v2062 = vpop.f32.mrb[0].mxu0
  %2063 = vmatprep.mubr.bf16.mxu0 0
  %2064 = vmatmul.mubr.bf16.gmra.mrb[0].mxu0 %v2018
  %v2065 = vpop.f32.mrb[0].mxu0
  %v2066 = vadd.f32 0.0, %v2065
  %v2067 = vpop.f32.mrb[0].mxu0
  %v2068 = vpop.f32.mrb[0].mxu0
  %v2069 = vpop.f32.mrb[0].mxu0
  %2070 = vdwg.mxu0
  %v2071 = vadd.f32 %v1500, %v1596
  %v2072 = vadd.f32 %v1501, %v1599
  %v2073 = vadd.f32 %v1502, %v1604
  %v2074 = vadd.f32 %v1503, %v1662
  %v2075 = vadd.f32 %v1504, %v1665
  %v2076 = vadd.f32 %v1505, %v1670
  %v2077 = vadd.f32 %v1506, %v1728
  %v2078 = vadd.f32 %v1507, %v1731
  %v2079 = vadd.f32 %v1508, %v1736
  %v2080 = vadd.f32 %v1509, %v1794
  %v2081 = vadd.f32 %v1510, %v1797
  %v2082 = vadd.f32 %v1511, %v1802
  %v2083 = vadd.f32 %v1512, %v1860
  %v2084 = vadd.f32 %v1513, %v1863
  %v2085 = vadd.f32 %v1514, %v1868
  %v2086 = vadd.f32 %v1515, %v1926
  %v2087 = vadd.f32 %v1516, %v1929
  %v2088 = vadd.f32 %v1517, %v1934
  %v2089 = vadd.f32 %v1518, %v1992
  %v2090 = vadd.f32 %v1519, %v1995
  %v2091 = vadd.f32 %v1520, %v2000
  %v2092 = vadd.f32 %v1521, %v2058
  %v2093 = vadd.f32 %v1522, %v2061
  %v2094 = vadd.f32 %v1523, %v2066
  %2095 = vst.msk [vmem:[#allocation4] sm:$0xff] %vm183, %v2071
  %2096 = vst.msk [vmem:[#allocation4 + $0x8] sm:$0xff] %vm183, %v2072
  %vm2097 = vcmask 57344
  %2098 = vst.msk [vmem:[#allocation4 + $0x10] sm:$0x1] %vm2097, %v2073
  %2099 = vst.msk [vmem:[#allocation4 + $0x18] sm:$0xff] %vm183, %v2074
  %2100 = vst.msk [vmem:[#allocation4 + $0x20] sm:$0xff] %vm183, %v2075
  %2101 = vst.msk [vmem:[#allocation4 + $0x28] sm:$0x1] %vm2097, %v2076
  %2102 = vst.msk [vmem:[#allocation4 + $0x30] sm:$0xff] %vm183, %v2077
  %2103 = vst.msk [vmem:[#allocation4 + $0x38] sm:$0xff] %vm183, %v2078
  %2104 = vst.msk [vmem:[#allocation4 + $0x40] sm:$0x1] %vm2097, %v2079
  %2105 = vst.msk [vmem:[#allocation4 + $0x48] sm:$0xff] %vm183, %v2080
  %2106 = vst.msk [vmem:[#allocation4 + $0x50] sm:$0xff] %vm183, %v2081
  %2107 = vst.msk [vmem:[#allocation4 + $0x58] sm:$0x1] %vm2097, %v2082
  %2108 = vst.msk [vmem:[#allocation4 + $0x60] sm:$0xff] %vm183, %v2083
  %2109 = vst.msk [vmem:[#allocation4 + $0x68] sm:$0xff] %vm183, %v2084
  %2110 = vst.msk [vmem:[#allocation4 + $0x70] sm:$0x1] %vm2097, %v2085
  %2111 = vst.msk [vmem:[#allocation4 + $0x78] sm:$0xff] %vm183, %v2086
  %2112 = vst.msk [vmem:[#allocation4 + $0x80] sm:$0xff] %vm183, %v2087
  %2113 = vst.msk [vmem:[#allocation4 + $0x88] sm:$0x1] %vm2097, %v2088
  %2114 = vst.msk [vmem:[#allocation4 + $0x90] sm:$0xff] %vm183, %v2089
  %2115 = vst.msk [vmem:[#allocation4 + $0x98] sm:$0xff] %vm183, %v2090
  %2116 = vst.msk [vmem:[#allocation4 + $0xa0] sm:$0x1] %vm2097, %v2091
  %2117 = vst.msk [vmem:[#allocation4 + $0xa8] sm:$0xff] %vm183, %v2092
  %2118 = vst.msk [vmem:[#allocation4 + $0xb0] sm:$0xff] %vm183, %v2093
  %2119 = vst.msk [vmem:[#allocation4 + $0xb8] sm:$0x1] %vm2097, %v2094
  %2120 = vst.msk [vmem:[#allocation2] sm:$0xff] %vm1330, %v898
  %2121 = vst.msk [vmem:[#allocation2 + $0x8] sm:$0xff] %vm1330, %v899
  %2122 = vst.msk [vmem:[#allocation2 + $0x10] sm:$0x1] %vm1333, %v900
  %2123 = vst.msk [vmem:[#allocation2 + $0x18] sm:$0xff] %vm1330, %v901
  %2124 = vst.msk [vmem:[#allocation2 + $0x20] sm:$0xff] %vm1330, %v902
  %2125 = vst.msk [vmem:[#allocation2 + $0x28] sm:$0x1] %vm1333, %v903
  %2126 = vst.msk [vmem:[#allocation2 + $0x30] sm:$0xff] %vm1330, %v904
  %2127 = vst.msk [vmem:[#allocation2 + $0x38] sm:$0xff] %vm1330, %v905
  %2128 = vst.msk [vmem:[#allocation2 + $0x40] sm:$0x1] %vm1333, %v906
  %2129 = vst.msk [vmem:[#allocation2 + $0x48] sm:$0xff] %vm1330, %v907
  %2130 = vst.msk [vmem:[#allocation2 + $0x50] sm:$0xff] %vm1330, %v908
  %2131 = vst.msk [vmem:[#allocation2 + $0x58] sm:$0x1] %vm1333, %v909
  %2132 = vst.msk [vmem:[#allocation2 + $0x60] sm:$0xff] %vm1330, %v910
  %2133 = vst.msk [vmem:[#allocation2 + $0x68] sm:$0xff] %vm1330, %v911
  %2134 = vst.msk [vmem:[#allocation2 + $0x70] sm:$0x1] %vm1333, %v912
  %2135 = vst.msk [vmem:[#allocation2 + $0x78] sm:$0xff] %vm1330, %v913
  %2136 = vst.msk [vmem:[#allocation2 + $0x80] sm:$0xff] %vm1330, %v914
  %2137 = vst.msk [vmem:[#allocation2 + $0x88] sm:$0x1] %vm1333, %v915
  %2138 = vst.msk [vmem:[#allocation2 + $0x90] sm:$0xff] %vm1330, %v916
  %2139 = vst.msk [vmem:[#allocation2 + $0x98] sm:$0xff] %vm1330, %v917
  %2140 = vst.msk [vmem:[#allocation2 + $0xa0] sm:$0x1] %vm1333, %v918
  %2141 = vst.msk [vmem:[#allocation2 + $0xa8] sm:$0xff] %vm1330, %v919
  %2142 = vst.msk [vmem:[#allocation2 + $0xb0] sm:$0xff] %vm1330, %v920
  %2143 = vst.msk [vmem:[#allocation2 + $0xb8] sm:$0x1] %vm1333, %v921
  // Predicated region
  $region18: #{cpvt_gap_forward.17} parent=0 // pred_check
    %p2144 = pneg %p15
  $region19: #{cpvt_gap_forward.17} parent=0 // pred_check_branch
    %2146 = sbr.rel (%p2144) target = $region21
  $region20: #{cpvt_gap_forward.17} parent=0 // pred_region
    %v2147 = vld [vmem:[#allocation4] sm:$0xff]
    %v2148 = vld [vmem:[#allocation4 + $0x8] sm:$0xff]
    %v2149 = vld [vmem:[#allocation4 + $0x10] sm:$0x1]
    %v2150 = vld [vmem:[#allocation4 + $0x18] sm:$0xff]
    %v2151 = vld [vmem:[#allocation4 + $0x20] sm:$0xff]
    %v2152 = vld [vmem:[#allocation4 + $0x28] sm:$0x1]
    %v2153 = vld [vmem:[#allocation4 + $0x30] sm:$0xff]
    %v2154 = vld [vmem:[#allocation4 + $0x38] sm:$0xff]
    %v2155 = vld [vmem:[#allocation4 + $0x40] sm:$0x1]
    %v2156 = vld [vmem:[#allocation4 + $0x48] sm:$0xff]
    %v2157 = vld [vmem:[#allocation4 + $0x50] sm:$0xff]
    %v2158 = vld [vmem:[#allocation4 + $0x58] sm:$0x1]
    %v2159 = vld [vmem:[#allocation4 + $0x60] sm:$0xff]
    %v2160 = vld [vmem:[#allocation4 + $0x68] sm:$0xff]
    %v2161 = vld [vmem:[#allocation4 + $0x70] sm:$0x1]
    %v2162 = vld [vmem:[#allocation4 + $0x78] sm:$0xff]
    %v2163 = vld [vmem:[#allocation4 + $0x80] sm:$0xff]
    %v2164 = vld [vmem:[#allocation4 + $0x88] sm:$0x1]
    %v2165 = vld [vmem:[#allocation4 + $0x90] sm:$0xff]
    %v2166 = vld [vmem:[#allocation4 + $0x98] sm:$0xff]
    %v2167 = vld [vmem:[#allocation4 + $0xa0] sm:$0x1]
    %v2168 = vld [vmem:[#allocation4 + $0xa8] sm:$0xff]
    %v2169 = vld [vmem:[#allocation4 + $0xb0] sm:$0xff]
    %v2170 = vld [vmem:[#allocation4 + $0xb8] sm:$0x1]
    %v2171 = vld [vmem:[#allocation3] sm:$0xff]
    %v2172 = vld [vmem:[#allocation3 + $0x8] sm:$0xff]
    %v2173 = vld [vmem:[#allocation3 + $0x10] sm:$0x1]
    %v2174 = vld [vmem:[#allocation3 + $0x18] sm:$0xff]
    %v2175 = vld [vmem:[#allocation3 + $0x20] sm:$0xff]
    %v2176 = vld [vmem:[#allocation3 + $0x28] sm:$0x1]
    %v2177 = vld [vmem:[#allocation3 + $0x30] sm:$0xff]
    %v2178 = vld [vmem:[#allocation3 + $0x38] sm:$0xff]
    %v2179 = vld [vmem:[#allocation3 + $0x40] sm:$0x1]
    %v2180 = vld [vmem:[#allocation3 + $0x48] sm:$0xff]
    %v2181 = vld [vmem:[#allocation3 + $0x50] sm:$0xff]
    %v2182 = vld [vmem:[#allocation3 + $0x58] sm:$0x1]
    %v2183 = vld [vmem:[#allocation3 + $0x60] sm:$0xff]
    %v2184 = vld [vmem:[#allocation3 + $0x68] sm:$0xff]
    %v2185 = vld [vmem:[#allocation3 + $0x70] sm:$0x1]
    %v2186 = vld [vmem:[#allocation3 + $0x78] sm:$0xff]
    %v2187 = vld [vmem:[#allocation3 + $0x80] sm:$0xff]
    %v2188 = vld [vmem:[#allocation3 + $0x88] sm:$0x1]
    %v2189 = vld [vmem:[#allocation3 + $0x90] sm:$0xff]
    %v2190 = vld [vmem:[#allocation3 + $0x98] sm:$0xff]
    %v2191 = vld [vmem:[#allocation3 + $0xa0] sm:$0x1]
    %v2192 = vld [vmem:[#allocation3 + $0xa8] sm:$0xff]
    %v2193 = vld [vmem:[#allocation3 + $0xb0] sm:$0xff]
    %v2194 = vld [vmem:[#allocation3 + $0xb8] sm:$0x1]
    %v2195 = vrcp.pop %v2171
    %v2196 = vrcp.pop %v2172
    %v2197 = vrcp.pop %v2173
    %v2198 = vrcp.pop %v2174
    %v2199 = vrcp.pop %v2175
    %v2200 = vrcp.pop %v2176
    %v2201 = vrcp.pop %v2177
    %v2202 = vrcp.pop %v2178
    %v2203 = vrcp.pop %v2179
    %v2204 = vrcp.pop %v2180
    %v2205 = vrcp.pop %v2181
    %v2206 = vrcp.pop %v2182
    %v2207 = vrcp.pop %v2183
    %v2208 = vrcp.pop %v2184
    %v2209 = vrcp.pop %v2185
    %v2210 = vrcp.pop %v2186
    %v2211 = vrcp.pop %v2187
    %v2212 = vrcp.pop %v2188
    %v2213 = vrcp.pop %v2189
    %v2214 = vrcp.pop %v2190
    %v2215 = vrcp.pop %v2191
    %v2216 = vrcp.pop %v2192
    %v2217 = vrcp.pop %v2193
    %v2218 = vrcp.pop %v2194
    %2220 = vset.pattern.permute.xlu0 0
    %2221 = vperm.xlu0 %2220, %v2195
    %v2222 = vpop.permute.xlu0 %2221
    %2225 = vset.pattern.permute.xlu0 0
    %2226 = vperm.xlu0 %2225, %v2196
    %v2227 = vpop.permute.xlu0 %2226
    %2230 = vset.pattern.permute.xlu0 0
    %2231 = vperm.xlu0 %2230, %v2197
    %v2232 = vpop.permute.xlu0 %2231
    %2235 = vset.pattern.permute.xlu0 0
    %2236 = vperm.xlu0 %2235, %v2198
    %v2237 = vpop.permute.xlu0 %2236
    %2240 = vset.pattern.permute.xlu0 0
    %2241 = vperm.xlu0 %2240, %v2199
    %v2242 = vpop.permute.xlu0 %2241
    %2245 = vset.pattern.permute.xlu0 0
    %2246 = vperm.xlu0 %2245, %v2200
    %v2247 = vpop.permute.xlu0 %2246
    %2250 = vset.pattern.permute.xlu0 0
    %2251 = vperm.xlu0 %2250, %v2201
    %v2252 = vpop.permute.xlu0 %2251
    %2255 = vset.pattern.permute.xlu0 0
    %2256 = vperm.xlu0 %2255, %v2202
    %v2257 = vpop.permute.xlu0 %2256
    %2260 = vset.pattern.permute.xlu0 0
    %2261 = vperm.xlu0 %2260, %v2203
    %v2262 = vpop.permute.xlu0 %2261
    %2265 = vset.pattern.permute.xlu0 0
    %2266 = vperm.xlu0 %2265, %v2204
    %v2267 = vpop.permute.xlu0 %2266
    %2270 = vset.pattern.permute.xlu0 0
    %2271 = vperm.xlu0 %2270, %v2205
    %v2272 = vpop.permute.xlu0 %2271
    %2275 = vset.pattern.permute.xlu0 0
    %2276 = vperm.xlu0 %2275, %v2206
    %v2277 = vpop.permute.xlu0 %2276
    %2280 = vset.pattern.permute.xlu0 0
    %2281 = vperm.xlu0 %2280, %v2207
    %v2282 = vpop.permute.xlu0 %2281
    %2285 = vset.pattern.permute.xlu0 0
    %2286 = vperm.xlu0 %2285, %v2208
    %v2287 = vpop.permute.xlu0 %2286
    %2290 = vset.pattern.permute.xlu0 0
    %2291 = vperm.xlu0 %2290, %v2209
    %v2292 = vpop.permute.xlu0 %2291
    %2295 = vset.pattern.permute.xlu0 0
    %2296 = vperm.xlu0 %2295, %v2210
    %v2297 = vpop.permute.xlu0 %2296
    %2300 = vset.pattern.permute.xlu0 0
    %2301 = vperm.xlu0 %2300, %v2211
    %v2302 = vpop.permute.xlu0 %2301
    %2305 = vset.pattern.permute.xlu0 0
    %2306 = vperm.xlu0 %2305, %v2212
    %v2307 = vpop.permute.xlu0 %2306
    %2310 = vset.pattern.permute.xlu0 0
    %2311 = vperm.xlu0 %2310, %v2213
    %v2312 = vpop.permute.xlu0 %2311
    %2315 = vset.pattern.permute.xlu0 0
    %2316 = vperm.xlu0 %2315, %v2214
    %v2317 = vpop.permute.xlu0 %2316
    %2320 = vset.pattern.permute.xlu0 0
    %2321 = vperm.xlu0 %2320, %v2215
    %v2322 = vpop.permute.xlu0 %2321
    %2325 = vset.pattern.permute.xlu0 0
    %2326 = vperm.xlu0 %2325, %v2216
    %v2327 = vpop.permute.xlu0 %2326
    %2330 = vset.pattern.permute.xlu0 0
    %2331 = vperm.xlu0 %2330, %v2217
    %v2332 = vpop.permute.xlu0 %2331
    %2335 = vset.pattern.permute.xlu0 0
    %2336 = vperm.xlu0 %2335, %v2218
    %v2337 = vpop.permute.xlu0 %2336
    %v2339 = vmul.f32 %v2147, %v2222
    %v2340 = vmul.f32 %v2148, %v2227
    %v2341 = vmul.f32 %v2149, %v2232
    %v2342 = vmul.f32 %v2150, %v2237
    %v2343 = vmul.f32 %v2151, %v2242
    %v2344 = vmul.f32 %v2152, %v2247
    %v2345 = vmul.f32 %v2153, %v2252
    %v2346 = vmul.f32 %v2154, %v2257
    %v2347 = vmul.f32 %v2155, %v2262
    %v2348 = vmul.f32 %v2156, %v2267
    %v2349 = vmul.f32 %v2157, %v2272
    %v2350 = vmul.f32 %v2158, %v2277
    %v2351 = vmul.f32 %v2159, %v2282
    %v2352 = vmul.f32 %v2160, %v2287
    %v2353 = vmul.f32 %v2161, %v2292
    %v2354 = vmul.f32 %v2162, %v2297
    %v2355 = vmul.f32 %v2163, %v2302
    %v2356 = vmul.f32 %v2164, %v2307
    %v2357 = vmul.f32 %v2165, %v2312
    %v2358 = vmul.f32 %v2166, %v2317
    %v2359 = vmul.f32 %v2167, %v2322
    %v2360 = vmul.f32 %v2168, %v2327
    %v2361 = vmul.f32 %v2169, %v2332
    %v2362 = vmul.f32 %v2170, %v2337
    %2363 = vst.msk [vmem:[%s3] sm:$0xff] %vm183, %v2339
    %2364 = vst.msk [vmem:[%s3 + $0x8] sm:$0xff] %vm183, %v2340
    %2365 = vst.msk [vmem:[%s3 + $0x10] sm:$0x1] %vm2097, %v2341
    %2366 = vst.msk [vmem:[%s3 + $0x18] sm:$0xff] %vm183, %v2342
    %2367 = vst.msk [vmem:[%s3 + $0x20] sm:$0xff] %vm183, %v2343
    %2368 = vst.msk [vmem:[%s3 + $0x28] sm:$0x1] %vm2097, %v2344
    %2369 = vst.msk [vmem:[%s3 + $0x30] sm:$0xff] %vm183, %v2345
    %2370 = vst.msk [vmem:[%s3 + $0x38] sm:$0xff] %vm183, %v2346
    %2371 = vst.msk [vmem:[%s3 + $0x40] sm:$0x1] %vm2097, %v2347
    %2372 = vst.msk [vmem:[%s3 + $0x48] sm:$0xff] %vm183, %v2348
    %2373 = vst.msk [vmem:[%s3 + $0x50] sm:$0xff] %vm183, %v2349
    %2374 = vst.msk [vmem:[%s3 + $0x58] sm:$0x1] %vm2097, %v2350
    %2375 = vst.msk [vmem:[%s3 + $0x60] sm:$0xff] %vm183, %v2351
    %2376 = vst.msk [vmem:[%s3 + $0x68] sm:$0xff] %vm183, %v2352
    %2377 = vst.msk [vmem:[%s3 + $0x70] sm:$0x1] %vm2097, %v2353
    %2378 = vst.msk [vmem:[%s3 + $0x78] sm:$0xff] %vm183, %v2354
    %2379 = vst.msk [vmem:[%s3 + $0x80] sm:$0xff] %vm183, %v2355
    %2380 = vst.msk [vmem:[%s3 + $0x88] sm:$0x1] %vm2097, %v2356
    %2381 = vst.msk [vmem:[%s3 + $0x90] sm:$0xff] %vm183, %v2357
    %2382 = vst.msk [vmem:[%s3 + $0x98] sm:$0xff] %vm183, %v2358
    %2383 = vst.msk [vmem:[%s3 + $0xa0] sm:$0x1] %vm2097, %v2359
    %2384 = vst.msk [vmem:[%s3 + $0xa8] sm:$0xff] %vm183, %v2360
    %2385 = vst.msk [vmem:[%s3 + $0xb0] sm:$0xff] %vm183, %v2361
    %2386 = vst.msk [vmem:[%s3 + $0xb8] sm:$0x1] %vm2097, %v2362
  $region21: #{cpvt_gap_forward.17} parent=0 // pred_fallthru
    _
  // Predicated region
  $region22: #{cpvt_gap_forward.17} parent=0 // pred_check
    _
  $region23: #{cpvt_gap_forward.17} parent=0 // pred_check_branch
    %2388 = sbr.rel (0) target = $region25
  $region24: #{cpvt_gap_forward.17} parent=0 // pred_region
    _
  $region25: #{cpvt_gap_forward.17} parent=0 // pred_fallthru
    _
  // Predicated region
  $region26: #{cpvt_gap_forward.17} parent=0 // pred_check
    _
  $region27: #{cpvt_gap_forward.17} parent=0 // pred_check_branch
    %2390 = sbr.rel (0) target = $region29
  $region28: #{cpvt_gap_forward.17} parent=0 // pred_region
    _
  $region29: #{cpvt_gap_forward.17} parent=0 // pred_fallthru
    _

</llo_original>
